<compile_context>
chip_gen: v6e
topology: v6e:2x2x1
jax: 0.10.0
libtpu: 0.0.40
codegen_flags: <defaults>
</compile_context>

<pallas_src>
import functools

import jax
import jax.numpy as jnp
from jax.experimental import pallas as pl
from jax.experimental.pallas import tpu as pltpu


IN_CH = 3
HID = 40
OUT_CH = 1
N_LAYERS = 7          # 6 hidden (tanh) + 1 output (linear)
LANE = 128            # TPU lane width
MAX_CHUNK = 512       # 40 x 512 f32 = 20 vregs -> register-resident activations


def _round_up(a, m):
    return ((a + m - 1) // m) * m


def _choose_tile_and_chunk(n, tile_n):
    """Pick the grid tile (lane columns per grid step) and in-kernel chunk."""
    n_lane = _round_up(max(n, 1), LANE)
    tile = _round_up(min(max(int(tile_n), LANE), n_lane), LANE)
    # v7x has 2 TensorCores: when the whole batch would fit one grid step but
    # there is enough work for two, split it so "parallel" shards both cores.
    if tile >= n_lane and n_lane >= 2 * LANE:
        tile = _round_up(n_lane // 2, LANE)
    # Largest lane chunk (multiple of 128, <= MAX_CHUNK) dividing the tile.
    chunk = tile
    for cand in (512, 384, 256, 128):
        if tile % cand == 0:
            chunk = cand
            break
    return tile, chunk


def _mlp_kernel(x_ref, wf_ref, wh_ref, wo_ref, bh_ref, bo_ref, o_ref, *, chunk):
    """Fused 7-layer forward for one tile of batch columns (batch on lanes).

    x_ref : (IN_CH, TILE)               input tile, features on sublanes
    wf_ref: (HID, IN_CH)                layer-0 weight (out, in)
    wh_ref: (N_LAYERS-2, HID, HID)      hidden-layer weights 1..5
    wo_ref: (8, HID)                    output weight, zero-padded (row 0 real)
    bh_ref: (N_LAYERS-1, HID, 1)        biases for layers 0..5
    bo_ref: (OUT_CH, 1)                 output bias
    o_ref : (OUT_CH, TILE)              lane-dense output tile
    """
    tile = x_ref.shape[-1]
    n_chunks = tile // chunk
    prec = jax.lax.Precision.HIGHEST

    # Small loop-invariant operands hoisted out of the chunk loop (few vregs).
    wf = wf_ref[...]          # (HID, IN_CH)
    wo = wo_ref[...]          # (8, HID)
    bo = bo_ref[...]          # (OUT_CH, 1)

    def process_chunk(c, carry):
        col = pl.multiple_of(c * chunk, LANE)
        xc = x_ref[:, pl.ds(col, chunk)]                         # (IN_CH, chunk)

        # Layer 0: (HID, IN_CH) @ (IN_CH, chunk) -> (HID, chunk)
        h = jnp.dot(wf, xc, preferred_element_type=jnp.float32, precision=prec)
        # jnp.tanh lowers to the EUP on TPU (separate bundle slot from the MXU).
        h = jnp.tanh(h + bh_ref[0])

        # Hidden layers 1..5 (per-layer weight/bias reloaded from VMEM: cheap
        # vlds, keeps vreg pressure at ~2 live activation chunks).
        for li in range(1, N_LAYERS - 1):
            h = jnp.dot(wh_ref[li - 1], h,
                        preferred_element_type=jnp.float32, precision=prec)
            h = jnp.tanh(h + bh_ref[li])

        # Output layer: only 8 result rows (row 0 real) instead of HID.
        out = jnp.dot(wo, h, preferred_element_type=jnp.float32, precision=prec)
        o_ref[:, pl.ds(col, chunk)] = (out[:OUT_CH, :] + bo).astype(o_ref.dtype)
        return carry

    if n_chunks == 1:
        process_chunk(0, 0)
    else:
        jax.lax.fori_loop(0, n_chunks, process_chunk, 0)


def init_params(key, bias_std=0.0):
    """Xavier-normal weights (PyTorch (out, in) layout); zero biases like the
    module (bias_std > 0 only to exercise the bias path in the self-test)."""
    dims = [IN_CH] + [HID] * (N_LAYERS - 1) + [OUT_CH]
    params = []
    for i in range(N_LAYERS):
        fan_in, fan_out = dims[i], dims[i + 1]
        key, wk, bk = jax.random.split(key, 3)
        std = (2.0 / (fan_in + fan_out)) ** 0.5
        w = std * jax.random.normal(wk, (fan_out, fan_in), dtype=jnp.float32)
        b = bias_std * jax.random.normal(bk, (fan_out,), dtype=jnp.float32)
        params.append((w, b))
    return params


def pack_params(params):
    """Pack per-layer params into the consolidated kernel inputs."""
    w_first = params[0][0].astype(jnp.float32)                         # (40, 3)
    w_hidden = jnp.stack([params[li][0].astype(jnp.float32)
                          for li in range(1, N_LAYERS - 1)])           # (5, 40, 40)
    w_out = jnp.zeros((8, HID), jnp.float32).at[:OUT_CH, :].set(
        params[N_LAYERS - 1][0].astype(jnp.float32))                   # (8, 40)
    b_hidden = jnp.stack([params[li][1].astype(jnp.float32)
                          for li in range(N_LAYERS - 1)])[..., None]   # (6, 40, 1)
    b_out = params[N_LAYERS - 1][1].astype(jnp.float32).reshape(OUT_CH, 1)
    return w_first, w_hidden, w_out, b_hidden, b_out


@functools.partial(jax.jit, static_argnames=("tile_n",))
def mlp_forward(x, w_first, w_hidden, w_out, b_hidden, b_out, tile_n=8192):
    """x: (N, IN_CH) -> (N, OUT_CH), matching MLP.forward(x.to(float32))."""
    n = x.shape[0]
    assert x.shape[1] == IN_CH
    # Batch-on-lanes: single transpose, NO explicit pad.  The last grid tile
    # may read garbage columns past N; every op is per-column independent and
    # Pallas masks out-of-bounds writes on writeback, so they never escape.
    xt = x.astype(jnp.float32).T                                  # (IN_CH, N)

    tile, chunk = _choose_tile_and_chunk(n, tile_n)
    grid = pl.cdiv(n, tile)

    out_t = pl.pallas_call(
        functools.partial(_mlp_kernel, chunk=chunk),
        out_shape=jax.ShapeDtypeStruct((OUT_CH, n), jnp.float32),
        grid_spec=pltpu.PrefetchScalarGridSpec(
            num_scalar_prefetch=0,
            grid=(grid,),
            in_specs=[
                pl.BlockSpec((IN_CH, tile), lambda i: (0, i)),
                pl.BlockSpec((HID, IN_CH), lambda i: (0, 0)),
                pl.BlockSpec((N_LAYERS - 2, HID, HID), lambda i: (0, 0, 0)),
                pl.BlockSpec((8, HID), lambda i: (0, 0)),
                pl.BlockSpec((N_LAYERS - 1, HID, 1), lambda i: (0, 0, 0)),
                pl.BlockSpec((OUT_CH, 1), lambda i: (0, 0)),
            ],
            out_specs=pl.BlockSpec((OUT_CH, tile), lambda i: (0, i)),
        ),
        compiler_params=pltpu.CompilerParams(
            dimension_semantics=("parallel",),
            vmem_limit_bytes=32 * 1024 * 1024,
        ),
    )(xt, w_first, w_hidden, w_out, b_hidden, b_out)

    return out_t.T


def mlp_reference(x, params):
    """Pure-JAX reference (PyTorch convention: y = x @ W.T + b)."""
    h = x.astype(jnp.float32)
    for li, (w, b) in enumerate(params):
        h = h @ w.T + b
        if li < N_LAYERS - 1:
            h = jnp.tanh(h)
    return h


if __name__ == "__main__":
    key = jax.random.PRNGKey(0)
    key, xkey = jax.random.split(key)

    # 200 is deliberately NOT a multiple of 128 so the partial-last-tile path
    # (masked writeback, garbage read columns) is exercised; the tile/chunk
    # selection also produces a 2-step grid at this size.
    batch = 200
    x = jax.random.normal(xkey, (batch, IN_CH), dtype=jnp.float32)

    # Non-zero biases only to make the numerical self-check cover the bias
    # path; the module itself initializes biases to 0.
    params = init_params(key, bias_std=0.1)
    w_first, w_hidden, w_out, b_hidden, b_out = pack_params(params)

    out = mlp_forward(x, w_first, w_hidden, w_out, b_hidden, b_out)
    out = jax.block_until_ready(out)

    ref = mlp_reference(x, params)
    assert out.shape == (batch, OUT_CH), out.shape
    assert jnp.allclose(out, ref, atol=2e-5, rtol=2e-5), "mismatch vs reference"

    print("KERNEL_OK")
</pallas_src>

<mosaic_0001>
module attributes {stable_mosaic.version = 11 : i64} {
  func.func @_mlp_kernel(%arg0: i32, %arg1: memref<3x128xf32, #tpu.memory_space<vmem>>, %arg2: memref<40x3xf32, #tpu.memory_space<vmem>>, %arg3: memref<5x40x40xf32, #tpu.memory_space<vmem>>, %arg4: memref<8x40xf32, #tpu.memory_space<vmem>>, %arg5: memref<6x40x1xf32, #tpu.memory_space<vmem>>, %arg6: memref<1x1xf32, #tpu.memory_space<vmem>>, %arg7: memref<1x128xf32, #tpu.memory_space<vmem>>) attributes {dimension_semantics = [#tpu.dimension_semantics<parallel>], iteration_bounds = array<i64: 2>, scalar_prefetch = 0 : i64, scratch_operands = 0 : i64, tpu.core_type = #tpu.core_type<tc>, window_params = [{transform_indices = @transform_0, window_bounds = array<i64: 3, 128>}, {pipeline_mode = #tpu.pipeline_mode<synchronous>, transform_indices = @transform_1, window_bounds = array<i64: 40, 3>}, {pipeline_mode = #tpu.pipeline_mode<synchronous>, transform_indices = @transform_2, window_bounds = array<i64: 5, 40, 40>}, {pipeline_mode = #tpu.pipeline_mode<synchronous>, transform_indices = @transform_3, window_bounds = array<i64: 8, 40>}, {pipeline_mode = #tpu.pipeline_mode<synchronous>, transform_indices = @transform_4, window_bounds = array<i64: 6, 40, 1>}, {pipeline_mode = #tpu.pipeline_mode<synchronous>, transform_indices = @transform_5, window_bounds = array<i64: 1, 1>}, {transform_indices = @transform_6, window_bounds = array<i64: 1, 128>}]} {
    %c0 = arith.constant 0 : index
    %c0_0 = arith.constant 0 : index
    %0 = vector.load %arg2[%c0, %c0_0] : memref<40x3xf32, #tpu.memory_space<vmem>>, vector<40x3xf32>
    %c0_1 = arith.constant 0 : index
    %c0_2 = arith.constant 0 : index
    %1 = vector.load %arg4[%c0_1, %c0_2] : memref<8x40xf32, #tpu.memory_space<vmem>>, vector<8x40xf32>
    %c0_3 = arith.constant 0 : index
    %c0_4 = arith.constant 0 : index
    %2 = vector.load %arg6[%c0_3, %c0_4] : memref<1x1xf32, #tpu.memory_space<vmem>>, vector<1x1xf32>
    %c0_i32 = arith.constant 0 : i32
    %3 = tpu.assume_multiple %c0_i32, 128 : i32
    %c0_5 = arith.constant 0 : index
    %4 = arith.index_cast %3 : i32 to index
    %5 = vector.load %arg1[%c0_5, %4] : memref<3x128xf32, #tpu.memory_space<vmem>>, vector<3x128xf32>
    %cst = arith.constant dense<0.000000e+00> : vector<40x128xf32>
    %6 = tpu.matmul %0, %5, %cst {dimension_numbers = #tpu.dot_dimension_numbers<[1], [0], [0], [1], [0, 0, 1, 1], [], []>, precision = #tpu.contract_precision<fp32>} : vector<40x3xf32>, vector<3x128xf32>, vector<40x128xf32> -> vector<40x128xf32>
    %c0_6 = arith.constant 0 : index
    %c0_7 = arith.constant 0 : index
    %c0_8 = arith.constant 0 : index
    %7 = vector.load %arg5[%c0_6, %c0_7, %c0_8] : memref<6x40x1xf32, #tpu.memory_space<vmem>>, vector<1x40x1xf32>
    %8 = vector.shape_cast %7 : vector<1x40x1xf32> to vector<40x1xf32>
    %9 = vector.broadcast %8 : vector<40x1xf32> to vector<40x128xf32>
    %10 = arith.addf %6, %9 : vector<40x128xf32>
    %11 = math.tanh %10 : vector<40x128xf32>
    %c0_9 = arith.constant 0 : index
    %c0_10 = arith.constant 0 : index
    %c0_11 = arith.constant 0 : index
    %12 = vector.load %arg3[%c0_9, %c0_10, %c0_11] : memref<5x40x40xf32, #tpu.memory_space<vmem>>, vector<1x40x40xf32>
    %13 = vector.shape_cast %12 : vector<1x40x40xf32> to vector<40x40xf32>
    %cst_12 = arith.constant dense<0.000000e+00> : vector<40x128xf32>
    %14 = tpu.matmul %13, %11, %cst_12 {dimension_numbers = #tpu.dot_dimension_numbers<[1], [0], [0], [1], [0, 0, 1, 1], [], []>, precision = #tpu.contract_precision<fp32>} : vector<40x40xf32>, vector<40x128xf32>, vector<40x128xf32> -> vector<40x128xf32>
    %c1 = arith.constant 1 : index
    %c0_13 = arith.constant 0 : index
    %c0_14 = arith.constant 0 : index
    %15 = vector.load %arg5[%c1, %c0_13, %c0_14] : memref<6x40x1xf32, #tpu.memory_space<vmem>>, vector<1x40x1xf32>
    %16 = vector.shape_cast %15 : vector<1x40x1xf32> to vector<40x1xf32>
    %17 = vector.broadcast %16 : vector<40x1xf32> to vector<40x128xf32>
    %18 = arith.addf %14, %17 : vector<40x128xf32>
    %19 = math.tanh %18 : vector<40x128xf32>
    %c1_15 = arith.constant 1 : index
    %c0_16 = arith.constant 0 : index
    %c0_17 = arith.constant 0 : index
    %20 = vector.load %arg3[%c1_15, %c0_16, %c0_17] : memref<5x40x40xf32, #tpu.memory_space<vmem>>, vector<1x40x40xf32>
    %21 = vector.shape_cast %20 : vector<1x40x40xf32> to vector<40x40xf32>
    %cst_18 = arith.constant dense<0.000000e+00> : vector<40x128xf32>
    %22 = tpu.matmul %21, %19, %cst_18 {dimension_numbers = #tpu.dot_dimension_numbers<[1], [0], [0], [1], [0, 0, 1, 1], [], []>, precision = #tpu.contract_precision<fp32>} : vector<40x40xf32>, vector<40x128xf32>, vector<40x128xf32> -> vector<40x128xf32>
    %c2 = arith.constant 2 : index
    %c0_19 = arith.constant 0 : index
    %c0_20 = arith.constant 0 : index
    %23 = vector.load %arg5[%c2, %c0_19, %c0_20] : memref<6x40x1xf32, #tpu.memory_space<vmem>>, vector<1x40x1xf32>
    %24 = vector.shape_cast %23 : vector<1x40x1xf32> to vector<40x1xf32>
    %25 = vector.broadcast %24 : vector<40x1xf32> to vector<40x128xf32>
    %26 = arith.addf %22, %25 : vector<40x128xf32>
    %27 = math.tanh %26 : vector<40x128xf32>
    %c2_21 = arith.constant 2 : index
    %c0_22 = arith.constant 0 : index
    %c0_23 = arith.constant 0 : index
    %28 = vector.load %arg3[%c2_21, %c0_22, %c0_23] : memref<5x40x40xf32, #tpu.memory_space<vmem>>, vector<1x40x40xf32>
    %29 = vector.shape_cast %28 : vector<1x40x40xf32> to vector<40x40xf32>
    %cst_24 = arith.constant dense<0.000000e+00> : vector<40x128xf32>
    %30 = tpu.matmul %29, %27, %cst_24 {dimension_numbers = #tpu.dot_dimension_numbers<[1], [0], [0], [1], [0, 0, 1, 1], [], []>, precision = #tpu.contract_precision<fp32>} : vector<40x40xf32>, vector<40x128xf32>, vector<40x128xf32> -> vector<40x128xf32>
    %c3 = arith.constant 3 : index
    %c0_25 = arith.constant 0 : index
    %c0_26 = arith.constant 0 : index
    %31 = vector.load %arg5[%c3, %c0_25, %c0_26] : memref<6x40x1xf32, #tpu.memory_space<vmem>>, vector<1x40x1xf32>
    %32 = vector.shape_cast %31 : vector<1x40x1xf32> to vector<40x1xf32>
    %33 = vector.broadcast %32 : vector<40x1xf32> to vector<40x128xf32>
    %34 = arith.addf %30, %33 : vector<40x128xf32>
    %35 = math.tanh %34 : vector<40x128xf32>
    %c3_27 = arith.constant 3 : index
    %c0_28 = arith.constant 0 : index
    %c0_29 = arith.constant 0 : index
    %36 = vector.load %arg3[%c3_27, %c0_28, %c0_29] : memref<5x40x40xf32, #tpu.memory_space<vmem>>, vector<1x40x40xf32>
    %37 = vector.shape_cast %36 : vector<1x40x40xf32> to vector<40x40xf32>
    %cst_30 = arith.constant dense<0.000000e+00> : vector<40x128xf32>
    %38 = tpu.matmul %37, %35, %cst_30 {dimension_numbers = #tpu.dot_dimension_numbers<[1], [0], [0], [1], [0, 0, 1, 1], [], []>, precision = #tpu.contract_precision<fp32>} : vector<40x40xf32>, vector<40x128xf32>, vector<40x128xf32> -> vector<40x128xf32>
    %c4 = arith.constant 4 : index
    %c0_31 = arith.constant 0 : index
    %c0_32 = arith.constant 0 : index
    %39 = vector.load %arg5[%c4, %c0_31, %c0_32] : memref<6x40x1xf32, #tpu.memory_space<vmem>>, vector<1x40x1xf32>
    %40 = vector.shape_cast %39 : vector<1x40x1xf32> to vector<40x1xf32>
    %41 = vector.broadcast %40 : vector<40x1xf32> to vector<40x128xf32>
    %42 = arith.addf %38, %41 : vector<40x128xf32>
    %43 = math.tanh %42 : vector<40x128xf32>
    %c4_33 = arith.constant 4 : index
    %c0_34 = arith.constant 0 : index
    %c0_35 = arith.constant 0 : index
    %44 = vector.load %arg3[%c4_33, %c0_34, %c0_35] : memref<5x40x40xf32, #tpu.memory_space<vmem>>, vector<1x40x40xf32>
    %45 = vector.shape_cast %44 : vector<1x40x40xf32> to vector<40x40xf32>
    %cst_36 = arith.constant dense<0.000000e+00> : vector<40x128xf32>
    %46 = tpu.matmul %45, %43, %cst_36 {dimension_numbers = #tpu.dot_dimension_numbers<[1], [0], [0], [1], [0, 0, 1, 1], [], []>, precision = #tpu.contract_precision<fp32>} : vector<40x40xf32>, vector<40x128xf32>, vector<40x128xf32> -> vector<40x128xf32>
    %c5 = arith.constant 5 : index
    %c0_37 = arith.constant 0 : index
    %c0_38 = arith.constant 0 : index
    %47 = vector.load %arg5[%c5, %c0_37, %c0_38] : memref<6x40x1xf32, #tpu.memory_space<vmem>>, vector<1x40x1xf32>
    %48 = vector.shape_cast %47 : vector<1x40x1xf32> to vector<40x1xf32>
    %49 = vector.broadcast %48 : vector<40x1xf32> to vector<40x128xf32>
    %50 = arith.addf %46, %49 : vector<40x128xf32>
    %51 = math.tanh %50 : vector<40x128xf32>
    %cst_39 = arith.constant dense<0.000000e+00> : vector<8x128xf32>
    %52 = tpu.matmul %1, %51, %cst_39 {dimension_numbers = #tpu.dot_dimension_numbers<[1], [0], [0], [1], [0, 0, 1, 1], [], []>, precision = #tpu.contract_precision<fp32>} : vector<8x40xf32>, vector<40x128xf32>, vector<8x128xf32> -> vector<8x128xf32>
    %53 = vector.extract_strided_slice %52 {offsets = [0, 0], sizes = [1, 128], strides = [1, 1]} : vector<8x128xf32> to vector<1x128xf32>
    %54 = vector.broadcast %2 : vector<1x1xf32> to vector<1x128xf32>
    %55 = arith.addf %53, %54 : vector<1x128xf32>
    %c0_40 = arith.constant 0 : index
    %56 = arith.index_cast %3 : i32 to index
    %57 = vector.load %arg7[%c0_40, %56] : memref<1x128xf32, #tpu.memory_space<vmem>>, vector<1x128xf32>
    tpu.vector_store %arg7[%c0_40, %56], %55 {strides = array<i32>} : memref<1x128xf32, #tpu.memory_space<vmem>>, vector<1x128xf32>,
    return
  }
  func.func @transform_0(%arg0: i32) -> (i32, i32) {
    %c0_i32 = arith.constant 0 : i32
    %c0_i32_0 = arith.constant 0 : i32
    return %c0_i32, %arg0 : i32, i32
  }
  func.func @transform_1(%arg0: i32) -> (i32, i32) {
    %c0_i32 = arith.constant 0 : i32
    %c0_i32_0 = arith.constant 0 : i32
    %c0_i32_1 = arith.constant 0 : i32
    return %c0_i32, %c0_i32_0 : i32, i32
  }
  func.func @transform_2(%arg0: i32) -> (i32, i32, i32) {
    %c0_i32 = arith.constant 0 : i32
    %c0_i32_0 = arith.constant 0 : i32
    %c0_i32_1 = arith.constant 0 : i32
    %c0_i32_2 = arith.constant 0 : i32
    return %c0_i32, %c0_i32_0, %c0_i32_1 : i32, i32, i32
  }
  func.func @transform_3(%arg0: i32) -> (i32, i32) {
    %c0_i32 = arith.constant 0 : i32
    %c0_i32_0 = arith.constant 0 : i32
    %c0_i32_1 = arith.constant 0 : i32
    return %c0_i32, %c0_i32_0 : i32, i32
  }
  func.func @transform_4(%arg0: i32) -> (i32, i32, i32) {
    %c0_i32 = arith.constant 0 : i32
    %c0_i32_0 = arith.constant 0 : i32
    %c0_i32_1 = arith.constant 0 : i32
    %c0_i32_2 = arith.constant 0 : i32
    return %c0_i32, %c0_i32_0, %c0_i32_1 : i32, i32, i32
  }
  func.func @transform_5(%arg0: i32) -> (i32, i32) {
    %c0_i32 = arith.constant 0 : i32
    %c0_i32_0 = arith.constant 0 : i32
    %c0_i32_1 = arith.constant 0 : i32
    return %c0_i32, %c0_i32_0 : i32, i32
  }
  func.func @transform_6(%arg0: i32) -> (i32, i32) {
    %c0_i32 = arith.constant 0 : i32
    %c0_i32_0 = arith.constant 0 : i32
    return %c0_i32, %arg0 : i32, i32
  }
}

</mosaic_0001>

<llo_original>
// kernel: mlp_forward.1
$region0: #{mlp_forward.1}
  #allocation0 [shape = 'u32[]', space=smem, size = 0x4, offset = 0x4, fixed_abs, tag = 'smem constant byte address 0x4 - core index']
  #allocation1 [shape = 'u32[144,128]{1,0:T(1,128)}', space=vmem, size = 0x12000, scoped, tag = 'internal scratch']
  #allocation2 [shape = 'f32[1,1]{1,0:T(1,128)S(1)}', space=vmem, size = 0x200, scoped, tag = 'scoped memory for mlp_forward.1']
  %s0 = inlined_call_operand.vmem [shape: f32[3,200], index: 0, kind: input, shape index: {}]
  %s1 = inlined_call_operand.vmem [shape: f32[40,3], index: 1, kind: input, shape index: {}]
  %s2 = inlined_call_operand.vmem [shape: f32[5,40,40], index: 2, kind: input, shape index: {}]
  %s3 = inlined_call_operand.vmem [shape: f32[8,40], index: 3, kind: input, shape index: {}]
  %s4 = inlined_call_operand.vmem [shape: f32[6,40,1], index: 4, kind: input, shape index: {}]
  %s5 = inlined_call_operand.<no memory space> [shape: f32[1,1], index: 5, kind: input, shape index: {}]
  %s6 = inlined_call_operand.hbm [shape: f32[1,200], index: 6, kind: output, shape index: {}]
  %s7 = sld [smem:[#allocation0]]
  $region57: #{mlp_forward.1} parent=0
    _
  %s9 = ssub.s32 1, %s7
  %s10 = scalar_select 0, %s9, %s7
  %v11 = vstv %s5
  %12 = vst [vmem:[#allocation2] sm:$0x1] %v11
  $region1: #{mlp_forward.1} parent=0
    #allocation3 [shape = 'u8[1024]{0}', space=vmem, size = 0x400, scoped, tag = 'output window, operand 0']
    #allocation4 [shape = 's32[2]{0}', space=sflag, size = 0x8, scoped, tag = 'scoped memory for mlp_forward.1']
    %13 = vsyncpa [#allocation4], 0
    %s14 = scalar_lea.sflag [#allocation4], 1
    %15 = vsyncpa %s14, 0
    loop: start=0, step=1, limit=4
    $region2: #{mlp_forward.1} parent=1 // loop_pre_header
      _
    $region3: #{mlp_forward.1} parent=1 // loop_header
      %s17 = sphi 0, %s21
      %p18 = scmp.ge.s32.totalorder %s17, 4
      %s27 = sphi 0, %s29
      %s30 = sphi 0, %s27
      %s31 = sphi 0, %s30
      %s47 = sphi 0, %s31
      %s51 = sphi 0, %s51
      %s53 = sphi 0, %s51
      %s54 = sphi 0, %s53
      %s68 = sphi 0, %s54
      %s72 = sphi 0, %s72
      %s74 = sphi 0, %s72
      %s75 = sphi 0, %s74
      %s89 = sphi 0, %s75
      %s93 = sphi 0, %s93
      %s95 = sphi 0, %s93
      %s96 = sphi 0, %s95
      %s110 = sphi 0, %s96
      %s114 = sphi 0, %s114
      %s116 = sphi 0, %s114
      %s117 = sphi 0, %s116
      %s131 = sphi 0, %s117
      %s135 = sphi 0, %s135
      %s137 = sphi 0, %s135
      %s138 = sphi 0, %s137
      %s152 = sphi 0, %s138
      %s158 = sphi 0, %s160
      %s161 = sphi 0, %s158
      %s162 = sphi 0, %s161
      %s178 = sphi 0, %s162
    $region4: #{mlp_forward.1} parent=1 // loop_header_branch
      %20 = sbr.rel (%p18) target = $region8
    $region5: #{mlp_forward.1} parent=1 // loop_body
      %s22 = ssub.s32 %s17, 1
      %s23 = ssub.s32 %s17, 2
      %s24 = sadd.s32 %s17, 1
      %s25 = ssub.s32 %s17, %s24
      %p26 = scmp.eq.s32.totalorder %s25, 0
      %s28 = sadd.s32 %s27, 1
      %s29 = scalar_select %p26, %s27, %s28
      %p32 = pneg %p26
      %p33 = scmp.eq.s32.totalorder %s17, 1
      %p34 = por %p32, %p33
      %p35 = scmp.ne.s32.totalorder %s27, %s30
      %p36 = scmp.eq.s32.totalorder %s17, 0
      %p37 = por %p35, %p36
      %p38 = scmp.ne.s32.totalorder %s27, %s30
      %p39 = scmp.eq.s32.totalorder %s22, 1
      %p40 = por %p38, %p39
      %p41 = scmp.ne.s32.totalorder %s30, %s31
      %p42 = scmp.eq.s32.totalorder %s22, 0
      %p43 = por %p41, %p42
      %p44 = scmp.ne.s32.totalorder %s30, %s31
      %p45 = scmp.eq.s32.totalorder %s23, 1
      %p46 = por %p44, %p45
      %p48 = scmp.ne.s32.totalorder %s31, %s47
      %p49 = scmp.eq.s32.totalorder %s23, 0
      %p50 = por %p48, %p49
      %s52 = sadd.s32 %s51, 1
      %p55 = scmp.eq.s32.totalorder %s17, 1
      %p56 = scmp.ne.s32.totalorder %s51, %s53
      %p57 = scmp.eq.s32.totalorder %s17, 0
      %p58 = por %p56, %p57
      %p59 = scmp.ne.s32.totalorder %s51, %s53
      %p60 = scmp.eq.s32.totalorder %s22, 1
      %p61 = por %p59, %p60
      %p62 = scmp.ne.s32.totalorder %s53, %s54
      %p63 = scmp.eq.s32.totalorder %s22, 0
      %p64 = por %p62, %p63
      %p65 = scmp.ne.s32.totalorder %s53, %s54
      %p66 = scmp.eq.s32.totalorder %s23, 1
      %p67 = por %p65, %p66
      %p69 = scmp.ne.s32.totalorder %s54, %s68
      %p70 = scmp.eq.s32.totalorder %s23, 0
      %p71 = por %p69, %p70
      %s73 = sadd.s32 %s72, 1
      %p76 = scmp.eq.s32.totalorder %s17, 1
      %p77 = scmp.ne.s32.totalorder %s72, %s74
      %p78 = scmp.eq.s32.totalorder %s17, 0
      %p79 = por %p77, %p78
      %p80 = scmp.ne.s32.totalorder %s72, %s74
      %p81 = scmp.eq.s32.totalorder %s22, 1
      %p82 = por %p80, %p81
      %p83 = scmp.ne.s32.totalorder %s74, %s75
      %p84 = scmp.eq.s32.totalorder %s22, 0
      %p85 = por %p83, %p84
      %p86 = scmp.ne.s32.totalorder %s74, %s75
      %p87 = scmp.eq.s32.totalorder %s23, 1
      %p88 = por %p86, %p87
      %p90 = scmp.ne.s32.totalorder %s75, %s89
      %p91 = scmp.eq.s32.totalorder %s23, 0
      %p92 = por %p90, %p91
      %s94 = sadd.s32 %s93, 1
      %p97 = scmp.eq.s32.totalorder %s17, 1
      %p98 = scmp.ne.s32.totalorder %s93, %s95
      %p99 = scmp.eq.s32.totalorder %s17, 0
      %p100 = por %p98, %p99
      %p101 = scmp.ne.s32.totalorder %s93, %s95
      %p102 = scmp.eq.s32.totalorder %s22, 1
      %p103 = por %p101, %p102
      %p104 = scmp.ne.s32.totalorder %s95, %s96
      %p105 = scmp.eq.s32.totalorder %s22, 0
      %p106 = por %p104, %p105
      %p107 = scmp.ne.s32.totalorder %s95, %s96
      %p108 = scmp.eq.s32.totalorder %s23, 1
      %p109 = por %p107, %p108
      %p111 = scmp.ne.s32.totalorder %s96, %s110
      %p112 = scmp.eq.s32.totalorder %s23, 0
      %p113 = por %p111, %p112
      %s115 = sadd.s32 %s114, 1
      %p118 = scmp.eq.s32.totalorder %s17, 1
      %p119 = scmp.ne.s32.totalorder %s114, %s116
      %p120 = scmp.eq.s32.totalorder %s17, 0
      %p121 = por %p119, %p120
      %p122 = scmp.ne.s32.totalorder %s114, %s116
      %p123 = scmp.eq.s32.totalorder %s22, 1
      %p124 = por %p122, %p123
      %p125 = scmp.ne.s32.totalorder %s116, %s117
      %p126 = scmp.eq.s32.totalorder %s22, 0
      %p127 = por %p125, %p126
      %p128 = scmp.ne.s32.totalorder %s116, %s117
      %p129 = scmp.eq.s32.totalorder %s23, 1
      %p130 = por %p128, %p129
      %p132 = scmp.ne.s32.totalorder %s117, %s131
      %p133 = scmp.eq.s32.totalorder %s23, 0
      %p134 = por %p132, %p133
      %s136 = sadd.s32 %s135, 1
      %p139 = scmp.eq.s32.totalorder %s17, 1
      %p140 = scmp.ne.s32.totalorder %s135, %s137
      %p141 = scmp.eq.s32.totalorder %s17, 0
      %p142 = por %p140, %p141
      %p143 = scmp.ne.s32.totalorder %s135, %s137
      %p144 = scmp.eq.s32.totalorder %s22, 1
      %p145 = por %p143, %p144
      %p146 = scmp.ne.s32.totalorder %s137, %s138
      %p147 = scmp.eq.s32.totalorder %s22, 0
      %p148 = por %p146, %p147
      %p149 = scmp.ne.s32.totalorder %s137, %s138
      %p150 = scmp.eq.s32.totalorder %s23, 1
      %p151 = por %p149, %p150
      %p153 = scmp.ne.s32.totalorder %s138, %s152
      %p154 = scmp.eq.s32.totalorder %s23, 0
      %p155 = por %p153, %p154
      %s156 = ssub.s32 %s17, %s24
      %p157 = scmp.eq.s32.totalorder %s156, 0
      %s159 = sadd.s32 %s158, 1
      %s160 = scalar_select %p157, %s158, %s159
      %p163 = pneg %p157
      %p164 = scmp.eq.s32.totalorder %s17, 1
      %p165 = por %p163, %p164
      %p166 = scmp.ne.s32.totalorder %s158, %s161
      %p167 = scmp.eq.s32.totalorder %s17, 0
      %p168 = por %p166, %p167
      %p169 = scmp.ne.s32.totalorder %s158, %s161
      %p170 = scmp.eq.s32.totalorder %s22, 1
      %p171 = por %p169, %p170
      %p172 = scmp.ne.s32.totalorder %s161, %s162
      %p173 = scmp.eq.s32.totalorder %s22, 0
      %p174 = por %p172, %p173
      %p175 = scmp.ne.s32.totalorder %s161, %s162
      %p176 = scmp.eq.s32.totalorder %s23, 1
      %p177 = por %p175, %p176
      %p179 = scmp.ne.s32.totalorder %s162, %s178
      %p180 = scmp.eq.s32.totalorder %s23, 0
      %p181 = por %p179, %p180
      %p182 = scmp.le.s32.totalorder 1, %s17
      %p183 = scmp.lt.s32.totalorder %s17, 3
      %p184 = pnand %p182, %p183
      %p185 = pneg %p184
      // Predicated region
      $region9: #{mlp_forward.1} parent=5 // pred_check
        _
      $region10: #{mlp_forward.1} parent=5 // pred_check_branch
        %187 = sbr.rel (%p184) target = $region12
      $region11: #{mlp_forward.1} parent=5 // pred_region
        %s188 = ssub.s32 %s17, 1
        // Predicated region
        $region13: #{mlp_forward.1} parent=11 // pred_check
          %p189 = pneg %p64
        $region14: #{mlp_forward.1} parent=11 // pred_check_branch
          %191 = sbr.rel (%p189) target = $region16
        $region15: #{mlp_forward.1} parent=11 // pred_region
          _
        $region16: #{mlp_forward.1} parent=11 // pred_fallthru
          _
        // Predicated region
        $region17: #{mlp_forward.1} parent=11 // pred_check
          %p192 = pneg %p85
        $region18: #{mlp_forward.1} parent=11 // pred_check_branch
          %194 = sbr.rel (%p192) target = $region20
        $region19: #{mlp_forward.1} parent=11 // pred_region
          _
        $region20: #{mlp_forward.1} parent=11 // pred_fallthru
          _
        // Predicated region
        $region21: #{mlp_forward.1} parent=11 // pred_check
          %p195 = pneg %p106
        $region22: #{mlp_forward.1} parent=11 // pred_check_branch
          %197 = sbr.rel (%p195) target = $region24
        $region23: #{mlp_forward.1} parent=11 // pred_region
          _
        $region24: #{mlp_forward.1} parent=11 // pred_fallthru
          _
        // Predicated region
        $region25: #{mlp_forward.1} parent=11 // pred_check
          %p198 = pneg %p127
        $region26: #{mlp_forward.1} parent=11 // pred_check_branch
          %200 = sbr.rel (%p198) target = $region28
        $region27: #{mlp_forward.1} parent=11 // pred_region
          _
        $region28: #{mlp_forward.1} parent=11 // pred_fallthru
          _
        // Predicated region
        $region29: #{mlp_forward.1} parent=11 // pred_check
          %p201 = pneg %p148
        $region30: #{mlp_forward.1} parent=11 // pred_check_branch
          %203 = sbr.rel (%p201) target = $region32
        $region31: #{mlp_forward.1} parent=11 // pred_region
          _
        $region32: #{mlp_forward.1} parent=11 // pred_fallthru
          _
      $region12: #{mlp_forward.1} parent=5 // pred_fallthru
        _
      %p204 = scmp.lt.s32.totalorder %s17, 2
      // Predicated region
      $region33: #{mlp_forward.1} parent=5 // pred_check
        %p205 = pneg %p204
      $region34: #{mlp_forward.1} parent=5 // pred_check_branch
        %207 = sbr.rel (%p205) target = $region36
      $region35: #{mlp_forward.1} parent=5 // pred_region
        // Predicated region
        $region37: #{mlp_forward.1} parent=35 // pred_check
          %p208 = pneg %p37
        $region38: #{mlp_forward.1} parent=35 // pred_check_branch
          %210 = sbr.rel (%p208) target = $region40
        $region39: #{mlp_forward.1} parent=35 // pred_region
          %p211 = scmp.lt.s32.totalorder %s17, 1
          %s212 = scalar_select %p211, %s17, 1
          %s213 = smul.addr %s212, 4
          %s214 = scalar_lea.vmem %s0, %s213
        $region40: #{mlp_forward.1} parent=35 // pred_fallthru
          _
      $region36: #{mlp_forward.1} parent=5 // pred_fallthru
        _
      %p215 = scmp.le.s32.totalorder 1, %s17
      %p216 = scmp.lt.s32.totalorder %s17, 3
      %p217 = pnand %p215, %p216
      %p218 = pneg %p217
      // Predicated region
      $region41: #{mlp_forward.1} parent=5 // pred_check
        _
      $region42: #{mlp_forward.1} parent=5 // pred_check_branch
        %220 = sbr.rel (%p217) target = $region44
      $region43: #{mlp_forward.1} parent=5 // pred_region
        %s221 = ssub.s32 %s17, 1
        %p222 = scmp.lt.s32.totalorder %s22, 1
        %s223 = scalar_select %p222, %s22, 1
        %s224 = smul.addr %s223, 4
        %s225 = scalar_lea.vmem %s0, %s224
        %p226 = pneg %p43
        %p227 = pneg %p40
        %p228 = pneg %p64
        %p229 = pneg %p61
        %p230 = pneg %p85
        %p231 = pneg %p82
        %p232 = pneg %p106
        %p233 = pneg %p103
        %p234 = pneg %p127
        %p235 = pneg %p124
        %p236 = pneg %p148
        %p237 = pneg %p145
        %p238 = pneg %p174
        %p239 = pneg %p171
        %s240 = sand.u32 %s161, 1
        %s241 = scalar_lea.sflag [#allocation4], %s240
        %s242 = sand.u32 %s161, 1
        %s243 = scalar_lea.vmem [#allocation3], %s242
        %p244 = scmp.lt.s32.totalorder %s22, 1
        %s245 = scalar_select %p244, %s22, 1
        %s246 = smul.addr %s245, 4
        %s247 = scalar_lea.vmem %s0, %s246
        %v248 = vld [vmem:[%s1] sm:$0xff]
        %v249 = vld [vmem:[%s1 + $0x8] sm:$0xff]
        %v250 = vld [vmem:[%s1 + $0x10] sm:$0xff]
        %v251 = vld [vmem:[%s1 + $0x18] sm:$0xff]
        %v252 = vld [vmem:[%s1 + $0x20] sm:$0xff]
        %v253 = vld [vmem:[%s3] sm:$0xff]
        %v254 = vld [vmem:[#allocation2] sm:$0x1]
        %v255 = vld [vmem:[%s247] sm:$0x7]
        %v256 = vld [vmem:[%s4] sm:$0xff]
        %v257 = vld [vmem:[%s4 + $0x8] sm:$0xff]
        %v258 = vld [vmem:[%s4 + $0x10] sm:$0xff]
        %v259 = vld [vmem:[%s4 + $0x18] sm:$0xff]
        %v260 = vld [vmem:[%s4 + $0x20] sm:$0xff]
        %262 = vset.pattern.permute.xlu0 0
        %263 = vperm.xlu0 %262, %v256
        %v264 = vpop.permute.xlu0 %263
        %267 = vset.pattern.permute.xlu0 0
        %268 = vperm.xlu0 %267, %v257
        %v269 = vpop.permute.xlu0 %268
        %272 = vset.pattern.permute.xlu0 0
        %273 = vperm.xlu0 %272, %v258
        %v274 = vpop.permute.xlu0 %273
        %277 = vset.pattern.permute.xlu0 0
        %278 = vperm.xlu0 %277, %v259
        %v279 = vpop.permute.xlu0 %278
        %282 = vset.pattern.permute.xlu0 0
        %283 = vperm.xlu0 %282, %v260
        %v284 = vpop.permute.xlu0 %283
        %vm286 = vcmask 23552
        %v288 = vsel %vm286, %v248, 0
        %v291 = vsel %vm286, %v249, 0
        %v294 = vsel %vm286, %v250, 0
        %v297 = vsel %vm286, %v251, 0
        %v300 = vsel %vm286, %v252, 0
        %vm302 = vcmask 1042432
        %v304 = vsel %vm302, %v255, 0
        %306 = vmatprep.subr.mxu0 0.0
        %307 = vmatpush1.msra.mxu0 0.0
        %308 = vmatprep.subr.mxu0 0.0
        %309 = vmatpush1.msra.mxu0 0.0
        %310 = vmatprep.subr.mxu0 0.0
        %311 = vmatpush1.msra.mxu0 0.0
        %312 = vmatprep.subr.mxu0 0.0
        %313 = vmatpush1.msra.mxu0 0.0
        %314 = vmatprep.subr.mxu0 0.0
        %315 = vmatpush1.msra.mxu0 0.0
        %316 = vmatprep.subr.mxu0 0.0
        %317 = vmatpush1.msra.mxu0 0.0
        %318 = vmatprep.subr.mxu0 0.0
        %319 = vmatpush1.msra.mxu0 0.0
        %320 = vmatprep.subr.mxu0 0.0
        %321 = vmatpush1.msra.mxu0 0.0
        %322 = vmatprep.subr.mxu0 0.0
        %323 = vmatpush1.msra.mxu0 0.0
        %324 = vmatprep.subr.mxu0 0.0
        %325 = vmatpush1.msra.mxu0 0.0
        %326 = vmatprep.subr.mxu0 0.0
        %327 = vmatpush1.msra.mxu0 0.0
        %328 = vmatprep.subr.mxu0 0.0
        %329 = vmatpush1.msra.mxu0 0.0
        %330 = vmatprep.subr.mxu0 0.0
        %331 = vmatpush1.msra.mxu0 0.0
        %332 = vmatprep.subr.mxu0 0.0
        %333 = vmatpush1.msra.mxu0 0.0
        %334 = vmatprep.subr.mxu0 0.0
        %335 = vmatpush1.msra.mxu0 0.0
        %336 = vmatprep.subr.mxu0 0.0
        %v337 = vand.u32 %v304, 4294901760
        %338 = vmatpush1.msra.mxu0 %v337
        %339 = vmatprep.subr.mxu0 0.0
        %340 = vmatpush2.msra.mxu0 0.0
        %341 = vmatprep.subr.mxu0 0.0
        %342 = vmatpush2.msra.mxu0 0.0
        %343 = vmatprep.subr.mxu0 0.0
        %344 = vmatpush2.msra.mxu0 0.0
        %345 = vmatprep.subr.mxu0 0.0
        %346 = vmatpush2.msra.mxu0 0.0
        %347 = vmatprep.subr.mxu0 0.0
        %348 = vmatpush2.msra.mxu0 0.0
        %349 = vmatprep.subr.mxu0 0.0
        %350 = vmatpush2.msra.mxu0 0.0
        %351 = vmatprep.subr.mxu0 0.0
        %352 = vmatpush2.msra.mxu0 0.0
        %353 = vmatprep.subr.mxu0 0.0
        %354 = vmatpush2.msra.mxu0 0.0
        %355 = vmatprep.subr.mxu0 0.0
        %356 = vmatpush2.msra.mxu0 0.0
        %357 = vmatprep.subr.mxu0 0.0
        %358 = vmatpush2.msra.mxu0 0.0
        %359 = vmatprep.subr.mxu0 0.0
        %360 = vmatpush2.msra.mxu0 0.0
        %361 = vmatprep.subr.mxu0 0.0
        %362 = vmatpush2.msra.mxu0 0.0
        %363 = vmatprep.subr.mxu0 0.0
        %364 = vmatpush2.msra.mxu0 0.0
        %365 = vmatprep.subr.mxu0 0.0
        %366 = vmatpush2.msra.mxu0 0.0
        %367 = vmatprep.subr.mxu0 0.0
        %368 = vmatpush2.msra.mxu0 0.0
        %369 = vmatprep.subr.mxu0 0.0
        %370 = vmatpush2.msra.mxu0 0.0
        %371 = vmatprep.mubr.f32.mxu0 0.0
        %v372 = vand.u32 %v288, 4294901760
        %v373 = vsub.f32 %v288, %v372
        %v374 = vand.u32 %v373, 4294901760
        %v375 = vsub.f32 %v373, %v374
        %v376 = vand.u32 %v375, 4294901760
        %377 = vmatmul.mubr.f32.gmra.mxu0 %v376
        %v378 = vpop.f32.mrf.mxu0
        %v379 = vadd.f32 %v264, %v378
        %v380 = vpop.f32.mrf.mxu0
        %381 = vmatprep.mubr.f32.mxu0 0.0
        %v382 = vand.u32 %v291, 4294901760
        %v383 = vsub.f32 %v291, %v382
        %v384 = vand.u32 %v383, 4294901760
        %v385 = vsub.f32 %v383, %v384
        %v386 = vand.u32 %v385, 4294901760
        %387 = vmatmul.mubr.f32.gmra.mxu0 %v386
        %v388 = vpop.f32.mrf.mxu0
        %v389 = vadd.f32 %v269, %v388
        %v390 = vpop.f32.mrf.mxu0
        %391 = vmatprep.mubr.f32.mxu0 0.0
        %v392 = vand.u32 %v294, 4294901760
        %v393 = vsub.f32 %v294, %v392
        %v394 = vand.u32 %v393, 4294901760
        %v395 = vsub.f32 %v393, %v394
        %v396 = vand.u32 %v395, 4294901760
        %397 = vmatmul.mubr.f32.gmra.mxu0 %v396
        %v398 = vpop.f32.mrf.mxu0
        %v399 = vadd.f32 %v274, %v398
        %v400 = vpop.f32.mrf.mxu0
        %401 = vmatprep.mubr.f32.mxu0 0.0
        %v402 = vand.u32 %v297, 4294901760
        %v403 = vsub.f32 %v297, %v402
        %v404 = vand.u32 %v403, 4294901760
        %v405 = vsub.f32 %v403, %v404
        %v406 = vand.u32 %v405, 4294901760
        %407 = vmatmul.mubr.f32.gmra.mxu0 %v406
        %v408 = vpop.f32.mrf.mxu0
        %v409 = vadd.f32 %v279, %v408
        %v410 = vpop.f32.mrf.mxu0
        %411 = vmatprep.mubr.f32.mxu0 0.0
        %v412 = vand.u32 %v300, 4294901760
        %v413 = vsub.f32 %v300, %v412
        %v414 = vand.u32 %v413, 4294901760
        %v415 = vsub.f32 %v413, %v414
        %v416 = vand.u32 %v415, 4294901760
        %417 = vmatmul.mubr.f32.gmra.mxu0 %v416
        %v418 = vpop.f32.mrf.mxu0
        %v419 = vadd.f32 %v284, %v418
        %v420 = vpop.f32.mrf.mxu0
        %421 = vdwg.mxu0
        %422 = vmatprep.subr.mxu0 0.0
        %423 = vmatpush1.msra.mxu0 0.0
        %424 = vmatprep.subr.mxu0 0.0
        %425 = vmatpush1.msra.mxu0 0.0
        %426 = vmatprep.subr.mxu0 0.0
        %427 = vmatpush1.msra.mxu0 0.0
        %428 = vmatprep.subr.mxu0 0.0
        %429 = vmatpush1.msra.mxu0 0.0
        %430 = vmatprep.subr.mxu0 0.0
        %431 = vmatpush1.msra.mxu0 0.0
        %432 = vmatprep.subr.mxu0 0.0
        %433 = vmatpush1.msra.mxu0 0.0
        %434 = vmatprep.subr.mxu0 0.0
        %435 = vmatpush1.msra.mxu0 0.0
        %436 = vmatprep.subr.mxu0 0.0
        %437 = vmatpush1.msra.mxu0 0.0
        %438 = vmatprep.subr.mxu0 0.0
        %439 = vmatpush1.msra.mxu0 0.0
        %440 = vmatprep.subr.mxu0 0.0
        %441 = vmatpush1.msra.mxu0 0.0
        %442 = vmatprep.subr.mxu0 0.0
        %443 = vmatpush1.msra.mxu0 0.0
        %444 = vmatprep.subr.mxu0 0.0
        %445 = vmatpush1.msra.mxu0 0.0
        %446 = vmatprep.subr.mxu0 0.0
        %447 = vmatpush1.msra.mxu0 0.0
        %448 = vmatprep.subr.mxu0 0.0
        %449 = vmatpush1.msra.mxu0 0.0
        %450 = vmatprep.subr.mxu0 0.0
        %451 = vmatpush1.msra.mxu0 0.0
        %452 = vmatprep.subr.mxu0 0.0
        %v453 = vand.u32 %v304, 4294901760
        %v454 = vsub.f32 %v304, %v453
        %v455 = vand.u32 %v454, 4294901760
        %v456 = vsub.f32 %v454, %v455
        %v457 = vand.u32 %v456, 4294901760
        %458 = vmatpush1.msra.mxu0 %v457
        %459 = vmatprep.subr.mxu0 0.0
        %460 = vmatpush2.msra.mxu0 0.0
        %461 = vmatprep.subr.mxu0 0.0
        %462 = vmatpush2.msra.mxu0 0.0
        %463 = vmatprep.subr.mxu0 0.0
        %464 = vmatpush2.msra.mxu0 0.0
        %465 = vmatprep.subr.mxu0 0.0
        %466 = vmatpush2.msra.mxu0 0.0
        %467 = vmatprep.subr.mxu0 0.0
        %468 = vmatpush2.msra.mxu0 0.0
        %469 = vmatprep.subr.mxu0 0.0
        %470 = vmatpush2.msra.mxu0 0.0
        %471 = vmatprep.subr.mxu0 0.0
        %472 = vmatpush2.msra.mxu0 0.0
        %473 = vmatprep.subr.mxu0 0.0
        %474 = vmatpush2.msra.mxu0 0.0
        %475 = vmatprep.subr.mxu0 0.0
        %476 = vmatpush2.msra.mxu0 0.0
        %477 = vmatprep.subr.mxu0 0.0
        %478 = vmatpush2.msra.mxu0 0.0
        %479 = vmatprep.subr.mxu0 0.0
        %480 = vmatpush2.msra.mxu0 0.0
        %481 = vmatprep.subr.mxu0 0.0
        %482 = vmatpush2.msra.mxu0 0.0
        %483 = vmatprep.subr.mxu0 0.0
        %484 = vmatpush2.msra.mxu0 0.0
        %485 = vmatprep.subr.mxu0 0.0
        %486 = vmatpush2.msra.mxu0 0.0
        %487 = vmatprep.subr.mxu0 0.0
        %488 = vmatpush2.msra.mxu0 0.0
        %489 = vmatprep.subr.mxu0 0.0
        %490 = vmatpush2.msra.mxu0 0.0
        %491 = vmatprep.mubr.f32.mxu0 0.0
        %v492 = vand.u32 %v288, 4294901760
        %493 = vmatmul.mubr.f32.gmra.mxu0 %v492
        %v494 = vpop.f32.mrf.mxu0
        %v495 = vadd.f32 %v379, %v494
        %v496 = vpop.f32.mrf.mxu0
        %497 = vmatprep.mubr.f32.mxu0 0.0
        %v498 = vand.u32 %v291, 4294901760
        %499 = vmatmul.mubr.f32.gmra.mxu0 %v498
        %v500 = vpop.f32.mrf.mxu0
        %v501 = vadd.f32 %v389, %v500
        %v502 = vpop.f32.mrf.mxu0
        %503 = vmatprep.mubr.f32.mxu0 0.0
        %v504 = vand.u32 %v294, 4294901760
        %505 = vmatmul.mubr.f32.gmra.mxu0 %v504
        %v506 = vpop.f32.mrf.mxu0
        %v507 = vadd.f32 %v399, %v506
        %v508 = vpop.f32.mrf.mxu0
        %509 = vmatprep.mubr.f32.mxu0 0.0
        %v510 = vand.u32 %v297, 4294901760
        %511 = vmatmul.mubr.f32.gmra.mxu0 %v510
        %v512 = vpop.f32.mrf.mxu0
        %v513 = vadd.f32 %v409, %v512
        %v514 = vpop.f32.mrf.mxu0
        %515 = vmatprep.mubr.f32.mxu0 0.0
        %v516 = vand.u32 %v300, 4294901760
        %517 = vmatmul.mubr.f32.gmra.mxu0 %v516
        %v518 = vpop.f32.mrf.mxu0
        %v519 = vadd.f32 %v419, %v518
        %v520 = vpop.f32.mrf.mxu0
        %521 = vdwg.mxu0
        %522 = vmatprep.subr.mxu0 0.0
        %523 = vmatpush1.msra.mxu0 0.0
        %524 = vmatprep.subr.mxu0 0.0
        %525 = vmatpush1.msra.mxu0 0.0
        %526 = vmatprep.subr.mxu0 0.0
        %527 = vmatpush1.msra.mxu0 0.0
        %528 = vmatprep.subr.mxu0 0.0
        %529 = vmatpush1.msra.mxu0 0.0
        %530 = vmatprep.subr.mxu0 0.0
        %531 = vmatpush1.msra.mxu0 0.0
        %532 = vmatprep.subr.mxu0 0.0
        %533 = vmatpush1.msra.mxu0 0.0
        %534 = vmatprep.subr.mxu0 0.0
        %535 = vmatpush1.msra.mxu0 0.0
        %536 = vmatprep.subr.mxu0 0.0
        %537 = vmatpush1.msra.mxu0 0.0
        %538 = vmatprep.subr.mxu0 0.0
        %539 = vmatpush1.msra.mxu0 0.0
        %540 = vmatprep.subr.mxu0 0.0
        %541 = vmatpush1.msra.mxu0 0.0
        %542 = vmatprep.subr.mxu0 0.0
        %543 = vmatpush1.msra.mxu0 0.0
        %544 = vmatprep.subr.mxu0 0.0
        %545 = vmatpush1.msra.mxu0 0.0
        %546 = vmatprep.subr.mxu0 0.0
        %547 = vmatpush1.msra.mxu0 0.0
        %548 = vmatprep.subr.mxu0 0.0
        %549 = vmatpush1.msra.mxu0 0.0
        %550 = vmatprep.subr.mxu0 0.0
        %551 = vmatpush1.msra.mxu0 0.0
        %552 = vmatprep.subr.mxu0 0.0
        %v553 = vand.u32 %v304, 4294901760
        %v554 = vsub.f32 %v304, %v553
        %555 = vmatpush1.msra.mxu0 %v554
        %556 = vmatprep.subr.mxu0 0.0
        %557 = vmatpush2.msra.mxu0 0.0
        %558 = vmatprep.subr.mxu0 0.0
        %559 = vmatpush2.msra.mxu0 0.0
        %560 = vmatprep.subr.mxu0 0.0
        %561 = vmatpush2.msra.mxu0 0.0
        %562 = vmatprep.subr.mxu0 0.0
        %563 = vmatpush2.msra.mxu0 0.0
        %564 = vmatprep.subr.mxu0 0.0
        %565 = vmatpush2.msra.mxu0 0.0
        %566 = vmatprep.subr.mxu0 0.0
        %567 = vmatpush2.msra.mxu0 0.0
        %568 = vmatprep.subr.mxu0 0.0
        %569 = vmatpush2.msra.mxu0 0.0
        %570 = vmatprep.subr.mxu0 0.0
        %571 = vmatpush2.msra.mxu0 0.0
        %572 = vmatprep.subr.mxu0 0.0
        %573 = vmatpush2.msra.mxu0 0.0
        %574 = vmatprep.subr.mxu0 0.0
        %575 = vmatpush2.msra.mxu0 0.0
        %576 = vmatprep.subr.mxu0 0.0
        %577 = vmatpush2.msra.mxu0 0.0
        %578 = vmatprep.subr.mxu0 0.0
        %579 = vmatpush2.msra.mxu0 0.0
        %580 = vmatprep.subr.mxu0 0.0
        %581 = vmatpush2.msra.mxu0 0.0
        %582 = vmatprep.subr.mxu0 0.0
        %583 = vmatpush2.msra.mxu0 0.0
        %584 = vmatprep.subr.mxu0 0.0
        %585 = vmatpush2.msra.mxu0 0.0
        %586 = vmatprep.subr.mxu0 0.0
        %587 = vmatpush2.msra.mxu0 0.0
        %588 = vmatprep.mubr.f32.mxu0 0.0
        %v589 = vand.u32 %v288, 4294901760
        %v590 = vsub.f32 %v288, %v589
        %591 = vmatmul.mubr.f32.gmra.mxu0 %v590
        %v592 = vpop.f32.mrf.mxu0
        %v593 = vadd.f32 %v495, %v592
        %v594 = vpop.f32.mrf.mxu0
        %595 = vmatprep.mubr.f32.mxu0 0.0
        %v596 = vand.u32 %v291, 4294901760
        %v597 = vsub.f32 %v291, %v596
        %598 = vmatmul.mubr.f32.gmra.mxu0 %v597
        %v599 = vpop.f32.mrf.mxu0
        %v600 = vadd.f32 %v501, %v599
        %v601 = vpop.f32.mrf.mxu0
        %602 = vmatprep.mubr.f32.mxu0 0.0
        %v603 = vand.u32 %v294, 4294901760
        %v604 = vsub.f32 %v294, %v603
        %605 = vmatmul.mubr.f32.gmra.mxu0 %v604
        %v606 = vpop.f32.mrf.mxu0
        %v607 = vadd.f32 %v507, %v606
        %v608 = vpop.f32.mrf.mxu0
        %609 = vmatprep.mubr.f32.mxu0 0.0
        %v610 = vand.u32 %v297, 4294901760
        %v611 = vsub.f32 %v297, %v610
        %612 = vmatmul.mubr.f32.gmra.mxu0 %v611
        %v613 = vpop.f32.mrf.mxu0
        %v614 = vadd.f32 %v513, %v613
        %v615 = vpop.f32.mrf.mxu0
        %616 = vmatprep.mubr.f32.mxu0 0.0
        %v617 = vand.u32 %v300, 4294901760
        %v618 = vsub.f32 %v300, %v617
        %619 = vmatmul.mubr.f32.gmra.mxu0 %v618
        %v620 = vpop.f32.mrf.mxu0
        %v621 = vadd.f32 %v519, %v620
        %v622 = vpop.f32.mrf.mxu0
        %623 = vdwg.mxu0
        %624 = vmatprep.subr.mxu0 0.0
        %625 = vmatpush1.msra.mxu0 0.0
        %626 = vmatprep.subr.mxu0 0.0
        %627 = vmatpush1.msra.mxu0 0.0
        %628 = vmatprep.subr.mxu0 0.0
        %629 = vmatpush1.msra.mxu0 0.0
        %630 = vmatprep.subr.mxu0 0.0
        %631 = vmatpush1.msra.mxu0 0.0
        %632 = vmatprep.subr.mxu0 0.0
        %633 = vmatpush1.msra.mxu0 0.0
        %634 = vmatprep.subr.mxu0 0.0
        %635 = vmatpush1.msra.mxu0 0.0
        %636 = vmatprep.subr.mxu0 0.0
        %637 = vmatpush1.msra.mxu0 0.0
        %638 = vmatprep.subr.mxu0 0.0
        %639 = vmatpush1.msra.mxu0 0.0
        %640 = vmatprep.subr.mxu0 0.0
        %641 = vmatpush1.msra.mxu0 0.0
        %642 = vmatprep.subr.mxu0 0.0
        %643 = vmatpush1.msra.mxu0 0.0
        %644 = vmatprep.subr.mxu0 0.0
        %645 = vmatpush1.msra.mxu0 0.0
        %646 = vmatprep.subr.mxu0 0.0
        %647 = vmatpush1.msra.mxu0 0.0
        %648 = vmatprep.subr.mxu0 0.0
        %649 = vmatpush1.msra.mxu0 0.0
        %650 = vmatprep.subr.mxu0 0.0
        %651 = vmatpush1.msra.mxu0 0.0
        %652 = vmatprep.subr.mxu0 0.0
        %653 = vmatpush1.msra.mxu0 0.0
        %654 = vmatprep.subr.mxu0 0.0
        %v655 = vand.u32 %v304, 4294901760
        %656 = vmatpush1.msra.mxu0 %v655
        %657 = vmatprep.subr.mxu0 0.0
        %658 = vmatpush2.msra.mxu0 0.0
        %659 = vmatprep.subr.mxu0 0.0
        %660 = vmatpush2.msra.mxu0 0.0
        %661 = vmatprep.subr.mxu0 0.0
        %662 = vmatpush2.msra.mxu0 0.0
        %663 = vmatprep.subr.mxu0 0.0
        %664 = vmatpush2.msra.mxu0 0.0
        %665 = vmatprep.subr.mxu0 0.0
        %666 = vmatpush2.msra.mxu0 0.0
        %667 = vmatprep.subr.mxu0 0.0
        %668 = vmatpush2.msra.mxu0 0.0
        %669 = vmatprep.subr.mxu0 0.0
        %670 = vmatpush2.msra.mxu0 0.0
        %671 = vmatprep.subr.mxu0 0.0
        %672 = vmatpush2.msra.mxu0 0.0
        %673 = vmatprep.subr.mxu0 0.0
        %674 = vmatpush2.msra.mxu0 0.0
        %675 = vmatprep.subr.mxu0 0.0
        %676 = vmatpush2.msra.mxu0 0.0
        %677 = vmatprep.subr.mxu0 0.0
        %678 = vmatpush2.msra.mxu0 0.0
        %679 = vmatprep.subr.mxu0 0.0
        %680 = vmatpush2.msra.mxu0 0.0
        %681 = vmatprep.subr.mxu0 0.0
        %682 = vmatpush2.msra.mxu0 0.0
        %683 = vmatprep.subr.mxu0 0.0
        %684 = vmatpush2.msra.mxu0 0.0
        %685 = vmatprep.subr.mxu0 0.0
        %686 = vmatpush2.msra.mxu0 0.0
        %687 = vmatprep.subr.mxu0 0.0
        %688 = vmatpush2.msra.mxu0 0.0
        %689 = vmatprep.mubr.f32.mxu0 0.0
        %v690 = vand.u32 %v288, 4294901760
        %v691 = vsub.f32 %v288, %v690
        %v692 = vand.u32 %v691, 4294901760
        %693 = vmatmul.mubr.f32.gmra.mxu0 %v692
        %v694 = vpop.f32.mrf.mxu0
        %v695 = vadd.f32 %v593, %v694
        %v696 = vpop.f32.mrf.mxu0
        %697 = vmatprep.mubr.f32.mxu0 0.0
        %v698 = vand.u32 %v291, 4294901760
        %v699 = vsub.f32 %v291, %v698
        %v700 = vand.u32 %v699, 4294901760
        %701 = vmatmul.mubr.f32.gmra.mxu0 %v700
        %v702 = vpop.f32.mrf.mxu0
        %v703 = vadd.f32 %v600, %v702
        %v704 = vpop.f32.mrf.mxu0
        %705 = vmatprep.mubr.f32.mxu0 0.0
        %v706 = vand.u32 %v294, 4294901760
        %v707 = vsub.f32 %v294, %v706
        %v708 = vand.u32 %v707, 4294901760
        %709 = vmatmul.mubr.f32.gmra.mxu0 %v708
        %v710 = vpop.f32.mrf.mxu0
        %v711 = vadd.f32 %v607, %v710
        %v712 = vpop.f32.mrf.mxu0
        %713 = vmatprep.mubr.f32.mxu0 0.0
        %v714 = vand.u32 %v297, 4294901760
        %v715 = vsub.f32 %v297, %v714
        %v716 = vand.u32 %v715, 4294901760
        %717 = vmatmul.mubr.f32.gmra.mxu0 %v716
        %v718 = vpop.f32.mrf.mxu0
        %v719 = vadd.f32 %v614, %v718
        %v720 = vpop.f32.mrf.mxu0
        %721 = vmatprep.mubr.f32.mxu0 0.0
        %v722 = vand.u32 %v300, 4294901760
        %v723 = vsub.f32 %v300, %v722
        %v724 = vand.u32 %v723, 4294901760
        %725 = vmatmul.mubr.f32.gmra.mxu0 %v724
        %v726 = vpop.f32.mrf.mxu0
        %v727 = vadd.f32 %v621, %v726
        %v728 = vpop.f32.mrf.mxu0
        %729 = vdwg.mxu0
        %730 = vmatprep.subr.mxu0 0.0
        %731 = vmatpush1.msra.mxu0 0.0
        %732 = vmatprep.subr.mxu0 0.0
        %733 = vmatpush1.msra.mxu0 0.0
        %734 = vmatprep.subr.mxu0 0.0
        %735 = vmatpush1.msra.mxu0 0.0
        %736 = vmatprep.subr.mxu0 0.0
        %737 = vmatpush1.msra.mxu0 0.0
        %738 = vmatprep.subr.mxu0 0.0
        %739 = vmatpush1.msra.mxu0 0.0
        %740 = vmatprep.subr.mxu0 0.0
        %741 = vmatpush1.msra.mxu0 0.0
        %742 = vmatprep.subr.mxu0 0.0
        %743 = vmatpush1.msra.mxu0 0.0
        %744 = vmatprep.subr.mxu0 0.0
        %745 = vmatpush1.msra.mxu0 0.0
        %746 = vmatprep.subr.mxu0 0.0
        %747 = vmatpush1.msra.mxu0 0.0
        %748 = vmatprep.subr.mxu0 0.0
        %749 = vmatpush1.msra.mxu0 0.0
        %750 = vmatprep.subr.mxu0 0.0
        %751 = vmatpush1.msra.mxu0 0.0
        %752 = vmatprep.subr.mxu0 0.0
        %753 = vmatpush1.msra.mxu0 0.0
        %754 = vmatprep.subr.mxu0 0.0
        %755 = vmatpush1.msra.mxu0 0.0
        %756 = vmatprep.subr.mxu0 0.0
        %757 = vmatpush1.msra.mxu0 0.0
        %758 = vmatprep.subr.mxu0 0.0
        %759 = vmatpush1.msra.mxu0 0.0
        %760 = vmatprep.subr.mxu0 0.0
        %v761 = vand.u32 %v304, 4294901760
        %v762 = vsub.f32 %v304, %v761
        %v763 = vand.u32 %v762, 4294901760
        %764 = vmatpush1.msra.mxu0 %v763
        %765 = vmatprep.subr.mxu0 0.0
        %766 = vmatpush2.msra.mxu0 0.0
        %767 = vmatprep.subr.mxu0 0.0
        %768 = vmatpush2.msra.mxu0 0.0
        %769 = vmatprep.subr.mxu0 0.0
        %770 = vmatpush2.msra.mxu0 0.0
        %771 = vmatprep.subr.mxu0 0.0
        %772 = vmatpush2.msra.mxu0 0.0
        %773 = vmatprep.subr.mxu0 0.0
        %774 = vmatpush2.msra.mxu0 0.0
        %775 = vmatprep.subr.mxu0 0.0
        %776 = vmatpush2.msra.mxu0 0.0
        %777 = vmatprep.subr.mxu0 0.0
        %778 = vmatpush2.msra.mxu0 0.0
        %779 = vmatprep.subr.mxu0 0.0
        %780 = vmatpush2.msra.mxu0 0.0
        %781 = vmatprep.subr.mxu0 0.0
        %782 = vmatpush2.msra.mxu0 0.0
        %783 = vmatprep.subr.mxu0 0.0
        %784 = vmatpush2.msra.mxu0 0.0
        %785 = vmatprep.subr.mxu0 0.0
        %786 = vmatpush2.msra.mxu0 0.0
        %787 = vmatprep.subr.mxu0 0.0
        %788 = vmatpush2.msra.mxu0 0.0
        %789 = vmatprep.subr.mxu0 0.0
        %790 = vmatpush2.msra.mxu0 0.0
        %791 = vmatprep.subr.mxu0 0.0
        %792 = vmatpush2.msra.mxu0 0.0
        %793 = vmatprep.subr.mxu0 0.0
        %794 = vmatpush2.msra.mxu0 0.0
        %795 = vmatprep.subr.mxu0 0.0
        %796 = vmatpush2.msra.mxu0 0.0
        %797 = vmatprep.mubr.f32.mxu0 0.0
        %v798 = vand.u32 %v288, 4294901760
        %799 = vmatmul.mubr.f32.gmra.mxu0 %v798
        %v800 = vpop.f32.mrf.mxu0
        %v801 = vadd.f32 %v695, %v800
        %v802 = vpop.f32.mrf.mxu0
        %803 = vmatprep.mubr.f32.mxu0 0.0
        %v804 = vand.u32 %v291, 4294901760
        %805 = vmatmul.mubr.f32.gmra.mxu0 %v804
        %v806 = vpop.f32.mrf.mxu0
        %v807 = vadd.f32 %v703, %v806
        %v808 = vpop.f32.mrf.mxu0
        %809 = vmatprep.mubr.f32.mxu0 0.0
        %v810 = vand.u32 %v294, 4294901760
        %811 = vmatmul.mubr.f32.gmra.mxu0 %v810
        %v812 = vpop.f32.mrf.mxu0
        %v813 = vadd.f32 %v711, %v812
        %v814 = vpop.f32.mrf.mxu0
        %815 = vmatprep.mubr.f32.mxu0 0.0
        %v816 = vand.u32 %v297, 4294901760
        %817 = vmatmul.mubr.f32.gmra.mxu0 %v816
        %v818 = vpop.f32.mrf.mxu0
        %v819 = vadd.f32 %v719, %v818
        %v820 = vpop.f32.mrf.mxu0
        %821 = vmatprep.mubr.f32.mxu0 0.0
        %v822 = vand.u32 %v300, 4294901760
        %823 = vmatmul.mubr.f32.gmra.mxu0 %v822
        %v824 = vpop.f32.mrf.mxu0
        %v825 = vadd.f32 %v727, %v824
        %v826 = vpop.f32.mrf.mxu0
        %827 = vdwg.mxu0
        %828 = vmatprep.subr.mxu0 0.0
        %829 = vmatpush1.msra.mxu0 0.0
        %830 = vmatprep.subr.mxu0 0.0
        %831 = vmatpush1.msra.mxu0 0.0
        %832 = vmatprep.subr.mxu0 0.0
        %833 = vmatpush1.msra.mxu0 0.0
        %834 = vmatprep.subr.mxu0 0.0
        %835 = vmatpush1.msra.mxu0 0.0
        %836 = vmatprep.subr.mxu0 0.0
        %837 = vmatpush1.msra.mxu0 0.0
        %838 = vmatprep.subr.mxu0 0.0
        %839 = vmatpush1.msra.mxu0 0.0
        %840 = vmatprep.subr.mxu0 0.0
        %841 = vmatpush1.msra.mxu0 0.0
        %842 = vmatprep.subr.mxu0 0.0
        %843 = vmatpush1.msra.mxu0 0.0
        %844 = vmatprep.subr.mxu0 0.0
        %845 = vmatpush1.msra.mxu0 0.0
        %846 = vmatprep.subr.mxu0 0.0
        %847 = vmatpush1.msra.mxu0 0.0
        %848 = vmatprep.subr.mxu0 0.0
        %849 = vmatpush1.msra.mxu0 0.0
        %850 = vmatprep.subr.mxu0 0.0
        %851 = vmatpush1.msra.mxu0 0.0
        %852 = vmatprep.subr.mxu0 0.0
        %853 = vmatpush1.msra.mxu0 0.0
        %854 = vmatprep.subr.mxu0 0.0
        %855 = vmatpush1.msra.mxu0 0.0
        %856 = vmatprep.subr.mxu0 0.0
        %857 = vmatpush1.msra.mxu0 0.0
        %858 = vmatprep.subr.mxu0 0.0
        %v859 = vand.u32 %v304, 4294901760
        %860 = vmatpush1.msra.mxu0 %v859
        %861 = vmatprep.subr.mxu0 0.0
        %862 = vmatpush2.msra.mxu0 0.0
        %863 = vmatprep.subr.mxu0 0.0
        %864 = vmatpush2.msra.mxu0 0.0
        %865 = vmatprep.subr.mxu0 0.0
        %866 = vmatpush2.msra.mxu0 0.0
        %867 = vmatprep.subr.mxu0 0.0
        %868 = vmatpush2.msra.mxu0 0.0
        %869 = vmatprep.subr.mxu0 0.0
        %870 = vmatpush2.msra.mxu0 0.0
        %871 = vmatprep.subr.mxu0 0.0
        %872 = vmatpush2.msra.mxu0 0.0
        %873 = vmatprep.subr.mxu0 0.0
        %874 = vmatpush2.msra.mxu0 0.0
        %875 = vmatprep.subr.mxu0 0.0
        %876 = vmatpush2.msra.mxu0 0.0
        %877 = vmatprep.subr.mxu0 0.0
        %878 = vmatpush2.msra.mxu0 0.0
        %879 = vmatprep.subr.mxu0 0.0
        %880 = vmatpush2.msra.mxu0 0.0
        %881 = vmatprep.subr.mxu0 0.0
        %882 = vmatpush2.msra.mxu0 0.0
        %883 = vmatprep.subr.mxu0 0.0
        %884 = vmatpush2.msra.mxu0 0.0
        %885 = vmatprep.subr.mxu0 0.0
        %886 = vmatpush2.msra.mxu0 0.0
        %887 = vmatprep.subr.mxu0 0.0
        %888 = vmatpush2.msra.mxu0 0.0
        %889 = vmatprep.subr.mxu0 0.0
        %890 = vmatpush2.msra.mxu0 0.0
        %891 = vmatprep.subr.mxu0 0.0
        %892 = vmatpush2.msra.mxu0 0.0
        %893 = vmatprep.mubr.f32.mxu0 0.0
        %v894 = vand.u32 %v288, 4294901760
        %895 = vmatmul.mubr.f32.gmra.mxu0 %v894
        %v896 = vpop.f32.mrf.mxu0
        %v897 = vadd.f32 %v801, %v896
        %v898 = vpop.f32.mrf.mxu0
        %899 = vmatprep.mubr.f32.mxu0 0.0
        %v900 = vand.u32 %v291, 4294901760
        %901 = vmatmul.mubr.f32.gmra.mxu0 %v900
        %v902 = vpop.f32.mrf.mxu0
        %v903 = vadd.f32 %v807, %v902
        %v904 = vpop.f32.mrf.mxu0
        %905 = vmatprep.mubr.f32.mxu0 0.0
        %v906 = vand.u32 %v294, 4294901760
        %907 = vmatmul.mubr.f32.gmra.mxu0 %v906
        %v908 = vpop.f32.mrf.mxu0
        %v909 = vadd.f32 %v813, %v908
        %v910 = vpop.f32.mrf.mxu0
        %911 = vmatprep.mubr.f32.mxu0 0.0
        %v912 = vand.u32 %v297, 4294901760
        %913 = vmatmul.mubr.f32.gmra.mxu0 %v912
        %v914 = vpop.f32.mrf.mxu0
        %v915 = vadd.f32 %v819, %v914
        %v916 = vpop.f32.mrf.mxu0
        %917 = vmatprep.mubr.f32.mxu0 0.0
        %v918 = vand.u32 %v300, 4294901760
        %919 = vmatmul.mubr.f32.gmra.mxu0 %v918
        %v920 = vpop.f32.mrf.mxu0
        %v921 = vadd.f32 %v825, %v920
        %v922 = vpop.f32.mrf.mxu0
        %923 = vdwg.mxu0
        %v924 = vtanh.pop %v897
        %v925 = vtanh.pop %v903
        %v926 = vtanh.pop %v909
        %v927 = vtanh.pop %v915
        %v928 = vtanh.pop %v921
        %v929 = vld [vmem:[%s2] sm:$0xff]
        %v930 = vld [vmem:[%s2 + $0x8] sm:$0xff]
        %v931 = vld [vmem:[%s2 + $0x10] sm:$0xff]
        %v932 = vld [vmem:[%s2 + $0x18] sm:$0xff]
        %v933 = vld [vmem:[%s2 + $0x20] sm:$0xff]
        %s934 = scalar_lea.vmem %s4, 40
        %v935 = vld [vmem:[%s934] sm:$0xff]
        %v936 = vld [vmem:[%s934 + $0x8] sm:$0xff]
        %v937 = vld [vmem:[%s934 + $0x10] sm:$0xff]
        %v938 = vld [vmem:[%s934 + $0x18] sm:$0xff]
        %v939 = vld [vmem:[%s934 + $0x20] sm:$0xff]
        %941 = vset.pattern.permute.xlu0 0
        %942 = vperm.xlu0 %941, %v935
        %v943 = vpop.permute.xlu0 %942
        %946 = vset.pattern.permute.xlu0 0
        %947 = vperm.xlu0 %946, %v936
        %v948 = vpop.permute.xlu0 %947
        %951 = vset.pattern.permute.xlu0 0
        %952 = vperm.xlu0 %951, %v937
        %v953 = vpop.permute.xlu0 %952
        %956 = vset.pattern.permute.xlu0 0
        %957 = vperm.xlu0 %956, %v938
        %v958 = vpop.permute.xlu0 %957
        %961 = vset.pattern.permute.xlu0 0
        %962 = vperm.xlu0 %961, %v939
        %v963 = vpop.permute.xlu0 %962
        %vm965 = vcmask 326656
        %v967 = vsel %vm965, %v929, 0
        %v970 = vsel %vm965, %v930, 0
        %v973 = vsel %vm965, %v931, 0
        %v976 = vsel %vm965, %v932, 0
        %v979 = vsel %vm965, %v933, 0
        %981 = vmatprep.subr.mxu0 0.0
        %982 = vmatpush1.msra.mxu0 0.0
        %983 = vmatprep.subr.mxu0 0.0
        %984 = vmatpush1.msra.mxu0 0.0
        %985 = vmatprep.subr.mxu0 0.0
        %986 = vmatpush1.msra.mxu0 0.0
        %987 = vmatprep.subr.mxu0 0.0
        %988 = vmatpush1.msra.mxu0 0.0
        %989 = vmatprep.subr.mxu0 0.0
        %990 = vmatpush1.msra.mxu0 0.0
        %991 = vmatprep.subr.mxu0 0.0
        %992 = vmatpush1.msra.mxu0 0.0
        %993 = vmatprep.subr.mxu0 0.0
        %994 = vmatpush1.msra.mxu0 0.0
        %995 = vmatprep.subr.mxu0 0.0
        %996 = vmatpush1.msra.mxu0 0.0
        %997 = vmatprep.subr.mxu0 0.0
        %998 = vmatpush1.msra.mxu0 0.0
        %999 = vmatprep.subr.mxu0 0.0
        %1000 = vmatpush1.msra.mxu0 0.0
        %1001 = vmatprep.subr.mxu0 0.0
        %1002 = vmatpush1.msra.mxu0 0.0
        %1003 = vmatprep.subr.mxu0 0.0
        %v1004 = vand.u32 %v928, 4294901760
        %1005 = vmatpush1.msra.mxu0 %v1004
        %1006 = vmatprep.subr.mxu0 0.0
        %v1007 = vand.u32 %v927, 4294901760
        %1008 = vmatpush1.msra.mxu0 %v1007
        %1009 = vmatprep.subr.mxu0 0.0
        %v1010 = vand.u32 %v926, 4294901760
        %1011 = vmatpush1.msra.mxu0 %v1010
        %1012 = vmatprep.subr.mxu0 0.0
        %v1013 = vand.u32 %v925, 4294901760
        %1014 = vmatpush1.msra.mxu0 %v1013
        %1015 = vmatprep.subr.mxu0 0.0
        %v1016 = vand.u32 %v924, 4294901760
        %1017 = vmatpush1.msra.mxu0 %v1016
        %1018 = vmatprep.subr.mxu0 0.0
        %1019 = vmatpush2.msra.mxu0 0.0
        %1020 = vmatprep.subr.mxu0 0.0
        %1021 = vmatpush2.msra.mxu0 0.0
        %1022 = vmatprep.subr.mxu0 0.0
        %1023 = vmatpush2.msra.mxu0 0.0
        %1024 = vmatprep.subr.mxu0 0.0
        %1025 = vmatpush2.msra.mxu0 0.0
        %1026 = vmatprep.subr.mxu0 0.0
        %1027 = vmatpush2.msra.mxu0 0.0
        %1028 = vmatprep.subr.mxu0 0.0
        %1029 = vmatpush2.msra.mxu0 0.0
        %1030 = vmatprep.subr.mxu0 0.0
        %1031 = vmatpush2.msra.mxu0 0.0
        %1032 = vmatprep.subr.mxu0 0.0
        %1033 = vmatpush2.msra.mxu0 0.0
        %1034 = vmatprep.subr.mxu0 0.0
        %1035 = vmatpush2.msra.mxu0 0.0
        %1036 = vmatprep.subr.mxu0 0.0
        %1037 = vmatpush2.msra.mxu0 0.0
        %1038 = vmatprep.subr.mxu0 0.0
        %1039 = vmatpush2.msra.mxu0 0.0
        %1040 = vmatprep.subr.mxu0 0.0
        %1041 = vmatpush2.msra.mxu0 0.0
        %1042 = vmatprep.subr.mxu0 0.0
        %1043 = vmatpush2.msra.mxu0 0.0
        %1044 = vmatprep.subr.mxu0 0.0
        %1045 = vmatpush2.msra.mxu0 0.0
        %1046 = vmatprep.subr.mxu0 0.0
        %1047 = vmatpush2.msra.mxu0 0.0
        %1048 = vmatprep.subr.mxu0 0.0
        %1049 = vmatpush2.msra.mxu0 0.0
        %1050 = vmatprep.mubr.f32.mxu0 0.0
        %v1051 = vand.u32 %v967, 4294901760
        %v1052 = vsub.f32 %v967, %v1051
        %v1053 = vand.u32 %v1052, 4294901760
        %v1054 = vsub.f32 %v1052, %v1053
        %v1055 = vand.u32 %v1054, 4294901760
        %1056 = vmatmul.mubr.f32.gmra.mxu0 %v1055
        %v1057 = vpop.f32.mrf.mxu0
        %v1058 = vadd.f32 %v943, %v1057
        %v1059 = vpop.f32.mrf.mxu0
        %1060 = vmatprep.mubr.f32.mxu0 0.0
        %v1061 = vand.u32 %v970, 4294901760
        %v1062 = vsub.f32 %v970, %v1061
        %v1063 = vand.u32 %v1062, 4294901760
        %v1064 = vsub.f32 %v1062, %v1063
        %v1065 = vand.u32 %v1064, 4294901760
        %1066 = vmatmul.mubr.f32.gmra.mxu0 %v1065
        %v1067 = vpop.f32.mrf.mxu0
        %v1068 = vadd.f32 %v948, %v1067
        %v1069 = vpop.f32.mrf.mxu0
        %1070 = vmatprep.mubr.f32.mxu0 0.0
        %v1071 = vand.u32 %v973, 4294901760
        %v1072 = vsub.f32 %v973, %v1071
        %v1073 = vand.u32 %v1072, 4294901760
        %v1074 = vsub.f32 %v1072, %v1073
        %v1075 = vand.u32 %v1074, 4294901760
        %1076 = vmatmul.mubr.f32.gmra.mxu0 %v1075
        %v1077 = vpop.f32.mrf.mxu0
        %v1078 = vadd.f32 %v953, %v1077
        %v1079 = vpop.f32.mrf.mxu0
        %1080 = vmatprep.mubr.f32.mxu0 0.0
        %v1081 = vand.u32 %v976, 4294901760
        %v1082 = vsub.f32 %v976, %v1081
        %v1083 = vand.u32 %v1082, 4294901760
        %v1084 = vsub.f32 %v1082, %v1083
        %v1085 = vand.u32 %v1084, 4294901760
        %1086 = vmatmul.mubr.f32.gmra.mxu0 %v1085
        %v1087 = vpop.f32.mrf.mxu0
        %v1088 = vadd.f32 %v958, %v1087
        %v1089 = vpop.f32.mrf.mxu0
        %1090 = vmatprep.mubr.f32.mxu0 0.0
        %v1091 = vand.u32 %v979, 4294901760
        %v1092 = vsub.f32 %v979, %v1091
        %v1093 = vand.u32 %v1092, 4294901760
        %v1094 = vsub.f32 %v1092, %v1093
        %v1095 = vand.u32 %v1094, 4294901760
        %1096 = vmatmul.mubr.f32.gmra.mxu0 %v1095
        %v1097 = vpop.f32.mrf.mxu0
        %v1098 = vadd.f32 %v963, %v1097
        %v1099 = vpop.f32.mrf.mxu0
        %1100 = vdwg.mxu0
        %1101 = vmatprep.subr.mxu0 0.0
        %1102 = vmatpush1.msra.mxu0 0.0
        %1103 = vmatprep.subr.mxu0 0.0
        %1104 = vmatpush1.msra.mxu0 0.0
        %1105 = vmatprep.subr.mxu0 0.0
        %1106 = vmatpush1.msra.mxu0 0.0
        %1107 = vmatprep.subr.mxu0 0.0
        %1108 = vmatpush1.msra.mxu0 0.0
        %1109 = vmatprep.subr.mxu0 0.0
        %1110 = vmatpush1.msra.mxu0 0.0
        %1111 = vmatprep.subr.mxu0 0.0
        %1112 = vmatpush1.msra.mxu0 0.0
        %1113 = vmatprep.subr.mxu0 0.0
        %1114 = vmatpush1.msra.mxu0 0.0
        %1115 = vmatprep.subr.mxu0 0.0
        %1116 = vmatpush1.msra.mxu0 0.0
        %1117 = vmatprep.subr.mxu0 0.0
        %1118 = vmatpush1.msra.mxu0 0.0
        %1119 = vmatprep.subr.mxu0 0.0
        %1120 = vmatpush1.msra.mxu0 0.0
        %1121 = vmatprep.subr.mxu0 0.0
        %1122 = vmatpush1.msra.mxu0 0.0
        %1123 = vmatprep.subr.mxu0 0.0
        %v1124 = vand.u32 %v928, 4294901760
        %v1125 = vsub.f32 %v928, %v1124
        %v1126 = vand.u32 %v1125, 4294901760
        %v1127 = vsub.f32 %v1125, %v1126
        %v1128 = vand.u32 %v1127, 4294901760
        %1129 = vmatpush1.msra.mxu0 %v1128
        %1130 = vmatprep.subr.mxu0 0.0
        %v1131 = vand.u32 %v927, 4294901760
        %v1132 = vsub.f32 %v927, %v1131
        %v1133 = vand.u32 %v1132, 4294901760
        %v1134 = vsub.f32 %v1132, %v1133
        %v1135 = vand.u32 %v1134, 4294901760
        %1136 = vmatpush1.msra.mxu0 %v1135
        %1137 = vmatprep.subr.mxu0 0.0
        %v1138 = vand.u32 %v926, 4294901760
        %v1139 = vsub.f32 %v926, %v1138
        %v1140 = vand.u32 %v1139, 4294901760
        %v1141 = vsub.f32 %v1139, %v1140
        %v1142 = vand.u32 %v1141, 4294901760
        %1143 = vmatpush1.msra.mxu0 %v1142
        %1144 = vmatprep.subr.mxu0 0.0
        %v1145 = vand.u32 %v925, 4294901760
        %v1146 = vsub.f32 %v925, %v1145
        %v1147 = vand.u32 %v1146, 4294901760
        %v1148 = vsub.f32 %v1146, %v1147
        %v1149 = vand.u32 %v1148, 4294901760
        %1150 = vmatpush1.msra.mxu0 %v1149
        %1151 = vmatprep.subr.mxu0 0.0
        %v1152 = vand.u32 %v924, 4294901760
        %v1153 = vsub.f32 %v924, %v1152
        %v1154 = vand.u32 %v1153, 4294901760
        %v1155 = vsub.f32 %v1153, %v1154
        %v1156 = vand.u32 %v1155, 4294901760
        %1157 = vmatpush1.msra.mxu0 %v1156
        %1158 = vmatprep.subr.mxu0 0.0
        %1159 = vmatpush2.msra.mxu0 0.0
        %1160 = vmatprep.subr.mxu0 0.0
        %1161 = vmatpush2.msra.mxu0 0.0
        %1162 = vmatprep.subr.mxu0 0.0
        %1163 = vmatpush2.msra.mxu0 0.0
        %1164 = vmatprep.subr.mxu0 0.0
        %1165 = vmatpush2.msra.mxu0 0.0
        %1166 = vmatprep.subr.mxu0 0.0
        %1167 = vmatpush2.msra.mxu0 0.0
        %1168 = vmatprep.subr.mxu0 0.0
        %1169 = vmatpush2.msra.mxu0 0.0
        %1170 = vmatprep.subr.mxu0 0.0
        %1171 = vmatpush2.msra.mxu0 0.0
        %1172 = vmatprep.subr.mxu0 0.0
        %1173 = vmatpush2.msra.mxu0 0.0
        %1174 = vmatprep.subr.mxu0 0.0
        %1175 = vmatpush2.msra.mxu0 0.0
        %1176 = vmatprep.subr.mxu0 0.0
        %1177 = vmatpush2.msra.mxu0 0.0
        %1178 = vmatprep.subr.mxu0 0.0
        %1179 = vmatpush2.msra.mxu0 0.0
        %1180 = vmatprep.subr.mxu0 0.0
        %1181 = vmatpush2.msra.mxu0 0.0
        %1182 = vmatprep.subr.mxu0 0.0
        %1183 = vmatpush2.msra.mxu0 0.0
        %1184 = vmatprep.subr.mxu0 0.0
        %1185 = vmatpush2.msra.mxu0 0.0
        %1186 = vmatprep.subr.mxu0 0.0
        %1187 = vmatpush2.msra.mxu0 0.0
        %1188 = vmatprep.subr.mxu0 0.0
        %1189 = vmatpush2.msra.mxu0 0.0
        %1190 = vmatprep.mubr.f32.mxu0 0.0
        %v1191 = vand.u32 %v967, 4294901760
        %1192 = vmatmul.mubr.f32.gmra.mxu0 %v1191
        %v1193 = vpop.f32.mrf.mxu0
        %v1194 = vadd.f32 %v1058, %v1193
        %v1195 = vpop.f32.mrf.mxu0
        %1196 = vmatprep.mubr.f32.mxu0 0.0
        %v1197 = vand.u32 %v970, 4294901760
        %1198 = vmatmul.mubr.f32.gmra.mxu0 %v1197
        %v1199 = vpop.f32.mrf.mxu0
        %v1200 = vadd.f32 %v1068, %v1199
        %v1201 = vpop.f32.mrf.mxu0
        %1202 = vmatprep.mubr.f32.mxu0 0.0
        %v1203 = vand.u32 %v973, 4294901760
        %1204 = vmatmul.mubr.f32.gmra.mxu0 %v1203
        %v1205 = vpop.f32.mrf.mxu0
        %v1206 = vadd.f32 %v1078, %v1205
        %v1207 = vpop.f32.mrf.mxu0
        %1208 = vmatprep.mubr.f32.mxu0 0.0
        %v1209 = vand.u32 %v976, 4294901760
        %1210 = vmatmul.mubr.f32.gmra.mxu0 %v1209
        %v1211 = vpop.f32.mrf.mxu0
        %v1212 = vadd.f32 %v1088, %v1211
        %v1213 = vpop.f32.mrf.mxu0
        %1214 = vmatprep.mubr.f32.mxu0 0.0
        %v1215 = vand.u32 %v979, 4294901760
        %1216 = vmatmul.mubr.f32.gmra.mxu0 %v1215
        %v1217 = vpop.f32.mrf.mxu0
        %v1218 = vadd.f32 %v1098, %v1217
        %v1219 = vpop.f32.mrf.mxu0
        %1220 = vdwg.mxu0
        %1221 = vmatprep.subr.mxu0 0.0
        %1222 = vmatpush1.msra.mxu0 0.0
        %1223 = vmatprep.subr.mxu0 0.0
        %1224 = vmatpush1.msra.mxu0 0.0
        %1225 = vmatprep.subr.mxu0 0.0
        %1226 = vmatpush1.msra.mxu0 0.0
        %1227 = vmatprep.subr.mxu0 0.0
        %1228 = vmatpush1.msra.mxu0 0.0
        %1229 = vmatprep.subr.mxu0 0.0
        %1230 = vmatpush1.msra.mxu0 0.0
        %1231 = vmatprep.subr.mxu0 0.0
        %1232 = vmatpush1.msra.mxu0 0.0
        %1233 = vmatprep.subr.mxu0 0.0
        %1234 = vmatpush1.msra.mxu0 0.0
        %1235 = vmatprep.subr.mxu0 0.0
        %1236 = vmatpush1.msra.mxu0 0.0
        %1237 = vmatprep.subr.mxu0 0.0
        %1238 = vmatpush1.msra.mxu0 0.0
        %1239 = vmatprep.subr.mxu0 0.0
        %1240 = vmatpush1.msra.mxu0 0.0
        %1241 = vmatprep.subr.mxu0 0.0
        %1242 = vmatpush1.msra.mxu0 0.0
        %1243 = vmatprep.subr.mxu0 0.0
        %v1244 = vand.u32 %v928, 4294901760
        %v1245 = vsub.f32 %v928, %v1244
        %1246 = vmatpush1.msra.mxu0 %v1245
        %1247 = vmatprep.subr.mxu0 0.0
        %v1248 = vand.u32 %v927, 4294901760
        %v1249 = vsub.f32 %v927, %v1248
        %1250 = vmatpush1.msra.mxu0 %v1249
        %1251 = vmatprep.subr.mxu0 0.0
        %v1252 = vand.u32 %v926, 4294901760
        %v1253 = vsub.f32 %v926, %v1252
        %1254 = vmatpush1.msra.mxu0 %v1253
        %1255 = vmatprep.subr.mxu0 0.0
        %v1256 = vand.u32 %v925, 4294901760
        %v1257 = vsub.f32 %v925, %v1256
        %1258 = vmatpush1.msra.mxu0 %v1257
        %1259 = vmatprep.subr.mxu0 0.0
        %v1260 = vand.u32 %v924, 4294901760
        %v1261 = vsub.f32 %v924, %v1260
        %1262 = vmatpush1.msra.mxu0 %v1261
        %1263 = vmatprep.subr.mxu0 0.0
        %1264 = vmatpush2.msra.mxu0 0.0
        %1265 = vmatprep.subr.mxu0 0.0
        %1266 = vmatpush2.msra.mxu0 0.0
        %1267 = vmatprep.subr.mxu0 0.0
        %1268 = vmatpush2.msra.mxu0 0.0
        %1269 = vmatprep.subr.mxu0 0.0
        %1270 = vmatpush2.msra.mxu0 0.0
        %1271 = vmatprep.subr.mxu0 0.0
        %1272 = vmatpush2.msra.mxu0 0.0
        %1273 = vmatprep.subr.mxu0 0.0
        %1274 = vmatpush2.msra.mxu0 0.0
        %1275 = vmatprep.subr.mxu0 0.0
        %1276 = vmatpush2.msra.mxu0 0.0
        %1277 = vmatprep.subr.mxu0 0.0
        %1278 = vmatpush2.msra.mxu0 0.0
        %1279 = vmatprep.subr.mxu0 0.0
        %1280 = vmatpush2.msra.mxu0 0.0
        %1281 = vmatprep.subr.mxu0 0.0
        %1282 = vmatpush2.msra.mxu0 0.0
        %1283 = vmatprep.subr.mxu0 0.0
        %1284 = vmatpush2.msra.mxu0 0.0
        %1285 = vmatprep.subr.mxu0 0.0
        %1286 = vmatpush2.msra.mxu0 0.0
        %1287 = vmatprep.subr.mxu0 0.0
        %1288 = vmatpush2.msra.mxu0 0.0
        %1289 = vmatprep.subr.mxu0 0.0
        %1290 = vmatpush2.msra.mxu0 0.0
        %1291 = vmatprep.subr.mxu0 0.0
        %1292 = vmatpush2.msra.mxu0 0.0
        %1293 = vmatprep.subr.mxu0 0.0
        %1294 = vmatpush2.msra.mxu0 0.0
        %1295 = vmatprep.mubr.f32.mxu0 0.0
        %v1296 = vand.u32 %v967, 4294901760
        %v1297 = vsub.f32 %v967, %v1296
        %1298 = vmatmul.mubr.f32.gmra.mxu0 %v1297
        %v1299 = vpop.f32.mrf.mxu0
        %v1300 = vadd.f32 %v1194, %v1299
        %v1301 = vpop.f32.mrf.mxu0
        %1302 = vmatprep.mubr.f32.mxu0 0.0
        %v1303 = vand.u32 %v970, 4294901760
        %v1304 = vsub.f32 %v970, %v1303
        %1305 = vmatmul.mubr.f32.gmra.mxu0 %v1304
        %v1306 = vpop.f32.mrf.mxu0
        %v1307 = vadd.f32 %v1200, %v1306
        %v1308 = vpop.f32.mrf.mxu0
        %1309 = vmatprep.mubr.f32.mxu0 0.0
        %v1310 = vand.u32 %v973, 4294901760
        %v1311 = vsub.f32 %v973, %v1310
        %1312 = vmatmul.mubr.f32.gmra.mxu0 %v1311
        %v1313 = vpop.f32.mrf.mxu0
        %v1314 = vadd.f32 %v1206, %v1313
        %v1315 = vpop.f32.mrf.mxu0
        %1316 = vmatprep.mubr.f32.mxu0 0.0
        %v1317 = vand.u32 %v976, 4294901760
        %v1318 = vsub.f32 %v976, %v1317
        %1319 = vmatmul.mubr.f32.gmra.mxu0 %v1318
        %v1320 = vpop.f32.mrf.mxu0
        %v1321 = vadd.f32 %v1212, %v1320
        %v1322 = vpop.f32.mrf.mxu0
        %1323 = vmatprep.mubr.f32.mxu0 0.0
        %v1324 = vand.u32 %v979, 4294901760
        %v1325 = vsub.f32 %v979, %v1324
        %1326 = vmatmul.mubr.f32.gmra.mxu0 %v1325
        %v1327 = vpop.f32.mrf.mxu0
        %v1328 = vadd.f32 %v1218, %v1327
        %v1329 = vpop.f32.mrf.mxu0
        %1330 = vdwg.mxu0
        %1331 = vmatprep.subr.mxu0 0.0
        %1332 = vmatpush1.msra.mxu0 0.0
        %1333 = vmatprep.subr.mxu0 0.0
        %1334 = vmatpush1.msra.mxu0 0.0
        %1335 = vmatprep.subr.mxu0 0.0
        %1336 = vmatpush1.msra.mxu0 0.0
        %1337 = vmatprep.subr.mxu0 0.0
        %1338 = vmatpush1.msra.mxu0 0.0
        %1339 = vmatprep.subr.mxu0 0.0
        %1340 = vmatpush1.msra.mxu0 0.0
        %1341 = vmatprep.subr.mxu0 0.0
        %1342 = vmatpush1.msra.mxu0 0.0
        %1343 = vmatprep.subr.mxu0 0.0
        %1344 = vmatpush1.msra.mxu0 0.0
        %1345 = vmatprep.subr.mxu0 0.0
        %1346 = vmatpush1.msra.mxu0 0.0
        %1347 = vmatprep.subr.mxu0 0.0
        %1348 = vmatpush1.msra.mxu0 0.0
        %1349 = vmatprep.subr.mxu0 0.0
        %1350 = vmatpush1.msra.mxu0 0.0
        %1351 = vmatprep.subr.mxu0 0.0
        %1352 = vmatpush1.msra.mxu0 0.0
        %1353 = vmatprep.subr.mxu0 0.0
        %v1354 = vand.u32 %v928, 4294901760
        %1355 = vmatpush1.msra.mxu0 %v1354
        %1356 = vmatprep.subr.mxu0 0.0
        %v1357 = vand.u32 %v927, 4294901760
        %1358 = vmatpush1.msra.mxu0 %v1357
        %1359 = vmatprep.subr.mxu0 0.0
        %v1360 = vand.u32 %v926, 4294901760
        %1361 = vmatpush1.msra.mxu0 %v1360
        %1362 = vmatprep.subr.mxu0 0.0
        %v1363 = vand.u32 %v925, 4294901760
        %1364 = vmatpush1.msra.mxu0 %v1363
        %1365 = vmatprep.subr.mxu0 0.0
        %v1366 = vand.u32 %v924, 4294901760
        %1367 = vmatpush1.msra.mxu0 %v1366
        %1368 = vmatprep.subr.mxu0 0.0
        %1369 = vmatpush2.msra.mxu0 0.0
        %1370 = vmatprep.subr.mxu0 0.0
        %1371 = vmatpush2.msra.mxu0 0.0
        %1372 = vmatprep.subr.mxu0 0.0
        %1373 = vmatpush2.msra.mxu0 0.0
        %1374 = vmatprep.subr.mxu0 0.0
        %1375 = vmatpush2.msra.mxu0 0.0
        %1376 = vmatprep.subr.mxu0 0.0
        %1377 = vmatpush2.msra.mxu0 0.0
        %1378 = vmatprep.subr.mxu0 0.0
        %1379 = vmatpush2.msra.mxu0 0.0
        %1380 = vmatprep.subr.mxu0 0.0
        %1381 = vmatpush2.msra.mxu0 0.0
        %1382 = vmatprep.subr.mxu0 0.0
        %1383 = vmatpush2.msra.mxu0 0.0
        %1384 = vmatprep.subr.mxu0 0.0
        %1385 = vmatpush2.msra.mxu0 0.0
        %1386 = vmatprep.subr.mxu0 0.0
        %1387 = vmatpush2.msra.mxu0 0.0
        %1388 = vmatprep.subr.mxu0 0.0
        %1389 = vmatpush2.msra.mxu0 0.0
        %1390 = vmatprep.subr.mxu0 0.0
        %1391 = vmatpush2.msra.mxu0 0.0
        %1392 = vmatprep.subr.mxu0 0.0
        %1393 = vmatpush2.msra.mxu0 0.0
        %1394 = vmatprep.subr.mxu0 0.0
        %1395 = vmatpush2.msra.mxu0 0.0
        %1396 = vmatprep.subr.mxu0 0.0
        %1397 = vmatpush2.msra.mxu0 0.0
        %1398 = vmatprep.subr.mxu0 0.0
        %1399 = vmatpush2.msra.mxu0 0.0
        %1400 = vmatprep.mubr.f32.mxu0 0.0
        %v1401 = vand.u32 %v967, 4294901760
        %v1402 = vsub.f32 %v967, %v1401
        %v1403 = vand.u32 %v1402, 4294901760
        %1404 = vmatmul.mubr.f32.gmra.mxu0 %v1403
        %v1405 = vpop.f32.mrf.mxu0
        %v1406 = vadd.f32 %v1300, %v1405
        %v1407 = vpop.f32.mrf.mxu0
        %1408 = vmatprep.mubr.f32.mxu0 0.0
        %v1409 = vand.u32 %v970, 4294901760
        %v1410 = vsub.f32 %v970, %v1409
        %v1411 = vand.u32 %v1410, 4294901760
        %1412 = vmatmul.mubr.f32.gmra.mxu0 %v1411
        %v1413 = vpop.f32.mrf.mxu0
        %v1414 = vadd.f32 %v1307, %v1413
        %v1415 = vpop.f32.mrf.mxu0
        %1416 = vmatprep.mubr.f32.mxu0 0.0
        %v1417 = vand.u32 %v973, 4294901760
        %v1418 = vsub.f32 %v973, %v1417
        %v1419 = vand.u32 %v1418, 4294901760
        %1420 = vmatmul.mubr.f32.gmra.mxu0 %v1419
        %v1421 = vpop.f32.mrf.mxu0
        %v1422 = vadd.f32 %v1314, %v1421
        %v1423 = vpop.f32.mrf.mxu0
        %1424 = vmatprep.mubr.f32.mxu0 0.0
        %v1425 = vand.u32 %v976, 4294901760
        %v1426 = vsub.f32 %v976, %v1425
        %v1427 = vand.u32 %v1426, 4294901760
        %1428 = vmatmul.mubr.f32.gmra.mxu0 %v1427
        %v1429 = vpop.f32.mrf.mxu0
        %v1430 = vadd.f32 %v1321, %v1429
        %v1431 = vpop.f32.mrf.mxu0
        %1432 = vmatprep.mubr.f32.mxu0 0.0
        %v1433 = vand.u32 %v979, 4294901760
        %v1434 = vsub.f32 %v979, %v1433
        %v1435 = vand.u32 %v1434, 4294901760
        %1436 = vmatmul.mubr.f32.gmra.mxu0 %v1435
        %v1437 = vpop.f32.mrf.mxu0
        %v1438 = vadd.f32 %v1328, %v1437
        %v1439 = vpop.f32.mrf.mxu0
        %1440 = vdwg.mxu0
        %1441 = vmatprep.subr.mxu0 0.0
        %1442 = vmatpush1.msra.mxu0 0.0
        %1443 = vmatprep.subr.mxu0 0.0
        %1444 = vmatpush1.msra.mxu0 0.0
        %1445 = vmatprep.subr.mxu0 0.0
        %1446 = vmatpush1.msra.mxu0 0.0
        %1447 = vmatprep.subr.mxu0 0.0
        %1448 = vmatpush1.msra.mxu0 0.0
        %1449 = vmatprep.subr.mxu0 0.0
        %1450 = vmatpush1.msra.mxu0 0.0
        %1451 = vmatprep.subr.mxu0 0.0
        %1452 = vmatpush1.msra.mxu0 0.0
        %1453 = vmatprep.subr.mxu0 0.0
        %1454 = vmatpush1.msra.mxu0 0.0
        %1455 = vmatprep.subr.mxu0 0.0
        %1456 = vmatpush1.msra.mxu0 0.0
        %1457 = vmatprep.subr.mxu0 0.0
        %1458 = vmatpush1.msra.mxu0 0.0
        %1459 = vmatprep.subr.mxu0 0.0
        %1460 = vmatpush1.msra.mxu0 0.0
        %1461 = vmatprep.subr.mxu0 0.0
        %1462 = vmatpush1.msra.mxu0 0.0
        %1463 = vmatprep.subr.mxu0 0.0
        %v1464 = vand.u32 %v928, 4294901760
        %v1465 = vsub.f32 %v928, %v1464
        %v1466 = vand.u32 %v1465, 4294901760
        %1467 = vmatpush1.msra.mxu0 %v1466
        %1468 = vmatprep.subr.mxu0 0.0
        %v1469 = vand.u32 %v927, 4294901760
        %v1470 = vsub.f32 %v927, %v1469
        %v1471 = vand.u32 %v1470, 4294901760
        %1472 = vmatpush1.msra.mxu0 %v1471
        %1473 = vmatprep.subr.mxu0 0.0
        %v1474 = vand.u32 %v926, 4294901760
        %v1475 = vsub.f32 %v926, %v1474
        %v1476 = vand.u32 %v1475, 4294901760
        %1477 = vmatpush1.msra.mxu0 %v1476
        %1478 = vmatprep.subr.mxu0 0.0
        %v1479 = vand.u32 %v925, 4294901760
        %v1480 = vsub.f32 %v925, %v1479
        %v1481 = vand.u32 %v1480, 4294901760
        %1482 = vmatpush1.msra.mxu0 %v1481
        %1483 = vmatprep.subr.mxu0 0.0
        %v1484 = vand.u32 %v924, 4294901760
        %v1485 = vsub.f32 %v924, %v1484
        %v1486 = vand.u32 %v1485, 4294901760
        %1487 = vmatpush1.msra.mxu0 %v1486
        %1488 = vmatprep.subr.mxu0 0.0
        %1489 = vmatpush2.msra.mxu0 0.0
        %1490 = vmatprep.subr.mxu0 0.0
        %1491 = vmatpush2.msra.mxu0 0.0
        %1492 = vmatprep.subr.mxu0 0.0
        %1493 = vmatpush2.msra.mxu0 0.0
        %1494 = vmatprep.subr.mxu0 0.0
        %1495 = vmatpush2.msra.mxu0 0.0
        %1496 = vmatprep.subr.mxu0 0.0
        %1497 = vmatpush2.msra.mxu0 0.0
        %1498 = vmatprep.subr.mxu0 0.0
        %1499 = vmatpush2.msra.mxu0 0.0
        %1500 = vmatprep.subr.mxu0 0.0
        %1501 = vmatpush2.msra.mxu0 0.0
        %1502 = vmatprep.subr.mxu0 0.0
        %1503 = vmatpush2.msra.mxu0 0.0
        %1504 = vmatprep.subr.mxu0 0.0
        %1505 = vmatpush2.msra.mxu0 0.0
        %1506 = vmatprep.subr.mxu0 0.0
        %1507 = vmatpush2.msra.mxu0 0.0
        %1508 = vmatprep.subr.mxu0 0.0
        %1509 = vmatpush2.msra.mxu0 0.0
        %1510 = vmatprep.subr.mxu0 0.0
        %1511 = vmatpush2.msra.mxu0 0.0
        %1512 = vmatprep.subr.mxu0 0.0
        %1513 = vmatpush2.msra.mxu0 0.0
        %1514 = vmatprep.subr.mxu0 0.0
        %1515 = vmatpush2.msra.mxu0 0.0
        %1516 = vmatprep.subr.mxu0 0.0
        %1517 = vmatpush2.msra.mxu0 0.0
        %1518 = vmatprep.subr.mxu0 0.0
        %1519 = vmatpush2.msra.mxu0 0.0
        %1520 = vmatprep.mubr.f32.mxu0 0.0
        %v1521 = vand.u32 %v967, 4294901760
        %1522 = vmatmul.mubr.f32.gmra.mxu0 %v1521
        %v1523 = vpop.f32.mrf.mxu0
        %v1524 = vadd.f32 %v1406, %v1523
        %v1525 = vpop.f32.mrf.mxu0
        %1526 = vmatprep.mubr.f32.mxu0 0.0
        %v1527 = vand.u32 %v970, 4294901760
        %1528 = vmatmul.mubr.f32.gmra.mxu0 %v1527
        %v1529 = vpop.f32.mrf.mxu0
        %v1530 = vadd.f32 %v1414, %v1529
        %v1531 = vpop.f32.mrf.mxu0
        %1532 = vmatprep.mubr.f32.mxu0 0.0
        %v1533 = vand.u32 %v973, 4294901760
        %1534 = vmatmul.mubr.f32.gmra.mxu0 %v1533
        %v1535 = vpop.f32.mrf.mxu0
        %v1536 = vadd.f32 %v1422, %v1535
        %v1537 = vpop.f32.mrf.mxu0
        %1538 = vmatprep.mubr.f32.mxu0 0.0
        %v1539 = vand.u32 %v976, 4294901760
        %1540 = vmatmul.mubr.f32.gmra.mxu0 %v1539
        %v1541 = vpop.f32.mrf.mxu0
        %v1542 = vadd.f32 %v1430, %v1541
        %v1543 = vpop.f32.mrf.mxu0
        %1544 = vmatprep.mubr.f32.mxu0 0.0
        %v1545 = vand.u32 %v979, 4294901760
        %1546 = vmatmul.mubr.f32.gmra.mxu0 %v1545
        %v1547 = vpop.f32.mrf.mxu0
        %v1548 = vadd.f32 %v1438, %v1547
        %v1549 = vpop.f32.mrf.mxu0
        %1550 = vdwg.mxu0
        %1551 = vmatprep.subr.mxu0 0.0
        %1552 = vmatpush1.msra.mxu0 0.0
        %1553 = vmatprep.subr.mxu0 0.0
        %1554 = vmatpush1.msra.mxu0 0.0
        %1555 = vmatprep.subr.mxu0 0.0
        %1556 = vmatpush1.msra.mxu0 0.0
        %1557 = vmatprep.subr.mxu0 0.0
        %1558 = vmatpush1.msra.mxu0 0.0
        %1559 = vmatprep.subr.mxu0 0.0
        %1560 = vmatpush1.msra.mxu0 0.0
        %1561 = vmatprep.subr.mxu0 0.0
        %1562 = vmatpush1.msra.mxu0 0.0
        %1563 = vmatprep.subr.mxu0 0.0
        %1564 = vmatpush1.msra.mxu0 0.0
        %1565 = vmatprep.subr.mxu0 0.0
        %1566 = vmatpush1.msra.mxu0 0.0
        %1567 = vmatprep.subr.mxu0 0.0
        %1568 = vmatpush1.msra.mxu0 0.0
        %1569 = vmatprep.subr.mxu0 0.0
        %1570 = vmatpush1.msra.mxu0 0.0
        %1571 = vmatprep.subr.mxu0 0.0
        %1572 = vmatpush1.msra.mxu0 0.0
        %1573 = vmatprep.subr.mxu0 0.0
        %v1574 = vand.u32 %v928, 4294901760
        %1575 = vmatpush1.msra.mxu0 %v1574
        %1576 = vmatprep.subr.mxu0 0.0
        %v1577 = vand.u32 %v927, 4294901760
        %1578 = vmatpush1.msra.mxu0 %v1577
        %1579 = vmatprep.subr.mxu0 0.0
        %v1580 = vand.u32 %v926, 4294901760
        %1581 = vmatpush1.msra.mxu0 %v1580
        %1582 = vmatprep.subr.mxu0 0.0
        %v1583 = vand.u32 %v925, 4294901760
        %1584 = vmatpush1.msra.mxu0 %v1583
        %1585 = vmatprep.subr.mxu0 0.0
        %v1586 = vand.u32 %v924, 4294901760
        %1587 = vmatpush1.msra.mxu0 %v1586
        %1588 = vmatprep.subr.mxu0 0.0
        %1589 = vmatpush2.msra.mxu0 0.0
        %1590 = vmatprep.subr.mxu0 0.0
        %1591 = vmatpush2.msra.mxu0 0.0
        %1592 = vmatprep.subr.mxu0 0.0
        %1593 = vmatpush2.msra.mxu0 0.0
        %1594 = vmatprep.subr.mxu0 0.0
        %1595 = vmatpush2.msra.mxu0 0.0
        %1596 = vmatprep.subr.mxu0 0.0
        %1597 = vmatpush2.msra.mxu0 0.0
        %1598 = vmatprep.subr.mxu0 0.0
        %1599 = vmatpush2.msra.mxu0 0.0
        %1600 = vmatprep.subr.mxu0 0.0
        %1601 = vmatpush2.msra.mxu0 0.0
        %1602 = vmatprep.subr.mxu0 0.0
        %1603 = vmatpush2.msra.mxu0 0.0
        %1604 = vmatprep.subr.mxu0 0.0
        %1605 = vmatpush2.msra.mxu0 0.0
        %1606 = vmatprep.subr.mxu0 0.0
        %1607 = vmatpush2.msra.mxu0 0.0
        %1608 = vmatprep.subr.mxu0 0.0
        %1609 = vmatpush2.msra.mxu0 0.0
        %1610 = vmatprep.subr.mxu0 0.0
        %1611 = vmatpush2.msra.mxu0 0.0
        %1612 = vmatprep.subr.mxu0 0.0
        %1613 = vmatpush2.msra.mxu0 0.0
        %1614 = vmatprep.subr.mxu0 0.0
        %1615 = vmatpush2.msra.mxu0 0.0
        %1616 = vmatprep.subr.mxu0 0.0
        %1617 = vmatpush2.msra.mxu0 0.0
        %1618 = vmatprep.subr.mxu0 0.0
        %1619 = vmatpush2.msra.mxu0 0.0
        %1620 = vmatprep.mubr.f32.mxu0 0.0
        %v1621 = vand.u32 %v967, 4294901760
        %1622 = vmatmul.mubr.f32.gmra.mxu0 %v1621
        %v1623 = vpop.f32.mrf.mxu0
        %v1624 = vadd.f32 %v1524, %v1623
        %v1625 = vpop.f32.mrf.mxu0
        %1626 = vmatprep.mubr.f32.mxu0 0.0
        %v1627 = vand.u32 %v970, 4294901760
        %1628 = vmatmul.mubr.f32.gmra.mxu0 %v1627
        %v1629 = vpop.f32.mrf.mxu0
        %v1630 = vadd.f32 %v1530, %v1629
        %v1631 = vpop.f32.mrf.mxu0
        %1632 = vmatprep.mubr.f32.mxu0 0.0
        %v1633 = vand.u32 %v973, 4294901760
        %1634 = vmatmul.mubr.f32.gmra.mxu0 %v1633
        %v1635 = vpop.f32.mrf.mxu0
        %v1636 = vadd.f32 %v1536, %v1635
        %v1637 = vpop.f32.mrf.mxu0
        %1638 = vmatprep.mubr.f32.mxu0 0.0
        %v1639 = vand.u32 %v976, 4294901760
        %1640 = vmatmul.mubr.f32.gmra.mxu0 %v1639
        %v1641 = vpop.f32.mrf.mxu0
        %v1642 = vadd.f32 %v1542, %v1641
        %v1643 = vpop.f32.mrf.mxu0
        %1644 = vmatprep.mubr.f32.mxu0 0.0
        %v1645 = vand.u32 %v979, 4294901760
        %1646 = vmatmul.mubr.f32.gmra.mxu0 %v1645
        %v1647 = vpop.f32.mrf.mxu0
        %v1648 = vadd.f32 %v1548, %v1647
        %v1649 = vpop.f32.mrf.mxu0
        %1650 = vdwg.mxu0
        %v1651 = vtanh.pop %v1624
        %v1652 = vtanh.pop %v1630
        %v1653 = vtanh.pop %v1636
        %v1654 = vtanh.pop %v1642
        %v1655 = vtanh.pop %v1648
        %s1656 = scalar_lea.vmem %s2, 40
        %v1657 = vld [vmem:[%s1656] sm:$0xff]
        %v1658 = vld [vmem:[%s1656 + $0x8] sm:$0xff]
        %v1659 = vld [vmem:[%s1656 + $0x10] sm:$0xff]
        %v1660 = vld [vmem:[%s1656 + $0x18] sm:$0xff]
        %v1661 = vld [vmem:[%s1656 + $0x20] sm:$0xff]
        %s1662 = scalar_lea.vmem %s4, 80
        %v1663 = vld [vmem:[%s1662] sm:$0xff]
        %v1664 = vld [vmem:[%s1662 + $0x8] sm:$0xff]
        %v1665 = vld [vmem:[%s1662 + $0x10] sm:$0xff]
        %v1666 = vld [vmem:[%s1662 + $0x18] sm:$0xff]
        %v1667 = vld [vmem:[%s1662 + $0x20] sm:$0xff]
        %1669 = vset.pattern.permute.xlu0 0
        %1670 = vperm.xlu0 %1669, %v1663
        %v1671 = vpop.permute.xlu0 %1670
        %1674 = vset.pattern.permute.xlu0 0
        %1675 = vperm.xlu0 %1674, %v1664
        %v1676 = vpop.permute.xlu0 %1675
        %1679 = vset.pattern.permute.xlu0 0
        %1680 = vperm.xlu0 %1679, %v1665
        %v1681 = vpop.permute.xlu0 %1680
        %1684 = vset.pattern.permute.xlu0 0
        %1685 = vperm.xlu0 %1684, %v1666
        %v1686 = vpop.permute.xlu0 %1685
        %1689 = vset.pattern.permute.xlu0 0
        %1690 = vperm.xlu0 %1689, %v1667
        %v1691 = vpop.permute.xlu0 %1690
        %v1694 = vsel %vm965, %v1657, 0
        %v1697 = vsel %vm965, %v1658, 0
        %v1700 = vsel %vm965, %v1659, 0
        %v1703 = vsel %vm965, %v1660, 0
        %v1706 = vsel %vm965, %v1661, 0
        %1708 = vmatprep.subr.mxu0 0.0
        %1709 = vmatpush1.msra.mxu0 0.0
        %1710 = vmatprep.subr.mxu0 0.0
        %1711 = vmatpush1.msra.mxu0 0.0
        %1712 = vmatprep.subr.mxu0 0.0
        %1713 = vmatpush1.msra.mxu0 0.0
        %1714 = vmatprep.subr.mxu0 0.0
        %1715 = vmatpush1.msra.mxu0 0.0
        %1716 = vmatprep.subr.mxu0 0.0
        %1717 = vmatpush1.msra.mxu0 0.0
        %1718 = vmatprep.subr.mxu0 0.0
        %1719 = vmatpush1.msra.mxu0 0.0
        %1720 = vmatprep.subr.mxu0 0.0
        %1721 = vmatpush1.msra.mxu0 0.0
        %1722 = vmatprep.subr.mxu0 0.0
        %1723 = vmatpush1.msra.mxu0 0.0
        %1724 = vmatprep.subr.mxu0 0.0
        %1725 = vmatpush1.msra.mxu0 0.0
        %1726 = vmatprep.subr.mxu0 0.0
        %1727 = vmatpush1.msra.mxu0 0.0
        %1728 = vmatprep.subr.mxu0 0.0
        %1729 = vmatpush1.msra.mxu0 0.0
        %1730 = vmatprep.subr.mxu0 0.0
        %v1731 = vand.u32 %v1655, 4294901760
        %1732 = vmatpush1.msra.mxu0 %v1731
        %1733 = vmatprep.subr.mxu0 0.0
        %v1734 = vand.u32 %v1654, 4294901760
        %1735 = vmatpush1.msra.mxu0 %v1734
        %1736 = vmatprep.subr.mxu0 0.0
        %v1737 = vand.u32 %v1653, 4294901760
        %1738 = vmatpush1.msra.mxu0 %v1737
        %1739 = vmatprep.subr.mxu0 0.0
        %v1740 = vand.u32 %v1652, 4294901760
        %1741 = vmatpush1.msra.mxu0 %v1740
        %1742 = vmatprep.subr.mxu0 0.0
        %v1743 = vand.u32 %v1651, 4294901760
        %1744 = vmatpush1.msra.mxu0 %v1743
        %1745 = vmatprep.subr.mxu0 0.0
        %1746 = vmatpush2.msra.mxu0 0.0
        %1747 = vmatprep.subr.mxu0 0.0
        %1748 = vmatpush2.msra.mxu0 0.0
        %1749 = vmatprep.subr.mxu0 0.0
        %1750 = vmatpush2.msra.mxu0 0.0
        %1751 = vmatprep.subr.mxu0 0.0
        %1752 = vmatpush2.msra.mxu0 0.0
        %1753 = vmatprep.subr.mxu0 0.0
        %1754 = vmatpush2.msra.mxu0 0.0
        %1755 = vmatprep.subr.mxu0 0.0
        %1756 = vmatpush2.msra.mxu0 0.0
        %1757 = vmatprep.subr.mxu0 0.0
        %1758 = vmatpush2.msra.mxu0 0.0
        %1759 = vmatprep.subr.mxu0 0.0
        %1760 = vmatpush2.msra.mxu0 0.0
        %1761 = vmatprep.subr.mxu0 0.0
        %1762 = vmatpush2.msra.mxu0 0.0
        %1763 = vmatprep.subr.mxu0 0.0
        %1764 = vmatpush2.msra.mxu0 0.0
        %1765 = vmatprep.subr.mxu0 0.0
        %1766 = vmatpush2.msra.mxu0 0.0
        %1767 = vmatprep.subr.mxu0 0.0
        %1768 = vmatpush2.msra.mxu0 0.0
        %1769 = vmatprep.subr.mxu0 0.0
        %1770 = vmatpush2.msra.mxu0 0.0
        %1771 = vmatprep.subr.mxu0 0.0
        %1772 = vmatpush2.msra.mxu0 0.0
        %1773 = vmatprep.subr.mxu0 0.0
        %1774 = vmatpush2.msra.mxu0 0.0
        %1775 = vmatprep.subr.mxu0 0.0
        %1776 = vmatpush2.msra.mxu0 0.0
        %1777 = vmatprep.mubr.f32.mxu0 0.0
        %v1778 = vand.u32 %v1694, 4294901760
        %v1779 = vsub.f32 %v1694, %v1778
        %v1780 = vand.u32 %v1779, 4294901760
        %v1781 = vsub.f32 %v1779, %v1780
        %v1782 = vand.u32 %v1781, 4294901760
        %1783 = vmatmul.mubr.f32.gmra.mxu0 %v1782
        %v1784 = vpop.f32.mrf.mxu0
        %v1785 = vadd.f32 %v1671, %v1784
        %v1786 = vpop.f32.mrf.mxu0
        %1787 = vmatprep.mubr.f32.mxu0 0.0
        %v1788 = vand.u32 %v1697, 4294901760
        %v1789 = vsub.f32 %v1697, %v1788
        %v1790 = vand.u32 %v1789, 4294901760
        %v1791 = vsub.f32 %v1789, %v1790
        %v1792 = vand.u32 %v1791, 4294901760
        %1793 = vmatmul.mubr.f32.gmra.mxu0 %v1792
        %v1794 = vpop.f32.mrf.mxu0
        %v1795 = vadd.f32 %v1676, %v1794
        %v1796 = vpop.f32.mrf.mxu0
        %1797 = vmatprep.mubr.f32.mxu0 0.0
        %v1798 = vand.u32 %v1700, 4294901760
        %v1799 = vsub.f32 %v1700, %v1798
        %v1800 = vand.u32 %v1799, 4294901760
        %v1801 = vsub.f32 %v1799, %v1800
        %v1802 = vand.u32 %v1801, 4294901760
        %1803 = vmatmul.mubr.f32.gmra.mxu0 %v1802
        %v1804 = vpop.f32.mrf.mxu0
        %v1805 = vadd.f32 %v1681, %v1804
        %v1806 = vpop.f32.mrf.mxu0
        %1807 = vmatprep.mubr.f32.mxu0 0.0
        %v1808 = vand.u32 %v1703, 4294901760
        %v1809 = vsub.f32 %v1703, %v1808
        %v1810 = vand.u32 %v1809, 4294901760
        %v1811 = vsub.f32 %v1809, %v1810
        %v1812 = vand.u32 %v1811, 4294901760
        %1813 = vmatmul.mubr.f32.gmra.mxu0 %v1812
        %v1814 = vpop.f32.mrf.mxu0
        %v1815 = vadd.f32 %v1686, %v1814
        %v1816 = vpop.f32.mrf.mxu0
        %1817 = vmatprep.mubr.f32.mxu0 0.0
        %v1818 = vand.u32 %v1706, 4294901760
        %v1819 = vsub.f32 %v1706, %v1818
        %v1820 = vand.u32 %v1819, 4294901760
        %v1821 = vsub.f32 %v1819, %v1820
        %v1822 = vand.u32 %v1821, 4294901760
        %1823 = vmatmul.mubr.f32.gmra.mxu0 %v1822
        %v1824 = vpop.f32.mrf.mxu0
        %v1825 = vadd.f32 %v1691, %v1824
        %v1826 = vpop.f32.mrf.mxu0
        %1827 = vdwg.mxu0
        %1828 = vmatprep.subr.mxu0 0.0
        %1829 = vmatpush1.msra.mxu0 0.0
        %1830 = vmatprep.subr.mxu0 0.0
        %1831 = vmatpush1.msra.mxu0 0.0
        %1832 = vmatprep.subr.mxu0 0.0
        %1833 = vmatpush1.msra.mxu0 0.0
        %1834 = vmatprep.subr.mxu0 0.0
        %1835 = vmatpush1.msra.mxu0 0.0
        %1836 = vmatprep.subr.mxu0 0.0
        %1837 = vmatpush1.msra.mxu0 0.0
        %1838 = vmatprep.subr.mxu0 0.0
        %1839 = vmatpush1.msra.mxu0 0.0
        %1840 = vmatprep.subr.mxu0 0.0
        %1841 = vmatpush1.msra.mxu0 0.0
        %1842 = vmatprep.subr.mxu0 0.0
        %1843 = vmatpush1.msra.mxu0 0.0
        %1844 = vmatprep.subr.mxu0 0.0
        %1845 = vmatpush1.msra.mxu0 0.0
        %1846 = vmatprep.subr.mxu0 0.0
        %1847 = vmatpush1.msra.mxu0 0.0
        %1848 = vmatprep.subr.mxu0 0.0
        %1849 = vmatpush1.msra.mxu0 0.0
        %1850 = vmatprep.subr.mxu0 0.0
        %v1851 = vand.u32 %v1655, 4294901760
        %v1852 = vsub.f32 %v1655, %v1851
        %v1853 = vand.u32 %v1852, 4294901760
        %v1854 = vsub.f32 %v1852, %v1853
        %v1855 = vand.u32 %v1854, 4294901760
        %1856 = vmatpush1.msra.mxu0 %v1855
        %1857 = vmatprep.subr.mxu0 0.0
        %v1858 = vand.u32 %v1654, 4294901760
        %v1859 = vsub.f32 %v1654, %v1858
        %v1860 = vand.u32 %v1859, 4294901760
        %v1861 = vsub.f32 %v1859, %v1860
        %v1862 = vand.u32 %v1861, 4294901760
        %1863 = vmatpush1.msra.mxu0 %v1862
        %1864 = vmatprep.subr.mxu0 0.0
        %v1865 = vand.u32 %v1653, 4294901760
        %v1866 = vsub.f32 %v1653, %v1865
        %v1867 = vand.u32 %v1866, 4294901760
        %v1868 = vsub.f32 %v1866, %v1867
        %v1869 = vand.u32 %v1868, 4294901760
        %1870 = vmatpush1.msra.mxu0 %v1869
        %1871 = vmatprep.subr.mxu0 0.0
        %v1872 = vand.u32 %v1652, 4294901760
        %v1873 = vsub.f32 %v1652, %v1872
        %v1874 = vand.u32 %v1873, 4294901760
        %v1875 = vsub.f32 %v1873, %v1874
        %v1876 = vand.u32 %v1875, 4294901760
        %1877 = vmatpush1.msra.mxu0 %v1876
        %1878 = vmatprep.subr.mxu0 0.0
        %v1879 = vand.u32 %v1651, 4294901760
        %v1880 = vsub.f32 %v1651, %v1879
        %v1881 = vand.u32 %v1880, 4294901760
        %v1882 = vsub.f32 %v1880, %v1881
        %v1883 = vand.u32 %v1882, 4294901760
        %1884 = vmatpush1.msra.mxu0 %v1883
        %1885 = vmatprep.subr.mxu0 0.0
        %1886 = vmatpush2.msra.mxu0 0.0
        %1887 = vmatprep.subr.mxu0 0.0
        %1888 = vmatpush2.msra.mxu0 0.0
        %1889 = vmatprep.subr.mxu0 0.0
        %1890 = vmatpush2.msra.mxu0 0.0
        %1891 = vmatprep.subr.mxu0 0.0
        %1892 = vmatpush2.msra.mxu0 0.0
        %1893 = vmatprep.subr.mxu0 0.0
        %1894 = vmatpush2.msra.mxu0 0.0
        %1895 = vmatprep.subr.mxu0 0.0
        %1896 = vmatpush2.msra.mxu0 0.0
        %1897 = vmatprep.subr.mxu0 0.0
        %1898 = vmatpush2.msra.mxu0 0.0
        %1899 = vmatprep.subr.mxu0 0.0
        %1900 = vmatpush2.msra.mxu0 0.0
        %1901 = vmatprep.subr.mxu0 0.0
        %1902 = vmatpush2.msra.mxu0 0.0
        %1903 = vmatprep.subr.mxu0 0.0
        %1904 = vmatpush2.msra.mxu0 0.0
        %1905 = vmatprep.subr.mxu0 0.0
        %1906 = vmatpush2.msra.mxu0 0.0
        %1907 = vmatprep.subr.mxu0 0.0
        %1908 = vmatpush2.msra.mxu0 0.0
        %1909 = vmatprep.subr.mxu0 0.0
        %1910 = vmatpush2.msra.mxu0 0.0
        %1911 = vmatprep.subr.mxu0 0.0
        %1912 = vmatpush2.msra.mxu0 0.0
        %1913 = vmatprep.subr.mxu0 0.0
        %1914 = vmatpush2.msra.mxu0 0.0
        %1915 = vmatprep.subr.mxu0 0.0
        %1916 = vmatpush2.msra.mxu0 0.0
        %1917 = vmatprep.mubr.f32.mxu0 0.0
        %v1918 = vand.u32 %v1694, 4294901760
        %1919 = vmatmul.mubr.f32.gmra.mxu0 %v1918
        %v1920 = vpop.f32.mrf.mxu0
        %v1921 = vadd.f32 %v1785, %v1920
        %v1922 = vpop.f32.mrf.mxu0
        %1923 = vmatprep.mubr.f32.mxu0 0.0
        %v1924 = vand.u32 %v1697, 4294901760
        %1925 = vmatmul.mubr.f32.gmra.mxu0 %v1924
        %v1926 = vpop.f32.mrf.mxu0
        %v1927 = vadd.f32 %v1795, %v1926
        %v1928 = vpop.f32.mrf.mxu0
        %1929 = vmatprep.mubr.f32.mxu0 0.0
        %v1930 = vand.u32 %v1700, 4294901760
        %1931 = vmatmul.mubr.f32.gmra.mxu0 %v1930
        %v1932 = vpop.f32.mrf.mxu0
        %v1933 = vadd.f32 %v1805, %v1932
        %v1934 = vpop.f32.mrf.mxu0
        %1935 = vmatprep.mubr.f32.mxu0 0.0
        %v1936 = vand.u32 %v1703, 4294901760
        %1937 = vmatmul.mubr.f32.gmra.mxu0 %v1936
        %v1938 = vpop.f32.mrf.mxu0
        %v1939 = vadd.f32 %v1815, %v1938
        %v1940 = vpop.f32.mrf.mxu0
        %1941 = vmatprep.mubr.f32.mxu0 0.0
        %v1942 = vand.u32 %v1706, 4294901760
        %1943 = vmatmul.mubr.f32.gmra.mxu0 %v1942
        %v1944 = vpop.f32.mrf.mxu0
        %v1945 = vadd.f32 %v1825, %v1944
        %v1946 = vpop.f32.mrf.mxu0
        %1947 = vdwg.mxu0
        %1948 = vmatprep.subr.mxu0 0.0
        %1949 = vmatpush1.msra.mxu0 0.0
        %1950 = vmatprep.subr.mxu0 0.0
        %1951 = vmatpush1.msra.mxu0 0.0
        %1952 = vmatprep.subr.mxu0 0.0
        %1953 = vmatpush1.msra.mxu0 0.0
        %1954 = vmatprep.subr.mxu0 0.0
        %1955 = vmatpush1.msra.mxu0 0.0
        %1956 = vmatprep.subr.mxu0 0.0
        %1957 = vmatpush1.msra.mxu0 0.0
        %1958 = vmatprep.subr.mxu0 0.0
        %1959 = vmatpush1.msra.mxu0 0.0
        %1960 = vmatprep.subr.mxu0 0.0
        %1961 = vmatpush1.msra.mxu0 0.0
        %1962 = vmatprep.subr.mxu0 0.0
        %1963 = vmatpush1.msra.mxu0 0.0
        %1964 = vmatprep.subr.mxu0 0.0
        %1965 = vmatpush1.msra.mxu0 0.0
        %1966 = vmatprep.subr.mxu0 0.0
        %1967 = vmatpush1.msra.mxu0 0.0
        %1968 = vmatprep.subr.mxu0 0.0
        %1969 = vmatpush1.msra.mxu0 0.0
        %1970 = vmatprep.subr.mxu0 0.0
        %v1971 = vand.u32 %v1655, 4294901760
        %v1972 = vsub.f32 %v1655, %v1971
        %1973 = vmatpush1.msra.mxu0 %v1972
        %1974 = vmatprep.subr.mxu0 0.0
        %v1975 = vand.u32 %v1654, 4294901760
        %v1976 = vsub.f32 %v1654, %v1975
        %1977 = vmatpush1.msra.mxu0 %v1976
        %1978 = vmatprep.subr.mxu0 0.0
        %v1979 = vand.u32 %v1653, 4294901760
        %v1980 = vsub.f32 %v1653, %v1979
        %1981 = vmatpush1.msra.mxu0 %v1980
        %1982 = vmatprep.subr.mxu0 0.0
        %v1983 = vand.u32 %v1652, 4294901760
        %v1984 = vsub.f32 %v1652, %v1983
        %1985 = vmatpush1.msra.mxu0 %v1984
        %1986 = vmatprep.subr.mxu0 0.0
        %v1987 = vand.u32 %v1651, 4294901760
        %v1988 = vsub.f32 %v1651, %v1987
        %1989 = vmatpush1.msra.mxu0 %v1988
        %1990 = vmatprep.subr.mxu0 0.0
        %1991 = vmatpush2.msra.mxu0 0.0
        %1992 = vmatprep.subr.mxu0 0.0
        %1993 = vmatpush2.msra.mxu0 0.0
        %1994 = vmatprep.subr.mxu0 0.0
        %1995 = vmatpush2.msra.mxu0 0.0
        %1996 = vmatprep.subr.mxu0 0.0
        %1997 = vmatpush2.msra.mxu0 0.0
        %1998 = vmatprep.subr.mxu0 0.0
        %1999 = vmatpush2.msra.mxu0 0.0
        %2000 = vmatprep.subr.mxu0 0.0
        %2001 = vmatpush2.msra.mxu0 0.0
        %2002 = vmatprep.subr.mxu0 0.0
        %2003 = vmatpush2.msra.mxu0 0.0
        %2004 = vmatprep.subr.mxu0 0.0
        %2005 = vmatpush2.msra.mxu0 0.0
        %2006 = vmatprep.subr.mxu0 0.0
        %2007 = vmatpush2.msra.mxu0 0.0
        %2008 = vmatprep.subr.mxu0 0.0
        %2009 = vmatpush2.msra.mxu0 0.0
        %2010 = vmatprep.subr.mxu0 0.0
        %2011 = vmatpush2.msra.mxu0 0.0
        %2012 = vmatprep.subr.mxu0 0.0
        %2013 = vmatpush2.msra.mxu0 0.0
        %2014 = vmatprep.subr.mxu0 0.0
        %2015 = vmatpush2.msra.mxu0 0.0
        %2016 = vmatprep.subr.mxu0 0.0
        %2017 = vmatpush2.msra.mxu0 0.0
        %2018 = vmatprep.subr.mxu0 0.0
        %2019 = vmatpush2.msra.mxu0 0.0
        %2020 = vmatprep.subr.mxu0 0.0
        %2021 = vmatpush2.msra.mxu0 0.0
        %2022 = vmatprep.mubr.f32.mxu0 0.0
        %v2023 = vand.u32 %v1694, 4294901760
        %v2024 = vsub.f32 %v1694, %v2023
        %2025 = vmatmul.mubr.f32.gmra.mxu0 %v2024
        %v2026 = vpop.f32.mrf.mxu0
        %v2027 = vadd.f32 %v1921, %v2026
        %v2028 = vpop.f32.mrf.mxu0
        %2029 = vmatprep.mubr.f32.mxu0 0.0
        %v2030 = vand.u32 %v1697, 4294901760
        %v2031 = vsub.f32 %v1697, %v2030
        %2032 = vmatmul.mubr.f32.gmra.mxu0 %v2031
        %v2033 = vpop.f32.mrf.mxu0
        %v2034 = vadd.f32 %v1927, %v2033
        %v2035 = vpop.f32.mrf.mxu0
        %2036 = vmatprep.mubr.f32.mxu0 0.0
        %v2037 = vand.u32 %v1700, 4294901760
        %v2038 = vsub.f32 %v1700, %v2037
        %2039 = vmatmul.mubr.f32.gmra.mxu0 %v2038
        %v2040 = vpop.f32.mrf.mxu0
        %v2041 = vadd.f32 %v1933, %v2040
        %v2042 = vpop.f32.mrf.mxu0
        %2043 = vmatprep.mubr.f32.mxu0 0.0
        %v2044 = vand.u32 %v1703, 4294901760
        %v2045 = vsub.f32 %v1703, %v2044
        %2046 = vmatmul.mubr.f32.gmra.mxu0 %v2045
        %v2047 = vpop.f32.mrf.mxu0
        %v2048 = vadd.f32 %v1939, %v2047
        %v2049 = vpop.f32.mrf.mxu0
        %2050 = vmatprep.mubr.f32.mxu0 0.0
        %v2051 = vand.u32 %v1706, 4294901760
        %v2052 = vsub.f32 %v1706, %v2051
        %2053 = vmatmul.mubr.f32.gmra.mxu0 %v2052
        %v2054 = vpop.f32.mrf.mxu0
        %v2055 = vadd.f32 %v1945, %v2054
        %v2056 = vpop.f32.mrf.mxu0
        %2057 = vdwg.mxu0
        %2058 = vmatprep.subr.mxu0 0.0
        %2059 = vmatpush1.msra.mxu0 0.0
        %2060 = vmatprep.subr.mxu0 0.0
        %2061 = vmatpush1.msra.mxu0 0.0
        %2062 = vmatprep.subr.mxu0 0.0
        %2063 = vmatpush1.msra.mxu0 0.0
        %2064 = vmatprep.subr.mxu0 0.0
        %2065 = vmatpush1.msra.mxu0 0.0
        %2066 = vmatprep.subr.mxu0 0.0
        %2067 = vmatpush1.msra.mxu0 0.0
        %2068 = vmatprep.subr.mxu0 0.0
        %2069 = vmatpush1.msra.mxu0 0.0
        %2070 = vmatprep.subr.mxu0 0.0
        %2071 = vmatpush1.msra.mxu0 0.0
        %2072 = vmatprep.subr.mxu0 0.0
        %2073 = vmatpush1.msra.mxu0 0.0
        %2074 = vmatprep.subr.mxu0 0.0
        %2075 = vmatpush1.msra.mxu0 0.0
        %2076 = vmatprep.subr.mxu0 0.0
        %2077 = vmatpush1.msra.mxu0 0.0
        %2078 = vmatprep.subr.mxu0 0.0
        %2079 = vmatpush1.msra.mxu0 0.0
        %2080 = vmatprep.subr.mxu0 0.0
        %v2081 = vand.u32 %v1655, 4294901760
        %2082 = vmatpush1.msra.mxu0 %v2081
        %2083 = vmatprep.subr.mxu0 0.0
        %v2084 = vand.u32 %v1654, 4294901760
        %2085 = vmatpush1.msra.mxu0 %v2084
        %2086 = vmatprep.subr.mxu0 0.0
        %v2087 = vand.u32 %v1653, 4294901760
        %2088 = vmatpush1.msra.mxu0 %v2087
        %2089 = vmatprep.subr.mxu0 0.0
        %v2090 = vand.u32 %v1652, 4294901760
        %2091 = vmatpush1.msra.mxu0 %v2090
        %2092 = vmatprep.subr.mxu0 0.0
        %v2093 = vand.u32 %v1651, 4294901760
        %2094 = vmatpush1.msra.mxu0 %v2093
        %2095 = vmatprep.subr.mxu0 0.0
        %2096 = vmatpush2.msra.mxu0 0.0
        %2097 = vmatprep.subr.mxu0 0.0
        %2098 = vmatpush2.msra.mxu0 0.0
        %2099 = vmatprep.subr.mxu0 0.0
        %2100 = vmatpush2.msra.mxu0 0.0
        %2101 = vmatprep.subr.mxu0 0.0
        %2102 = vmatpush2.msra.mxu0 0.0
        %2103 = vmatprep.subr.mxu0 0.0
        %2104 = vmatpush2.msra.mxu0 0.0
        %2105 = vmatprep.subr.mxu0 0.0
        %2106 = vmatpush2.msra.mxu0 0.0
        %2107 = vmatprep.subr.mxu0 0.0
        %2108 = vmatpush2.msra.mxu0 0.0
        %2109 = vmatprep.subr.mxu0 0.0
        %2110 = vmatpush2.msra.mxu0 0.0
        %2111 = vmatprep.subr.mxu0 0.0
        %2112 = vmatpush2.msra.mxu0 0.0
        %2113 = vmatprep.subr.mxu0 0.0
        %2114 = vmatpush2.msra.mxu0 0.0
        %2115 = vmatprep.subr.mxu0 0.0
        %2116 = vmatpush2.msra.mxu0 0.0
        %2117 = vmatprep.subr.mxu0 0.0
        %2118 = vmatpush2.msra.mxu0 0.0
        %2119 = vmatprep.subr.mxu0 0.0
        %2120 = vmatpush2.msra.mxu0 0.0
        %2121 = vmatprep.subr.mxu0 0.0
        %2122 = vmatpush2.msra.mxu0 0.0
        %2123 = vmatprep.subr.mxu0 0.0
        %2124 = vmatpush2.msra.mxu0 0.0
        %2125 = vmatprep.subr.mxu0 0.0
        %2126 = vmatpush2.msra.mxu0 0.0
        %2127 = vmatprep.mubr.f32.mxu0 0.0
        %v2128 = vand.u32 %v1694, 4294901760
        %v2129 = vsub.f32 %v1694, %v2128
        %v2130 = vand.u32 %v2129, 4294901760
        %2131 = vmatmul.mubr.f32.gmra.mxu0 %v2130
        %v2132 = vpop.f32.mrf.mxu0
        %v2133 = vadd.f32 %v2027, %v2132
        %v2134 = vpop.f32.mrf.mxu0
        %2135 = vmatprep.mubr.f32.mxu0 0.0
        %v2136 = vand.u32 %v1697, 4294901760
        %v2137 = vsub.f32 %v1697, %v2136
        %v2138 = vand.u32 %v2137, 4294901760
        %2139 = vmatmul.mubr.f32.gmra.mxu0 %v2138
        %v2140 = vpop.f32.mrf.mxu0
        %v2141 = vadd.f32 %v2034, %v2140
        %v2142 = vpop.f32.mrf.mxu0
        %2143 = vmatprep.mubr.f32.mxu0 0.0
        %v2144 = vand.u32 %v1700, 4294901760
        %v2145 = vsub.f32 %v1700, %v2144
        %v2146 = vand.u32 %v2145, 4294901760
        %2147 = vmatmul.mubr.f32.gmra.mxu0 %v2146
        %v2148 = vpop.f32.mrf.mxu0
        %v2149 = vadd.f32 %v2041, %v2148
        %v2150 = vpop.f32.mrf.mxu0
        %2151 = vmatprep.mubr.f32.mxu0 0.0
        %v2152 = vand.u32 %v1703, 4294901760
        %v2153 = vsub.f32 %v1703, %v2152
        %v2154 = vand.u32 %v2153, 4294901760
        %2155 = vmatmul.mubr.f32.gmra.mxu0 %v2154
        %v2156 = vpop.f32.mrf.mxu0
        %v2157 = vadd.f32 %v2048, %v2156
        %v2158 = vpop.f32.mrf.mxu0
        %2159 = vmatprep.mubr.f32.mxu0 0.0
        %v2160 = vand.u32 %v1706, 4294901760
        %v2161 = vsub.f32 %v1706, %v2160
        %v2162 = vand.u32 %v2161, 4294901760
        %2163 = vmatmul.mubr.f32.gmra.mxu0 %v2162
        %v2164 = vpop.f32.mrf.mxu0
        %v2165 = vadd.f32 %v2055, %v2164
        %v2166 = vpop.f32.mrf.mxu0
        %2167 = vdwg.mxu0
        %2168 = vmatprep.subr.mxu0 0.0
        %2169 = vmatpush1.msra.mxu0 0.0
        %2170 = vmatprep.subr.mxu0 0.0
        %2171 = vmatpush1.msra.mxu0 0.0
        %2172 = vmatprep.subr.mxu0 0.0
        %2173 = vmatpush1.msra.mxu0 0.0
        %2174 = vmatprep.subr.mxu0 0.0
        %2175 = vmatpush1.msra.mxu0 0.0
        %2176 = vmatprep.subr.mxu0 0.0
        %2177 = vmatpush1.msra.mxu0 0.0
        %2178 = vmatprep.subr.mxu0 0.0
        %2179 = vmatpush1.msra.mxu0 0.0
        %2180 = vmatprep.subr.mxu0 0.0
        %2181 = vmatpush1.msra.mxu0 0.0
        %2182 = vmatprep.subr.mxu0 0.0
        %2183 = vmatpush1.msra.mxu0 0.0
        %2184 = vmatprep.subr.mxu0 0.0
        %2185 = vmatpush1.msra.mxu0 0.0
        %2186 = vmatprep.subr.mxu0 0.0
        %2187 = vmatpush1.msra.mxu0 0.0
        %2188 = vmatprep.subr.mxu0 0.0
        %2189 = vmatpush1.msra.mxu0 0.0
        %2190 = vmatprep.subr.mxu0 0.0
        %v2191 = vand.u32 %v1655, 4294901760
        %v2192 = vsub.f32 %v1655, %v2191
        %v2193 = vand.u32 %v2192, 4294901760
        %2194 = vmatpush1.msra.mxu0 %v2193
        %2195 = vmatprep.subr.mxu0 0.0
        %v2196 = vand.u32 %v1654, 4294901760
        %v2197 = vsub.f32 %v1654, %v2196
        %v2198 = vand.u32 %v2197, 4294901760
        %2199 = vmatpush1.msra.mxu0 %v2198
        %2200 = vmatprep.subr.mxu0 0.0
        %v2201 = vand.u32 %v1653, 4294901760
        %v2202 = vsub.f32 %v1653, %v2201
        %v2203 = vand.u32 %v2202, 4294901760
        %2204 = vmatpush1.msra.mxu0 %v2203
        %2205 = vmatprep.subr.mxu0 0.0
        %v2206 = vand.u32 %v1652, 4294901760
        %v2207 = vsub.f32 %v1652, %v2206
        %v2208 = vand.u32 %v2207, 4294901760
        %2209 = vmatpush1.msra.mxu0 %v2208
        %2210 = vmatprep.subr.mxu0 0.0
        %v2211 = vand.u32 %v1651, 4294901760
        %v2212 = vsub.f32 %v1651, %v2211
        %v2213 = vand.u32 %v2212, 4294901760
        %2214 = vmatpush1.msra.mxu0 %v2213
        %2215 = vmatprep.subr.mxu0 0.0
        %2216 = vmatpush2.msra.mxu0 0.0
        %2217 = vmatprep.subr.mxu0 0.0
        %2218 = vmatpush2.msra.mxu0 0.0
        %2219 = vmatprep.subr.mxu0 0.0
        %2220 = vmatpush2.msra.mxu0 0.0
        %2221 = vmatprep.subr.mxu0 0.0
        %2222 = vmatpush2.msra.mxu0 0.0
        %2223 = vmatprep.subr.mxu0 0.0
        %2224 = vmatpush2.msra.mxu0 0.0
        %2225 = vmatprep.subr.mxu0 0.0
        %2226 = vmatpush2.msra.mxu0 0.0
        %2227 = vmatprep.subr.mxu0 0.0
        %2228 = vmatpush2.msra.mxu0 0.0
        %2229 = vmatprep.subr.mxu0 0.0
        %2230 = vmatpush2.msra.mxu0 0.0
        %2231 = vmatprep.subr.mxu0 0.0
        %2232 = vmatpush2.msra.mxu0 0.0
        %2233 = vmatprep.subr.mxu0 0.0
        %2234 = vmatpush2.msra.mxu0 0.0
        %2235 = vmatprep.subr.mxu0 0.0
        %2236 = vmatpush2.msra.mxu0 0.0
        %2237 = vmatprep.subr.mxu0 0.0
        %2238 = vmatpush2.msra.mxu0 0.0
        %2239 = vmatprep.subr.mxu0 0.0
        %2240 = vmatpush2.msra.mxu0 0.0
        %2241 = vmatprep.subr.mxu0 0.0
        %2242 = vmatpush2.msra.mxu0 0.0
        %2243 = vmatprep.subr.mxu0 0.0
        %2244 = vmatpush2.msra.mxu0 0.0
        %2245 = vmatprep.subr.mxu0 0.0
        %2246 = vmatpush2.msra.mxu0 0.0
        %2247 = vmatprep.mubr.f32.mxu0 0.0
        %v2248 = vand.u32 %v1694, 4294901760
        %2249 = vmatmul.mubr.f32.gmra.mxu0 %v2248
        %v2250 = vpop.f32.mrf.mxu0
        %v2251 = vadd.f32 %v2133, %v2250
        %v2252 = vpop.f32.mrf.mxu0
        %2253 = vmatprep.mubr.f32.mxu0 0.0
        %v2254 = vand.u32 %v1697, 4294901760
        %2255 = vmatmul.mubr.f32.gmra.mxu0 %v2254
        %v2256 = vpop.f32.mrf.mxu0
        %v2257 = vadd.f32 %v2141, %v2256
        %v2258 = vpop.f32.mrf.mxu0
        %2259 = vmatprep.mubr.f32.mxu0 0.0
        %v2260 = vand.u32 %v1700, 4294901760
        %2261 = vmatmul.mubr.f32.gmra.mxu0 %v2260
        %v2262 = vpop.f32.mrf.mxu0
        %v2263 = vadd.f32 %v2149, %v2262
        %v2264 = vpop.f32.mrf.mxu0
        %2265 = vmatprep.mubr.f32.mxu0 0.0
        %v2266 = vand.u32 %v1703, 4294901760
        %2267 = vmatmul.mubr.f32.gmra.mxu0 %v2266
        %v2268 = vpop.f32.mrf.mxu0
        %v2269 = vadd.f32 %v2157, %v2268
        %v2270 = vpop.f32.mrf.mxu0
        %2271 = vmatprep.mubr.f32.mxu0 0.0
        %v2272 = vand.u32 %v1706, 4294901760
        %2273 = vmatmul.mubr.f32.gmra.mxu0 %v2272
        %v2274 = vpop.f32.mrf.mxu0
        %v2275 = vadd.f32 %v2165, %v2274
        %v2276 = vpop.f32.mrf.mxu0
        %2277 = vdwg.mxu0
        %2278 = vmatprep.subr.mxu0 0.0
        %2279 = vmatpush1.msra.mxu0 0.0
        %2280 = vmatprep.subr.mxu0 0.0
        %2281 = vmatpush1.msra.mxu0 0.0
        %2282 = vmatprep.subr.mxu0 0.0
        %2283 = vmatpush1.msra.mxu0 0.0
        %2284 = vmatprep.subr.mxu0 0.0
        %2285 = vmatpush1.msra.mxu0 0.0
        %2286 = vmatprep.subr.mxu0 0.0
        %2287 = vmatpush1.msra.mxu0 0.0
        %2288 = vmatprep.subr.mxu0 0.0
        %2289 = vmatpush1.msra.mxu0 0.0
        %2290 = vmatprep.subr.mxu0 0.0
        %2291 = vmatpush1.msra.mxu0 0.0
        %2292 = vmatprep.subr.mxu0 0.0
        %2293 = vmatpush1.msra.mxu0 0.0
        %2294 = vmatprep.subr.mxu0 0.0
        %2295 = vmatpush1.msra.mxu0 0.0
        %2296 = vmatprep.subr.mxu0 0.0
        %2297 = vmatpush1.msra.mxu0 0.0
        %2298 = vmatprep.subr.mxu0 0.0
        %2299 = vmatpush1.msra.mxu0 0.0
        %2300 = vmatprep.subr.mxu0 0.0
        %v2301 = vand.u32 %v1655, 4294901760
        %2302 = vmatpush1.msra.mxu0 %v2301
        %2303 = vmatprep.subr.mxu0 0.0
        %v2304 = vand.u32 %v1654, 4294901760
        %2305 = vmatpush1.msra.mxu0 %v2304
        %2306 = vmatprep.subr.mxu0 0.0
        %v2307 = vand.u32 %v1653, 4294901760
        %2308 = vmatpush1.msra.mxu0 %v2307
        %2309 = vmatprep.subr.mxu0 0.0
        %v2310 = vand.u32 %v1652, 4294901760
        %2311 = vmatpush1.msra.mxu0 %v2310
        %2312 = vmatprep.subr.mxu0 0.0
        %v2313 = vand.u32 %v1651, 4294901760
        %2314 = vmatpush1.msra.mxu0 %v2313
        %2315 = vmatprep.subr.mxu0 0.0
        %2316 = vmatpush2.msra.mxu0 0.0
        %2317 = vmatprep.subr.mxu0 0.0
        %2318 = vmatpush2.msra.mxu0 0.0
        %2319 = vmatprep.subr.mxu0 0.0
        %2320 = vmatpush2.msra.mxu0 0.0
        %2321 = vmatprep.subr.mxu0 0.0
        %2322 = vmatpush2.msra.mxu0 0.0
        %2323 = vmatprep.subr.mxu0 0.0
        %2324 = vmatpush2.msra.mxu0 0.0
        %2325 = vmatprep.subr.mxu0 0.0
        %2326 = vmatpush2.msra.mxu0 0.0
        %2327 = vmatprep.subr.mxu0 0.0
        %2328 = vmatpush2.msra.mxu0 0.0
        %2329 = vmatprep.subr.mxu0 0.0
        %2330 = vmatpush2.msra.mxu0 0.0
        %2331 = vmatprep.subr.mxu0 0.0
        %2332 = vmatpush2.msra.mxu0 0.0
        %2333 = vmatprep.subr.mxu0 0.0
        %2334 = vmatpush2.msra.mxu0 0.0
        %2335 = vmatprep.subr.mxu0 0.0
        %2336 = vmatpush2.msra.mxu0 0.0
        %2337 = vmatprep.subr.mxu0 0.0
        %2338 = vmatpush2.msra.mxu0 0.0
        %2339 = vmatprep.subr.mxu0 0.0
        %2340 = vmatpush2.msra.mxu0 0.0
        %2341 = vmatprep.subr.mxu0 0.0
        %2342 = vmatpush2.msra.mxu0 0.0
        %2343 = vmatprep.subr.mxu0 0.0
        %2344 = vmatpush2.msra.mxu0 0.0
        %2345 = vmatprep.subr.mxu0 0.0
        %2346 = vmatpush2.msra.mxu0 0.0
        %2347 = vmatprep.mubr.f32.mxu0 0.0
        %v2348 = vand.u32 %v1694, 4294901760
        %2349 = vmatmul.mubr.f32.gmra.mxu0 %v2348
        %v2350 = vpop.f32.mrf.mxu0
        %v2351 = vadd.f32 %v2251, %v2350
        %v2352 = vpop.f32.mrf.mxu0
        %2353 = vmatprep.mubr.f32.mxu0 0.0
        %v2354 = vand.u32 %v1697, 4294901760
        %2355 = vmatmul.mubr.f32.gmra.mxu0 %v2354
        %v2356 = vpop.f32.mrf.mxu0
        %v2357 = vadd.f32 %v2257, %v2356
        %v2358 = vpop.f32.mrf.mxu0
        %2359 = vmatprep.mubr.f32.mxu0 0.0
        %v2360 = vand.u32 %v1700, 4294901760
        %2361 = vmatmul.mubr.f32.gmra.mxu0 %v2360
        %v2362 = vpop.f32.mrf.mxu0
        %v2363 = vadd.f32 %v2263, %v2362
        %v2364 = vpop.f32.mrf.mxu0
        %2365 = vmatprep.mubr.f32.mxu0 0.0
        %v2366 = vand.u32 %v1703, 4294901760
        %2367 = vmatmul.mubr.f32.gmra.mxu0 %v2366
        %v2368 = vpop.f32.mrf.mxu0
        %v2369 = vadd.f32 %v2269, %v2368
        %v2370 = vpop.f32.mrf.mxu0
        %2371 = vmatprep.mubr.f32.mxu0 0.0
        %v2372 = vand.u32 %v1706, 4294901760
        %2373 = vmatmul.mubr.f32.gmra.mxu0 %v2372
        %v2374 = vpop.f32.mrf.mxu0
        %v2375 = vadd.f32 %v2275, %v2374
        %v2376 = vpop.f32.mrf.mxu0
        %2377 = vdwg.mxu0
        %v2378 = vtanh.pop %v2351
        %v2379 = vtanh.pop %v2357
        %v2380 = vtanh.pop %v2363
        %v2381 = vtanh.pop %v2369
        %v2382 = vtanh.pop %v2375
        %s2383 = scalar_lea.vmem %s2, 80
        %v2384 = vld [vmem:[%s2383] sm:$0xff]
        %v2385 = vld [vmem:[%s2383 + $0x8] sm:$0xff]
        %v2386 = vld [vmem:[%s2383 + $0x10] sm:$0xff]
        %v2387 = vld [vmem:[%s2383 + $0x18] sm:$0xff]
        %v2388 = vld [vmem:[%s2383 + $0x20] sm:$0xff]
        %s2389 = scalar_lea.vmem %s4, 120
        %v2390 = vld [vmem:[%s2389] sm:$0xff]
        %v2391 = vld [vmem:[%s2389 + $0x8] sm:$0xff]
        %v2392 = vld [vmem:[%s2389 + $0x10] sm:$0xff]
        %v2393 = vld [vmem:[%s2389 + $0x18] sm:$0xff]
        %v2394 = vld [vmem:[%s2389 + $0x20] sm:$0xff]
        %2396 = vset.pattern.permute.xlu0 0
        %2397 = vperm.xlu0 %2396, %v2390
        %v2398 = vpop.permute.xlu0 %2397
        %2401 = vset.pattern.permute.xlu0 0
        %2402 = vperm.xlu0 %2401, %v2391
        %v2403 = vpop.permute.xlu0 %2402
        %2406 = vset.pattern.permute.xlu0 0
        %2407 = vperm.xlu0 %2406, %v2392
        %v2408 = vpop.permute.xlu0 %2407
        %2411 = vset.pattern.permute.xlu0 0
        %2412 = vperm.xlu0 %2411, %v2393
        %v2413 = vpop.permute.xlu0 %2412
        %2416 = vset.pattern.permute.xlu0 0
        %2417 = vperm.xlu0 %2416, %v2394
        %v2418 = vpop.permute.xlu0 %2417
        %v2421 = vsel %vm965, %v2384, 0
        %v2424 = vsel %vm965, %v2385, 0
        %v2427 = vsel %vm965, %v2386, 0
        %v2430 = vsel %vm965, %v2387, 0
        %v2433 = vsel %vm965, %v2388, 0
        %2435 = vmatprep.subr.mxu0 0.0
        %2436 = vmatpush1.msra.mxu0 0.0
        %2437 = vmatprep.subr.mxu0 0.0
        %2438 = vmatpush1.msra.mxu0 0.0
        %2439 = vmatprep.subr.mxu0 0.0
        %2440 = vmatpush1.msra.mxu0 0.0
        %2441 = vmatprep.subr.mxu0 0.0
        %2442 = vmatpush1.msra.mxu0 0.0
        %2443 = vmatprep.subr.mxu0 0.0
        %2444 = vmatpush1.msra.mxu0 0.0
        %2445 = vmatprep.subr.mxu0 0.0
        %2446 = vmatpush1.msra.mxu0 0.0
        %2447 = vmatprep.subr.mxu0 0.0
        %2448 = vmatpush1.msra.mxu0 0.0
        %2449 = vmatprep.subr.mxu0 0.0
        %2450 = vmatpush1.msra.mxu0 0.0
        %2451 = vmatprep.subr.mxu0 0.0
        %2452 = vmatpush1.msra.mxu0 0.0
        %2453 = vmatprep.subr.mxu0 0.0
        %2454 = vmatpush1.msra.mxu0 0.0
        %2455 = vmatprep.subr.mxu0 0.0
        %2456 = vmatpush1.msra.mxu0 0.0
        %2457 = vmatprep.subr.mxu0 0.0
        %v2458 = vand.u32 %v2382, 4294901760
        %2459 = vmatpush1.msra.mxu0 %v2458
        %2460 = vmatprep.subr.mxu0 0.0
        %v2461 = vand.u32 %v2381, 4294901760
        %2462 = vmatpush1.msra.mxu0 %v2461
        %2463 = vmatprep.subr.mxu0 0.0
        %v2464 = vand.u32 %v2380, 4294901760
        %2465 = vmatpush1.msra.mxu0 %v2464
        %2466 = vmatprep.subr.mxu0 0.0
        %v2467 = vand.u32 %v2379, 4294901760
        %2468 = vmatpush1.msra.mxu0 %v2467
        %2469 = vmatprep.subr.mxu0 0.0
        %v2470 = vand.u32 %v2378, 4294901760
        %2471 = vmatpush1.msra.mxu0 %v2470
        %2472 = vmatprep.subr.mxu0 0.0
        %2473 = vmatpush2.msra.mxu0 0.0
        %2474 = vmatprep.subr.mxu0 0.0
        %2475 = vmatpush2.msra.mxu0 0.0
        %2476 = vmatprep.subr.mxu0 0.0
        %2477 = vmatpush2.msra.mxu0 0.0
        %2478 = vmatprep.subr.mxu0 0.0
        %2479 = vmatpush2.msra.mxu0 0.0
        %2480 = vmatprep.subr.mxu0 0.0
        %2481 = vmatpush2.msra.mxu0 0.0
        %2482 = vmatprep.subr.mxu0 0.0
        %2483 = vmatpush2.msra.mxu0 0.0
        %2484 = vmatprep.subr.mxu0 0.0
        %2485 = vmatpush2.msra.mxu0 0.0
        %2486 = vmatprep.subr.mxu0 0.0
        %2487 = vmatpush2.msra.mxu0 0.0
        %2488 = vmatprep.subr.mxu0 0.0
        %2489 = vmatpush2.msra.mxu0 0.0
        %2490 = vmatprep.subr.mxu0 0.0
        %2491 = vmatpush2.msra.mxu0 0.0
        %2492 = vmatprep.subr.mxu0 0.0
        %2493 = vmatpush2.msra.mxu0 0.0
        %2494 = vmatprep.subr.mxu0 0.0
        %2495 = vmatpush2.msra.mxu0 0.0
        %2496 = vmatprep.subr.mxu0 0.0
        %2497 = vmatpush2.msra.mxu0 0.0
        %2498 = vmatprep.subr.mxu0 0.0
        %2499 = vmatpush2.msra.mxu0 0.0
        %2500 = vmatprep.subr.mxu0 0.0
        %2501 = vmatpush2.msra.mxu0 0.0
        %2502 = vmatprep.subr.mxu0 0.0
        %2503 = vmatpush2.msra.mxu0 0.0
        %2504 = vmatprep.mubr.f32.mxu0 0.0
        %v2505 = vand.u32 %v2421, 4294901760
        %v2506 = vsub.f32 %v2421, %v2505
        %v2507 = vand.u32 %v2506, 4294901760
        %v2508 = vsub.f32 %v2506, %v2507
        %v2509 = vand.u32 %v2508, 4294901760
        %2510 = vmatmul.mubr.f32.gmra.mxu0 %v2509
        %v2511 = vpop.f32.mrf.mxu0
        %v2512 = vadd.f32 %v2398, %v2511
        %v2513 = vpop.f32.mrf.mxu0
        %2514 = vmatprep.mubr.f32.mxu0 0.0
        %v2515 = vand.u32 %v2424, 4294901760
        %v2516 = vsub.f32 %v2424, %v2515
        %v2517 = vand.u32 %v2516, 4294901760
        %v2518 = vsub.f32 %v2516, %v2517
        %v2519 = vand.u32 %v2518, 4294901760
        %2520 = vmatmul.mubr.f32.gmra.mxu0 %v2519
        %v2521 = vpop.f32.mrf.mxu0
        %v2522 = vadd.f32 %v2403, %v2521
        %v2523 = vpop.f32.mrf.mxu0
        %2524 = vmatprep.mubr.f32.mxu0 0.0
        %v2525 = vand.u32 %v2427, 4294901760
        %v2526 = vsub.f32 %v2427, %v2525
        %v2527 = vand.u32 %v2526, 4294901760
        %v2528 = vsub.f32 %v2526, %v2527
        %v2529 = vand.u32 %v2528, 4294901760
        %2530 = vmatmul.mubr.f32.gmra.mxu0 %v2529
        %v2531 = vpop.f32.mrf.mxu0
        %v2532 = vadd.f32 %v2408, %v2531
        %v2533 = vpop.f32.mrf.mxu0
        %2534 = vmatprep.mubr.f32.mxu0 0.0
        %v2535 = vand.u32 %v2430, 4294901760
        %v2536 = vsub.f32 %v2430, %v2535
        %v2537 = vand.u32 %v2536, 4294901760
        %v2538 = vsub.f32 %v2536, %v2537
        %v2539 = vand.u32 %v2538, 4294901760
        %2540 = vmatmul.mubr.f32.gmra.mxu0 %v2539
        %v2541 = vpop.f32.mrf.mxu0
        %v2542 = vadd.f32 %v2413, %v2541
        %v2543 = vpop.f32.mrf.mxu0
        %2544 = vmatprep.mubr.f32.mxu0 0.0
        %v2545 = vand.u32 %v2433, 4294901760
        %v2546 = vsub.f32 %v2433, %v2545
        %v2547 = vand.u32 %v2546, 4294901760
        %v2548 = vsub.f32 %v2546, %v2547
        %v2549 = vand.u32 %v2548, 4294901760
        %2550 = vmatmul.mubr.f32.gmra.mxu0 %v2549
        %v2551 = vpop.f32.mrf.mxu0
        %v2552 = vadd.f32 %v2418, %v2551
        %v2553 = vpop.f32.mrf.mxu0
        %2554 = vdwg.mxu0
        %2555 = vmatprep.subr.mxu0 0.0
        %2556 = vmatpush1.msra.mxu0 0.0
        %2557 = vmatprep.subr.mxu0 0.0
        %2558 = vmatpush1.msra.mxu0 0.0
        %2559 = vmatprep.subr.mxu0 0.0
        %2560 = vmatpush1.msra.mxu0 0.0
        %2561 = vmatprep.subr.mxu0 0.0
        %2562 = vmatpush1.msra.mxu0 0.0
        %2563 = vmatprep.subr.mxu0 0.0
        %2564 = vmatpush1.msra.mxu0 0.0
        %2565 = vmatprep.subr.mxu0 0.0
        %2566 = vmatpush1.msra.mxu0 0.0
        %2567 = vmatprep.subr.mxu0 0.0
        %2568 = vmatpush1.msra.mxu0 0.0
        %2569 = vmatprep.subr.mxu0 0.0
        %2570 = vmatpush1.msra.mxu0 0.0
        %2571 = vmatprep.subr.mxu0 0.0
        %2572 = vmatpush1.msra.mxu0 0.0
        %2573 = vmatprep.subr.mxu0 0.0
        %2574 = vmatpush1.msra.mxu0 0.0
        %2575 = vmatprep.subr.mxu0 0.0
        %2576 = vmatpush1.msra.mxu0 0.0
        %2577 = vmatprep.subr.mxu0 0.0
        %v2578 = vand.u32 %v2382, 4294901760
        %v2579 = vsub.f32 %v2382, %v2578
        %v2580 = vand.u32 %v2579, 4294901760
        %v2581 = vsub.f32 %v2579, %v2580
        %v2582 = vand.u32 %v2581, 4294901760
        %2583 = vmatpush1.msra.mxu0 %v2582
        %2584 = vmatprep.subr.mxu0 0.0
        %v2585 = vand.u32 %v2381, 4294901760
        %v2586 = vsub.f32 %v2381, %v2585
        %v2587 = vand.u32 %v2586, 4294901760
        %v2588 = vsub.f32 %v2586, %v2587
        %v2589 = vand.u32 %v2588, 4294901760
        %2590 = vmatpush1.msra.mxu0 %v2589
        %2591 = vmatprep.subr.mxu0 0.0
        %v2592 = vand.u32 %v2380, 4294901760
        %v2593 = vsub.f32 %v2380, %v2592
        %v2594 = vand.u32 %v2593, 4294901760
        %v2595 = vsub.f32 %v2593, %v2594
        %v2596 = vand.u32 %v2595, 4294901760
        %2597 = vmatpush1.msra.mxu0 %v2596
        %2598 = vmatprep.subr.mxu0 0.0
        %v2599 = vand.u32 %v2379, 4294901760
        %v2600 = vsub.f32 %v2379, %v2599
        %v2601 = vand.u32 %v2600, 4294901760
        %v2602 = vsub.f32 %v2600, %v2601
        %v2603 = vand.u32 %v2602, 4294901760
        %2604 = vmatpush1.msra.mxu0 %v2603
        %2605 = vmatprep.subr.mxu0 0.0
        %v2606 = vand.u32 %v2378, 4294901760
        %v2607 = vsub.f32 %v2378, %v2606
        %v2608 = vand.u32 %v2607, 4294901760
        %v2609 = vsub.f32 %v2607, %v2608
        %v2610 = vand.u32 %v2609, 4294901760
        %2611 = vmatpush1.msra.mxu0 %v2610
        %2612 = vmatprep.subr.mxu0 0.0
        %2613 = vmatpush2.msra.mxu0 0.0
        %2614 = vmatprep.subr.mxu0 0.0
        %2615 = vmatpush2.msra.mxu0 0.0
        %2616 = vmatprep.subr.mxu0 0.0
        %2617 = vmatpush2.msra.mxu0 0.0
        %2618 = vmatprep.subr.mxu0 0.0
        %2619 = vmatpush2.msra.mxu0 0.0
        %2620 = vmatprep.subr.mxu0 0.0
        %2621 = vmatpush2.msra.mxu0 0.0
        %2622 = vmatprep.subr.mxu0 0.0
        %2623 = vmatpush2.msra.mxu0 0.0
        %2624 = vmatprep.subr.mxu0 0.0
        %2625 = vmatpush2.msra.mxu0 0.0
        %2626 = vmatprep.subr.mxu0 0.0
        %2627 = vmatpush2.msra.mxu0 0.0
        %2628 = vmatprep.subr.mxu0 0.0
        %2629 = vmatpush2.msra.mxu0 0.0
        %2630 = vmatprep.subr.mxu0 0.0
        %2631 = vmatpush2.msra.mxu0 0.0
        %2632 = vmatprep.subr.mxu0 0.0
        %2633 = vmatpush2.msra.mxu0 0.0
        %2634 = vmatprep.subr.mxu0 0.0
        %2635 = vmatpush2.msra.mxu0 0.0
        %2636 = vmatprep.subr.mxu0 0.0
        %2637 = vmatpush2.msra.mxu0 0.0
        %2638 = vmatprep.subr.mxu0 0.0
        %2639 = vmatpush2.msra.mxu0 0.0
        %2640 = vmatprep.subr.mxu0 0.0
        %2641 = vmatpush2.msra.mxu0 0.0
        %2642 = vmatprep.subr.mxu0 0.0
        %2643 = vmatpush2.msra.mxu0 0.0
        %2644 = vmatprep.mubr.f32.mxu0 0.0
        %v2645 = vand.u32 %v2421, 4294901760
        %2646 = vmatmul.mubr.f32.gmra.mxu0 %v2645
        %v2647 = vpop.f32.mrf.mxu0
        %v2648 = vadd.f32 %v2512, %v2647
        %v2649 = vpop.f32.mrf.mxu0
        %2650 = vmatprep.mubr.f32.mxu0 0.0
        %v2651 = vand.u32 %v2424, 4294901760
        %2652 = vmatmul.mubr.f32.gmra.mxu0 %v2651
        %v2653 = vpop.f32.mrf.mxu0
        %v2654 = vadd.f32 %v2522, %v2653
        %v2655 = vpop.f32.mrf.mxu0
        %2656 = vmatprep.mubr.f32.mxu0 0.0
        %v2657 = vand.u32 %v2427, 4294901760
        %2658 = vmatmul.mubr.f32.gmra.mxu0 %v2657
        %v2659 = vpop.f32.mrf.mxu0
        %v2660 = vadd.f32 %v2532, %v2659
        %v2661 = vpop.f32.mrf.mxu0
        %2662 = vmatprep.mubr.f32.mxu0 0.0
        %v2663 = vand.u32 %v2430, 4294901760
        %2664 = vmatmul.mubr.f32.gmra.mxu0 %v2663
        %v2665 = vpop.f32.mrf.mxu0
        %v2666 = vadd.f32 %v2542, %v2665
        %v2667 = vpop.f32.mrf.mxu0
        %2668 = vmatprep.mubr.f32.mxu0 0.0
        %v2669 = vand.u32 %v2433, 4294901760
        %2670 = vmatmul.mubr.f32.gmra.mxu0 %v2669
        %v2671 = vpop.f32.mrf.mxu0
        %v2672 = vadd.f32 %v2552, %v2671
        %v2673 = vpop.f32.mrf.mxu0
        %2674 = vdwg.mxu0
        %2675 = vmatprep.subr.mxu0 0.0
        %2676 = vmatpush1.msra.mxu0 0.0
        %2677 = vmatprep.subr.mxu0 0.0
        %2678 = vmatpush1.msra.mxu0 0.0
        %2679 = vmatprep.subr.mxu0 0.0
        %2680 = vmatpush1.msra.mxu0 0.0
        %2681 = vmatprep.subr.mxu0 0.0
        %2682 = vmatpush1.msra.mxu0 0.0
        %2683 = vmatprep.subr.mxu0 0.0
        %2684 = vmatpush1.msra.mxu0 0.0
        %2685 = vmatprep.subr.mxu0 0.0
        %2686 = vmatpush1.msra.mxu0 0.0
        %2687 = vmatprep.subr.mxu0 0.0
        %2688 = vmatpush1.msra.mxu0 0.0
        %2689 = vmatprep.subr.mxu0 0.0
        %2690 = vmatpush1.msra.mxu0 0.0
        %2691 = vmatprep.subr.mxu0 0.0
        %2692 = vmatpush1.msra.mxu0 0.0
        %2693 = vmatprep.subr.mxu0 0.0
        %2694 = vmatpush1.msra.mxu0 0.0
        %2695 = vmatprep.subr.mxu0 0.0
        %2696 = vmatpush1.msra.mxu0 0.0
        %2697 = vmatprep.subr.mxu0 0.0
        %v2698 = vand.u32 %v2382, 4294901760
        %v2699 = vsub.f32 %v2382, %v2698
        %2700 = vmatpush1.msra.mxu0 %v2699
        %2701 = vmatprep.subr.mxu0 0.0
        %v2702 = vand.u32 %v2381, 4294901760
        %v2703 = vsub.f32 %v2381, %v2702
        %2704 = vmatpush1.msra.mxu0 %v2703
        %2705 = vmatprep.subr.mxu0 0.0
        %v2706 = vand.u32 %v2380, 4294901760
        %v2707 = vsub.f32 %v2380, %v2706
        %2708 = vmatpush1.msra.mxu0 %v2707
        %2709 = vmatprep.subr.mxu0 0.0
        %v2710 = vand.u32 %v2379, 4294901760
        %v2711 = vsub.f32 %v2379, %v2710
        %2712 = vmatpush1.msra.mxu0 %v2711
        %2713 = vmatprep.subr.mxu0 0.0
        %v2714 = vand.u32 %v2378, 4294901760
        %v2715 = vsub.f32 %v2378, %v2714
        %2716 = vmatpush1.msra.mxu0 %v2715
        %2717 = vmatprep.subr.mxu0 0.0
        %2718 = vmatpush2.msra.mxu0 0.0
        %2719 = vmatprep.subr.mxu0 0.0
        %2720 = vmatpush2.msra.mxu0 0.0
        %2721 = vmatprep.subr.mxu0 0.0
        %2722 = vmatpush2.msra.mxu0 0.0
        %2723 = vmatprep.subr.mxu0 0.0
        %2724 = vmatpush2.msra.mxu0 0.0
        %2725 = vmatprep.subr.mxu0 0.0
        %2726 = vmatpush2.msra.mxu0 0.0
        %2727 = vmatprep.subr.mxu0 0.0
        %2728 = vmatpush2.msra.mxu0 0.0
        %2729 = vmatprep.subr.mxu0 0.0
        %2730 = vmatpush2.msra.mxu0 0.0
        %2731 = vmatprep.subr.mxu0 0.0
        %2732 = vmatpush2.msra.mxu0 0.0
        %2733 = vmatprep.subr.mxu0 0.0
        %2734 = vmatpush2.msra.mxu0 0.0
        %2735 = vmatprep.subr.mxu0 0.0
        %2736 = vmatpush2.msra.mxu0 0.0
        %2737 = vmatprep.subr.mxu0 0.0
        %2738 = vmatpush2.msra.mxu0 0.0
        %2739 = vmatprep.subr.mxu0 0.0
        %2740 = vmatpush2.msra.mxu0 0.0
        %2741 = vmatprep.subr.mxu0 0.0
        %2742 = vmatpush2.msra.mxu0 0.0
        %2743 = vmatprep.subr.mxu0 0.0
        %2744 = vmatpush2.msra.mxu0 0.0
        %2745 = vmatprep.subr.mxu0 0.0
        %2746 = vmatpush2.msra.mxu0 0.0
        %2747 = vmatprep.subr.mxu0 0.0
        %2748 = vmatpush2.msra.mxu0 0.0
        %2749 = vmatprep.mubr.f32.mxu0 0.0
        %v2750 = vand.u32 %v2421, 4294901760
        %v2751 = vsub.f32 %v2421, %v2750
        %2752 = vmatmul.mubr.f32.gmra.mxu0 %v2751
        %v2753 = vpop.f32.mrf.mxu0
        %v2754 = vadd.f32 %v2648, %v2753
        %v2755 = vpop.f32.mrf.mxu0
        %2756 = vmatprep.mubr.f32.mxu0 0.0
        %v2757 = vand.u32 %v2424, 4294901760
        %v2758 = vsub.f32 %v2424, %v2757
        %2759 = vmatmul.mubr.f32.gmra.mxu0 %v2758
        %v2760 = vpop.f32.mrf.mxu0
        %v2761 = vadd.f32 %v2654, %v2760
        %v2762 = vpop.f32.mrf.mxu0
        %2763 = vmatprep.mubr.f32.mxu0 0.0
        %v2764 = vand.u32 %v2427, 4294901760
        %v2765 = vsub.f32 %v2427, %v2764
        %2766 = vmatmul.mubr.f32.gmra.mxu0 %v2765
        %v2767 = vpop.f32.mrf.mxu0
        %v2768 = vadd.f32 %v2660, %v2767
        %v2769 = vpop.f32.mrf.mxu0
        %2770 = vmatprep.mubr.f32.mxu0 0.0
        %v2771 = vand.u32 %v2430, 4294901760
        %v2772 = vsub.f32 %v2430, %v2771
        %2773 = vmatmul.mubr.f32.gmra.mxu0 %v2772
        %v2774 = vpop.f32.mrf.mxu0
        %v2775 = vadd.f32 %v2666, %v2774
        %v2776 = vpop.f32.mrf.mxu0
        %2777 = vmatprep.mubr.f32.mxu0 0.0
        %v2778 = vand.u32 %v2433, 4294901760
        %v2779 = vsub.f32 %v2433, %v2778
        %2780 = vmatmul.mubr.f32.gmra.mxu0 %v2779
        %v2781 = vpop.f32.mrf.mxu0
        %v2782 = vadd.f32 %v2672, %v2781
        %v2783 = vpop.f32.mrf.mxu0
        %2784 = vdwg.mxu0
        %2785 = vmatprep.subr.mxu0 0.0
        %2786 = vmatpush1.msra.mxu0 0.0
        %2787 = vmatprep.subr.mxu0 0.0
        %2788 = vmatpush1.msra.mxu0 0.0
        %2789 = vmatprep.subr.mxu0 0.0
        %2790 = vmatpush1.msra.mxu0 0.0
        %2791 = vmatprep.subr.mxu0 0.0
        %2792 = vmatpush1.msra.mxu0 0.0
        %2793 = vmatprep.subr.mxu0 0.0
        %2794 = vmatpush1.msra.mxu0 0.0
        %2795 = vmatprep.subr.mxu0 0.0
        %2796 = vmatpush1.msra.mxu0 0.0
        %2797 = vmatprep.subr.mxu0 0.0
        %2798 = vmatpush1.msra.mxu0 0.0
        %2799 = vmatprep.subr.mxu0 0.0
        %2800 = vmatpush1.msra.mxu0 0.0
        %2801 = vmatprep.subr.mxu0 0.0
        %2802 = vmatpush1.msra.mxu0 0.0
        %2803 = vmatprep.subr.mxu0 0.0
        %2804 = vmatpush1.msra.mxu0 0.0
        %2805 = vmatprep.subr.mxu0 0.0
        %2806 = vmatpush1.msra.mxu0 0.0
        %2807 = vmatprep.subr.mxu0 0.0
        %v2808 = vand.u32 %v2382, 4294901760
        %2809 = vmatpush1.msra.mxu0 %v2808
        %2810 = vmatprep.subr.mxu0 0.0
        %v2811 = vand.u32 %v2381, 4294901760
        %2812 = vmatpush1.msra.mxu0 %v2811
        %2813 = vmatprep.subr.mxu0 0.0
        %v2814 = vand.u32 %v2380, 4294901760
        %2815 = vmatpush1.msra.mxu0 %v2814
        %2816 = vmatprep.subr.mxu0 0.0
        %v2817 = vand.u32 %v2379, 4294901760
        %2818 = vmatpush1.msra.mxu0 %v2817
        %2819 = vmatprep.subr.mxu0 0.0
        %v2820 = vand.u32 %v2378, 4294901760
        %2821 = vmatpush1.msra.mxu0 %v2820
        %2822 = vmatprep.subr.mxu0 0.0
        %2823 = vmatpush2.msra.mxu0 0.0
        %2824 = vmatprep.subr.mxu0 0.0
        %2825 = vmatpush2.msra.mxu0 0.0
        %2826 = vmatprep.subr.mxu0 0.0
        %2827 = vmatpush2.msra.mxu0 0.0
        %2828 = vmatprep.subr.mxu0 0.0
        %2829 = vmatpush2.msra.mxu0 0.0
        %2830 = vmatprep.subr.mxu0 0.0
        %2831 = vmatpush2.msra.mxu0 0.0
        %2832 = vmatprep.subr.mxu0 0.0
        %2833 = vmatpush2.msra.mxu0 0.0
        %2834 = vmatprep.subr.mxu0 0.0
        %2835 = vmatpush2.msra.mxu0 0.0
        %2836 = vmatprep.subr.mxu0 0.0
        %2837 = vmatpush2.msra.mxu0 0.0
        %2838 = vmatprep.subr.mxu0 0.0
        %2839 = vmatpush2.msra.mxu0 0.0
        %2840 = vmatprep.subr.mxu0 0.0
        %2841 = vmatpush2.msra.mxu0 0.0
        %2842 = vmatprep.subr.mxu0 0.0
        %2843 = vmatpush2.msra.mxu0 0.0
        %2844 = vmatprep.subr.mxu0 0.0
        %2845 = vmatpush2.msra.mxu0 0.0
        %2846 = vmatprep.subr.mxu0 0.0
        %2847 = vmatpush2.msra.mxu0 0.0
        %2848 = vmatprep.subr.mxu0 0.0
        %2849 = vmatpush2.msra.mxu0 0.0
        %2850 = vmatprep.subr.mxu0 0.0
        %2851 = vmatpush2.msra.mxu0 0.0
        %2852 = vmatprep.subr.mxu0 0.0
        %2853 = vmatpush2.msra.mxu0 0.0
        %2854 = vmatprep.mubr.f32.mxu0 0.0
        %v2855 = vand.u32 %v2421, 4294901760
        %v2856 = vsub.f32 %v2421, %v2855
        %v2857 = vand.u32 %v2856, 4294901760
        %2858 = vmatmul.mubr.f32.gmra.mxu0 %v2857
        %v2859 = vpop.f32.mrf.mxu0
        %v2860 = vadd.f32 %v2754, %v2859
        %v2861 = vpop.f32.mrf.mxu0
        %2862 = vmatprep.mubr.f32.mxu0 0.0
        %v2863 = vand.u32 %v2424, 4294901760
        %v2864 = vsub.f32 %v2424, %v2863
        %v2865 = vand.u32 %v2864, 4294901760
        %2866 = vmatmul.mubr.f32.gmra.mxu0 %v2865
        %v2867 = vpop.f32.mrf.mxu0
        %v2868 = vadd.f32 %v2761, %v2867
        %v2869 = vpop.f32.mrf.mxu0
        %2870 = vmatprep.mubr.f32.mxu0 0.0
        %v2871 = vand.u32 %v2427, 4294901760
        %v2872 = vsub.f32 %v2427, %v2871
        %v2873 = vand.u32 %v2872, 4294901760
        %2874 = vmatmul.mubr.f32.gmra.mxu0 %v2873
        %v2875 = vpop.f32.mrf.mxu0
        %v2876 = vadd.f32 %v2768, %v2875
        %v2877 = vpop.f32.mrf.mxu0
        %2878 = vmatprep.mubr.f32.mxu0 0.0
        %v2879 = vand.u32 %v2430, 4294901760
        %v2880 = vsub.f32 %v2430, %v2879
        %v2881 = vand.u32 %v2880, 4294901760
        %2882 = vmatmul.mubr.f32.gmra.mxu0 %v2881
        %v2883 = vpop.f32.mrf.mxu0
        %v2884 = vadd.f32 %v2775, %v2883
        %v2885 = vpop.f32.mrf.mxu0
        %2886 = vmatprep.mubr.f32.mxu0 0.0
        %v2887 = vand.u32 %v2433, 4294901760
        %v2888 = vsub.f32 %v2433, %v2887
        %v2889 = vand.u32 %v2888, 4294901760
        %2890 = vmatmul.mubr.f32.gmra.mxu0 %v2889
        %v2891 = vpop.f32.mrf.mxu0
        %v2892 = vadd.f32 %v2782, %v2891
        %v2893 = vpop.f32.mrf.mxu0
        %2894 = vdwg.mxu0
        %2895 = vmatprep.subr.mxu0 0.0
        %2896 = vmatpush1.msra.mxu0 0.0
        %2897 = vmatprep.subr.mxu0 0.0
        %2898 = vmatpush1.msra.mxu0 0.0
        %2899 = vmatprep.subr.mxu0 0.0
        %2900 = vmatpush1.msra.mxu0 0.0
        %2901 = vmatprep.subr.mxu0 0.0
        %2902 = vmatpush1.msra.mxu0 0.0
        %2903 = vmatprep.subr.mxu0 0.0
        %2904 = vmatpush1.msra.mxu0 0.0
        %2905 = vmatprep.subr.mxu0 0.0
        %2906 = vmatpush1.msra.mxu0 0.0
        %2907 = vmatprep.subr.mxu0 0.0
        %2908 = vmatpush1.msra.mxu0 0.0
        %2909 = vmatprep.subr.mxu0 0.0
        %2910 = vmatpush1.msra.mxu0 0.0
        %2911 = vmatprep.subr.mxu0 0.0
        %2912 = vmatpush1.msra.mxu0 0.0
        %2913 = vmatprep.subr.mxu0 0.0
        %2914 = vmatpush1.msra.mxu0 0.0
        %2915 = vmatprep.subr.mxu0 0.0
        %2916 = vmatpush1.msra.mxu0 0.0
        %2917 = vmatprep.subr.mxu0 0.0
        %v2918 = vand.u32 %v2382, 4294901760
        %v2919 = vsub.f32 %v2382, %v2918
        %v2920 = vand.u32 %v2919, 4294901760
        %2921 = vmatpush1.msra.mxu0 %v2920
        %2922 = vmatprep.subr.mxu0 0.0
        %v2923 = vand.u32 %v2381, 4294901760
        %v2924 = vsub.f32 %v2381, %v2923
        %v2925 = vand.u32 %v2924, 4294901760
        %2926 = vmatpush1.msra.mxu0 %v2925
        %2927 = vmatprep.subr.mxu0 0.0
        %v2928 = vand.u32 %v2380, 4294901760
        %v2929 = vsub.f32 %v2380, %v2928
        %v2930 = vand.u32 %v2929, 4294901760
        %2931 = vmatpush1.msra.mxu0 %v2930
        %2932 = vmatprep.subr.mxu0 0.0
        %v2933 = vand.u32 %v2379, 4294901760
        %v2934 = vsub.f32 %v2379, %v2933
        %v2935 = vand.u32 %v2934, 4294901760
        %2936 = vmatpush1.msra.mxu0 %v2935
        %2937 = vmatprep.subr.mxu0 0.0
        %v2938 = vand.u32 %v2378, 4294901760
        %v2939 = vsub.f32 %v2378, %v2938
        %v2940 = vand.u32 %v2939, 4294901760
        %2941 = vmatpush1.msra.mxu0 %v2940
        %2942 = vmatprep.subr.mxu0 0.0
        %2943 = vmatpush2.msra.mxu0 0.0
        %2944 = vmatprep.subr.mxu0 0.0
        %2945 = vmatpush2.msra.mxu0 0.0
        %2946 = vmatprep.subr.mxu0 0.0
        %2947 = vmatpush2.msra.mxu0 0.0
        %2948 = vmatprep.subr.mxu0 0.0
        %2949 = vmatpush2.msra.mxu0 0.0
        %2950 = vmatprep.subr.mxu0 0.0
        %2951 = vmatpush2.msra.mxu0 0.0
        %2952 = vmatprep.subr.mxu0 0.0
        %2953 = vmatpush2.msra.mxu0 0.0
        %2954 = vmatprep.subr.mxu0 0.0
        %2955 = vmatpush2.msra.mxu0 0.0
        %2956 = vmatprep.subr.mxu0 0.0
        %2957 = vmatpush2.msra.mxu0 0.0
        %2958 = vmatprep.subr.mxu0 0.0
        %2959 = vmatpush2.msra.mxu0 0.0
        %2960 = vmatprep.subr.mxu0 0.0
        %2961 = vmatpush2.msra.mxu0 0.0
        %2962 = vmatprep.subr.mxu0 0.0
        %2963 = vmatpush2.msra.mxu0 0.0
        %2964 = vmatprep.subr.mxu0 0.0
        %2965 = vmatpush2.msra.mxu0 0.0
        %2966 = vmatprep.subr.mxu0 0.0
        %2967 = vmatpush2.msra.mxu0 0.0
        %2968 = vmatprep.subr.mxu0 0.0
        %2969 = vmatpush2.msra.mxu0 0.0
        %2970 = vmatprep.subr.mxu0 0.0
        %2971 = vmatpush2.msra.mxu0 0.0
        %2972 = vmatprep.subr.mxu0 0.0
        %2973 = vmatpush2.msra.mxu0 0.0
        %2974 = vmatprep.mubr.f32.mxu0 0.0
        %v2975 = vand.u32 %v2421, 4294901760
        %2976 = vmatmul.mubr.f32.gmra.mxu0 %v2975
        %v2977 = vpop.f32.mrf.mxu0
        %v2978 = vadd.f32 %v2860, %v2977
        %v2979 = vpop.f32.mrf.mxu0
        %2980 = vmatprep.mubr.f32.mxu0 0.0
        %v2981 = vand.u32 %v2424, 4294901760
        %2982 = vmatmul.mubr.f32.gmra.mxu0 %v2981
        %v2983 = vpop.f32.mrf.mxu0
        %v2984 = vadd.f32 %v2868, %v2983
        %v2985 = vpop.f32.mrf.mxu0
        %2986 = vmatprep.mubr.f32.mxu0 0.0
        %v2987 = vand.u32 %v2427, 4294901760
        %2988 = vmatmul.mubr.f32.gmra.mxu0 %v2987
        %v2989 = vpop.f32.mrf.mxu0
        %v2990 = vadd.f32 %v2876, %v2989
        %v2991 = vpop.f32.mrf.mxu0
        %2992 = vmatprep.mubr.f32.mxu0 0.0
        %v2993 = vand.u32 %v2430, 4294901760
        %2994 = vmatmul.mubr.f32.gmra.mxu0 %v2993
        %v2995 = vpop.f32.mrf.mxu0
        %v2996 = vadd.f32 %v2884, %v2995
        %v2997 = vpop.f32.mrf.mxu0
        %2998 = vmatprep.mubr.f32.mxu0 0.0
        %v2999 = vand.u32 %v2433, 4294901760
        %3000 = vmatmul.mubr.f32.gmra.mxu0 %v2999
        %v3001 = vpop.f32.mrf.mxu0
        %v3002 = vadd.f32 %v2892, %v3001
        %v3003 = vpop.f32.mrf.mxu0
        %3004 = vdwg.mxu0
        %3005 = vmatprep.subr.mxu0 0.0
        %3006 = vmatpush1.msra.mxu0 0.0
        %3007 = vmatprep.subr.mxu0 0.0
        %3008 = vmatpush1.msra.mxu0 0.0
        %3009 = vmatprep.subr.mxu0 0.0
        %3010 = vmatpush1.msra.mxu0 0.0
        %3011 = vmatprep.subr.mxu0 0.0
        %3012 = vmatpush1.msra.mxu0 0.0
        %3013 = vmatprep.subr.mxu0 0.0
        %3014 = vmatpush1.msra.mxu0 0.0
        %3015 = vmatprep.subr.mxu0 0.0
        %3016 = vmatpush1.msra.mxu0 0.0
        %3017 = vmatprep.subr.mxu0 0.0
        %3018 = vmatpush1.msra.mxu0 0.0
        %3019 = vmatprep.subr.mxu0 0.0
        %3020 = vmatpush1.msra.mxu0 0.0
        %3021 = vmatprep.subr.mxu0 0.0
        %3022 = vmatpush1.msra.mxu0 0.0
        %3023 = vmatprep.subr.mxu0 0.0
        %3024 = vmatpush1.msra.mxu0 0.0
        %3025 = vmatprep.subr.mxu0 0.0
        %3026 = vmatpush1.msra.mxu0 0.0
        %3027 = vmatprep.subr.mxu0 0.0
        %v3028 = vand.u32 %v2382, 4294901760
        %3029 = vmatpush1.msra.mxu0 %v3028
        %3030 = vmatprep.subr.mxu0 0.0
        %v3031 = vand.u32 %v2381, 4294901760
        %3032 = vmatpush1.msra.mxu0 %v3031
        %3033 = vmatprep.subr.mxu0 0.0
        %v3034 = vand.u32 %v2380, 4294901760
        %3035 = vmatpush1.msra.mxu0 %v3034
        %3036 = vmatprep.subr.mxu0 0.0
        %v3037 = vand.u32 %v2379, 4294901760
        %3038 = vmatpush1.msra.mxu0 %v3037
        %3039 = vmatprep.subr.mxu0 0.0
        %v3040 = vand.u32 %v2378, 4294901760
        %3041 = vmatpush1.msra.mxu0 %v3040
        %3042 = vmatprep.subr.mxu0 0.0
        %3043 = vmatpush2.msra.mxu0 0.0
        %3044 = vmatprep.subr.mxu0 0.0
        %3045 = vmatpush2.msra.mxu0 0.0
        %3046 = vmatprep.subr.mxu0 0.0
        %3047 = vmatpush2.msra.mxu0 0.0
        %3048 = vmatprep.subr.mxu0 0.0
        %3049 = vmatpush2.msra.mxu0 0.0
        %3050 = vmatprep.subr.mxu0 0.0
        %3051 = vmatpush2.msra.mxu0 0.0
        %3052 = vmatprep.subr.mxu0 0.0
        %3053 = vmatpush2.msra.mxu0 0.0
        %3054 = vmatprep.subr.mxu0 0.0
        %3055 = vmatpush2.msra.mxu0 0.0
        %3056 = vmatprep.subr.mxu0 0.0
        %3057 = vmatpush2.msra.mxu0 0.0
        %3058 = vmatprep.subr.mxu0 0.0
        %3059 = vmatpush2.msra.mxu0 0.0
        %3060 = vmatprep.subr.mxu0 0.0
        %3061 = vmatpush2.msra.mxu0 0.0
        %3062 = vmatprep.subr.mxu0 0.0
        %3063 = vmatpush2.msra.mxu0 0.0
        %3064 = vmatprep.subr.mxu0 0.0
        %3065 = vmatpush2.msra.mxu0 0.0
        %3066 = vmatprep.subr.mxu0 0.0
        %3067 = vmatpush2.msra.mxu0 0.0
        %3068 = vmatprep.subr.mxu0 0.0
        %3069 = vmatpush2.msra.mxu0 0.0
        %3070 = vmatprep.subr.mxu0 0.0
        %3071 = vmatpush2.msra.mxu0 0.0
        %3072 = vmatprep.subr.mxu0 0.0
        %3073 = vmatpush2.msra.mxu0 0.0
        %3074 = vmatprep.mubr.f32.mxu0 0.0
        %v3075 = vand.u32 %v2421, 4294901760
        %3076 = vmatmul.mubr.f32.gmra.mxu0 %v3075
        %v3077 = vpop.f32.mrf.mxu0
        %v3078 = vadd.f32 %v2978, %v3077
        %v3079 = vpop.f32.mrf.mxu0
        %3080 = vmatprep.mubr.f32.mxu0 0.0
        %v3081 = vand.u32 %v2424, 4294901760
        %3082 = vmatmul.mubr.f32.gmra.mxu0 %v3081
        %v3083 = vpop.f32.mrf.mxu0
        %v3084 = vadd.f32 %v2984, %v3083
        %v3085 = vpop.f32.mrf.mxu0
        %3086 = vmatprep.mubr.f32.mxu0 0.0
        %v3087 = vand.u32 %v2427, 4294901760
        %3088 = vmatmul.mubr.f32.gmra.mxu0 %v3087
        %v3089 = vpop.f32.mrf.mxu0
        %v3090 = vadd.f32 %v2990, %v3089
        %v3091 = vpop.f32.mrf.mxu0
        %3092 = vmatprep.mubr.f32.mxu0 0.0
        %v3093 = vand.u32 %v2430, 4294901760
        %3094 = vmatmul.mubr.f32.gmra.mxu0 %v3093
        %v3095 = vpop.f32.mrf.mxu0
        %v3096 = vadd.f32 %v2996, %v3095
        %v3097 = vpop.f32.mrf.mxu0
        %3098 = vmatprep.mubr.f32.mxu0 0.0
        %v3099 = vand.u32 %v2433, 4294901760
        %3100 = vmatmul.mubr.f32.gmra.mxu0 %v3099
        %v3101 = vpop.f32.mrf.mxu0
        %v3102 = vadd.f32 %v3002, %v3101
        %v3103 = vpop.f32.mrf.mxu0
        %3104 = vdwg.mxu0
        %v3105 = vtanh.pop %v3078
        %v3106 = vtanh.pop %v3084
        %v3107 = vtanh.pop %v3090
        %v3108 = vtanh.pop %v3096
        %v3109 = vtanh.pop %v3102
        %s3110 = scalar_lea.vmem %s2, 120
        %v3111 = vld [vmem:[%s3110] sm:$0xff]
        %v3112 = vld [vmem:[%s3110 + $0x8] sm:$0xff]
        %v3113 = vld [vmem:[%s3110 + $0x10] sm:$0xff]
        %v3114 = vld [vmem:[%s3110 + $0x18] sm:$0xff]
        %v3115 = vld [vmem:[%s3110 + $0x20] sm:$0xff]
        %s3116 = scalar_lea.vmem %s4, 160
        %v3117 = vld [vmem:[%s3116] sm:$0xff]
        %v3118 = vld [vmem:[%s3116 + $0x8] sm:$0xff]
        %v3119 = vld [vmem:[%s3116 + $0x10] sm:$0xff]
        %v3120 = vld [vmem:[%s3116 + $0x18] sm:$0xff]
        %v3121 = vld [vmem:[%s3116 + $0x20] sm:$0xff]
        %3123 = vset.pattern.permute.xlu0 0
        %3124 = vperm.xlu0 %3123, %v3117
        %v3125 = vpop.permute.xlu0 %3124
        %3128 = vset.pattern.permute.xlu0 0
        %3129 = vperm.xlu0 %3128, %v3118
        %v3130 = vpop.permute.xlu0 %3129
        %3133 = vset.pattern.permute.xlu0 0
        %3134 = vperm.xlu0 %3133, %v3119
        %v3135 = vpop.permute.xlu0 %3134
        %3138 = vset.pattern.permute.xlu0 0
        %3139 = vperm.xlu0 %3138, %v3120
        %v3140 = vpop.permute.xlu0 %3139
        %3143 = vset.pattern.permute.xlu0 0
        %3144 = vperm.xlu0 %3143, %v3121
        %v3145 = vpop.permute.xlu0 %3144
        %v3148 = vsel %vm965, %v3111, 0
        %v3151 = vsel %vm965, %v3112, 0
        %v3154 = vsel %vm965, %v3113, 0
        %v3157 = vsel %vm965, %v3114, 0
        %v3160 = vsel %vm965, %v3115, 0
        %3162 = vmatprep.subr.mxu0 0.0
        %3163 = vmatpush1.msra.mxu0 0.0
        %3164 = vmatprep.subr.mxu0 0.0
        %3165 = vmatpush1.msra.mxu0 0.0
        %3166 = vmatprep.subr.mxu0 0.0
        %3167 = vmatpush1.msra.mxu0 0.0
        %3168 = vmatprep.subr.mxu0 0.0
        %3169 = vmatpush1.msra.mxu0 0.0
        %3170 = vmatprep.subr.mxu0 0.0
        %3171 = vmatpush1.msra.mxu0 0.0
        %3172 = vmatprep.subr.mxu0 0.0
        %3173 = vmatpush1.msra.mxu0 0.0
        %3174 = vmatprep.subr.mxu0 0.0
        %3175 = vmatpush1.msra.mxu0 0.0
        %3176 = vmatprep.subr.mxu0 0.0
        %3177 = vmatpush1.msra.mxu0 0.0
        %3178 = vmatprep.subr.mxu0 0.0
        %3179 = vmatpush1.msra.mxu0 0.0
        %3180 = vmatprep.subr.mxu0 0.0
        %3181 = vmatpush1.msra.mxu0 0.0
        %3182 = vmatprep.subr.mxu0 0.0
        %3183 = vmatpush1.msra.mxu0 0.0
        %3184 = vmatprep.subr.mxu0 0.0
        %v3185 = vand.u32 %v3109, 4294901760
        %3186 = vmatpush1.msra.mxu0 %v3185
        %3187 = vmatprep.subr.mxu0 0.0
        %v3188 = vand.u32 %v3108, 4294901760
        %3189 = vmatpush1.msra.mxu0 %v3188
        %3190 = vmatprep.subr.mxu0 0.0
        %v3191 = vand.u32 %v3107, 4294901760
        %3192 = vmatpush1.msra.mxu0 %v3191
        %3193 = vmatprep.subr.mxu0 0.0
        %v3194 = vand.u32 %v3106, 4294901760
        %3195 = vmatpush1.msra.mxu0 %v3194
        %3196 = vmatprep.subr.mxu0 0.0
        %v3197 = vand.u32 %v3105, 4294901760
        %3198 = vmatpush1.msra.mxu0 %v3197
        %3199 = vmatprep.subr.mxu0 0.0
        %3200 = vmatpush2.msra.mxu0 0.0
        %3201 = vmatprep.subr.mxu0 0.0
        %3202 = vmatpush2.msra.mxu0 0.0
        %3203 = vmatprep.subr.mxu0 0.0
        %3204 = vmatpush2.msra.mxu0 0.0
        %3205 = vmatprep.subr.mxu0 0.0
        %3206 = vmatpush2.msra.mxu0 0.0
        %3207 = vmatprep.subr.mxu0 0.0
        %3208 = vmatpush2.msra.mxu0 0.0
        %3209 = vmatprep.subr.mxu0 0.0
        %3210 = vmatpush2.msra.mxu0 0.0
        %3211 = vmatprep.subr.mxu0 0.0
        %3212 = vmatpush2.msra.mxu0 0.0
        %3213 = vmatprep.subr.mxu0 0.0
        %3214 = vmatpush2.msra.mxu0 0.0
        %3215 = vmatprep.subr.mxu0 0.0
        %3216 = vmatpush2.msra.mxu0 0.0
        %3217 = vmatprep.subr.mxu0 0.0
        %3218 = vmatpush2.msra.mxu0 0.0
        %3219 = vmatprep.subr.mxu0 0.0
        %3220 = vmatpush2.msra.mxu0 0.0
        %3221 = vmatprep.subr.mxu0 0.0
        %3222 = vmatpush2.msra.mxu0 0.0
        %3223 = vmatprep.subr.mxu0 0.0
        %3224 = vmatpush2.msra.mxu0 0.0
        %3225 = vmatprep.subr.mxu0 0.0
        %3226 = vmatpush2.msra.mxu0 0.0
        %3227 = vmatprep.subr.mxu0 0.0
        %3228 = vmatpush2.msra.mxu0 0.0
        %3229 = vmatprep.subr.mxu0 0.0
        %3230 = vmatpush2.msra.mxu0 0.0
        %3231 = vmatprep.mubr.f32.mxu0 0.0
        %v3232 = vand.u32 %v3148, 4294901760
        %v3233 = vsub.f32 %v3148, %v3232
        %v3234 = vand.u32 %v3233, 4294901760
        %v3235 = vsub.f32 %v3233, %v3234
        %v3236 = vand.u32 %v3235, 4294901760
        %3237 = vmatmul.mubr.f32.gmra.mxu0 %v3236
        %v3238 = vpop.f32.mrf.mxu0
        %v3239 = vadd.f32 %v3125, %v3238
        %v3240 = vpop.f32.mrf.mxu0
        %3241 = vmatprep.mubr.f32.mxu0 0.0
        %v3242 = vand.u32 %v3151, 4294901760
        %v3243 = vsub.f32 %v3151, %v3242
        %v3244 = vand.u32 %v3243, 4294901760
        %v3245 = vsub.f32 %v3243, %v3244
        %v3246 = vand.u32 %v3245, 4294901760
        %3247 = vmatmul.mubr.f32.gmra.mxu0 %v3246
        %v3248 = vpop.f32.mrf.mxu0
        %v3249 = vadd.f32 %v3130, %v3248
        %v3250 = vpop.f32.mrf.mxu0
        %3251 = vmatprep.mubr.f32.mxu0 0.0
        %v3252 = vand.u32 %v3154, 4294901760
        %v3253 = vsub.f32 %v3154, %v3252
        %v3254 = vand.u32 %v3253, 4294901760
        %v3255 = vsub.f32 %v3253, %v3254
        %v3256 = vand.u32 %v3255, 4294901760
        %3257 = vmatmul.mubr.f32.gmra.mxu0 %v3256
        %v3258 = vpop.f32.mrf.mxu0
        %v3259 = vadd.f32 %v3135, %v3258
        %v3260 = vpop.f32.mrf.mxu0
        %3261 = vmatprep.mubr.f32.mxu0 0.0
        %v3262 = vand.u32 %v3157, 4294901760
        %v3263 = vsub.f32 %v3157, %v3262
        %v3264 = vand.u32 %v3263, 4294901760
        %v3265 = vsub.f32 %v3263, %v3264
        %v3266 = vand.u32 %v3265, 4294901760
        %3267 = vmatmul.mubr.f32.gmra.mxu0 %v3266
        %v3268 = vpop.f32.mrf.mxu0
        %v3269 = vadd.f32 %v3140, %v3268
        %v3270 = vpop.f32.mrf.mxu0
        %3271 = vmatprep.mubr.f32.mxu0 0.0
        %v3272 = vand.u32 %v3160, 4294901760
        %v3273 = vsub.f32 %v3160, %v3272
        %v3274 = vand.u32 %v3273, 4294901760
        %v3275 = vsub.f32 %v3273, %v3274
        %v3276 = vand.u32 %v3275, 4294901760
        %3277 = vmatmul.mubr.f32.gmra.mxu0 %v3276
        %v3278 = vpop.f32.mrf.mxu0
        %v3279 = vadd.f32 %v3145, %v3278
        %v3280 = vpop.f32.mrf.mxu0
        %3281 = vdwg.mxu0
        %3282 = vmatprep.subr.mxu0 0.0
        %3283 = vmatpush1.msra.mxu0 0.0
        %3284 = vmatprep.subr.mxu0 0.0
        %3285 = vmatpush1.msra.mxu0 0.0
        %3286 = vmatprep.subr.mxu0 0.0
        %3287 = vmatpush1.msra.mxu0 0.0
        %3288 = vmatprep.subr.mxu0 0.0
        %3289 = vmatpush1.msra.mxu0 0.0
        %3290 = vmatprep.subr.mxu0 0.0
        %3291 = vmatpush1.msra.mxu0 0.0
        %3292 = vmatprep.subr.mxu0 0.0
        %3293 = vmatpush1.msra.mxu0 0.0
        %3294 = vmatprep.subr.mxu0 0.0
        %3295 = vmatpush1.msra.mxu0 0.0
        %3296 = vmatprep.subr.mxu0 0.0
        %3297 = vmatpush1.msra.mxu0 0.0
        %3298 = vmatprep.subr.mxu0 0.0
        %3299 = vmatpush1.msra.mxu0 0.0
        %3300 = vmatprep.subr.mxu0 0.0
        %3301 = vmatpush1.msra.mxu0 0.0
        %3302 = vmatprep.subr.mxu0 0.0
        %3303 = vmatpush1.msra.mxu0 0.0
        %3304 = vmatprep.subr.mxu0 0.0
        %v3305 = vand.u32 %v3109, 4294901760
        %v3306 = vsub.f32 %v3109, %v3305
        %v3307 = vand.u32 %v3306, 4294901760
        %v3308 = vsub.f32 %v3306, %v3307
        %v3309 = vand.u32 %v3308, 4294901760
        %3310 = vmatpush1.msra.mxu0 %v3309
        %3311 = vmatprep.subr.mxu0 0.0
        %v3312 = vand.u32 %v3108, 4294901760
        %v3313 = vsub.f32 %v3108, %v3312
        %v3314 = vand.u32 %v3313, 4294901760
        %v3315 = vsub.f32 %v3313, %v3314
        %v3316 = vand.u32 %v3315, 4294901760
        %3317 = vmatpush1.msra.mxu0 %v3316
        %3318 = vmatprep.subr.mxu0 0.0
        %v3319 = vand.u32 %v3107, 4294901760
        %v3320 = vsub.f32 %v3107, %v3319
        %v3321 = vand.u32 %v3320, 4294901760
        %v3322 = vsub.f32 %v3320, %v3321
        %v3323 = vand.u32 %v3322, 4294901760
        %3324 = vmatpush1.msra.mxu0 %v3323
        %3325 = vmatprep.subr.mxu0 0.0
        %v3326 = vand.u32 %v3106, 4294901760
        %v3327 = vsub.f32 %v3106, %v3326
        %v3328 = vand.u32 %v3327, 4294901760
        %v3329 = vsub.f32 %v3327, %v3328
        %v3330 = vand.u32 %v3329, 4294901760
        %3331 = vmatpush1.msra.mxu0 %v3330
        %3332 = vmatprep.subr.mxu0 0.0
        %v3333 = vand.u32 %v3105, 4294901760
        %v3334 = vsub.f32 %v3105, %v3333
        %v3335 = vand.u32 %v3334, 4294901760
        %v3336 = vsub.f32 %v3334, %v3335
        %v3337 = vand.u32 %v3336, 4294901760
        %3338 = vmatpush1.msra.mxu0 %v3337
        %3339 = vmatprep.subr.mxu0 0.0
        %3340 = vmatpush2.msra.mxu0 0.0
        %3341 = vmatprep.subr.mxu0 0.0
        %3342 = vmatpush2.msra.mxu0 0.0
        %3343 = vmatprep.subr.mxu0 0.0
        %3344 = vmatpush2.msra.mxu0 0.0
        %3345 = vmatprep.subr.mxu0 0.0
        %3346 = vmatpush2.msra.mxu0 0.0
        %3347 = vmatprep.subr.mxu0 0.0
        %3348 = vmatpush2.msra.mxu0 0.0
        %3349 = vmatprep.subr.mxu0 0.0
        %3350 = vmatpush2.msra.mxu0 0.0
        %3351 = vmatprep.subr.mxu0 0.0
        %3352 = vmatpush2.msra.mxu0 0.0
        %3353 = vmatprep.subr.mxu0 0.0
        %3354 = vmatpush2.msra.mxu0 0.0
        %3355 = vmatprep.subr.mxu0 0.0
        %3356 = vmatpush2.msra.mxu0 0.0
        %3357 = vmatprep.subr.mxu0 0.0
        %3358 = vmatpush2.msra.mxu0 0.0
        %3359 = vmatprep.subr.mxu0 0.0
        %3360 = vmatpush2.msra.mxu0 0.0
        %3361 = vmatprep.subr.mxu0 0.0
        %3362 = vmatpush2.msra.mxu0 0.0
        %3363 = vmatprep.subr.mxu0 0.0
        %3364 = vmatpush2.msra.mxu0 0.0
        %3365 = vmatprep.subr.mxu0 0.0
        %3366 = vmatpush2.msra.mxu0 0.0
        %3367 = vmatprep.subr.mxu0 0.0
        %3368 = vmatpush2.msra.mxu0 0.0
        %3369 = vmatprep.subr.mxu0 0.0
        %3370 = vmatpush2.msra.mxu0 0.0
        %3371 = vmatprep.mubr.f32.mxu0 0.0
        %v3372 = vand.u32 %v3148, 4294901760
        %3373 = vmatmul.mubr.f32.gmra.mxu0 %v3372
        %v3374 = vpop.f32.mrf.mxu0
        %v3375 = vadd.f32 %v3239, %v3374
        %v3376 = vpop.f32.mrf.mxu0
        %3377 = vmatprep.mubr.f32.mxu0 0.0
        %v3378 = vand.u32 %v3151, 4294901760
        %3379 = vmatmul.mubr.f32.gmra.mxu0 %v3378
        %v3380 = vpop.f32.mrf.mxu0
        %v3381 = vadd.f32 %v3249, %v3380
        %v3382 = vpop.f32.mrf.mxu0
        %3383 = vmatprep.mubr.f32.mxu0 0.0
        %v3384 = vand.u32 %v3154, 4294901760
        %3385 = vmatmul.mubr.f32.gmra.mxu0 %v3384
        %v3386 = vpop.f32.mrf.mxu0
        %v3387 = vadd.f32 %v3259, %v3386
        %v3388 = vpop.f32.mrf.mxu0
        %3389 = vmatprep.mubr.f32.mxu0 0.0
        %v3390 = vand.u32 %v3157, 4294901760
        %3391 = vmatmul.mubr.f32.gmra.mxu0 %v3390
        %v3392 = vpop.f32.mrf.mxu0
        %v3393 = vadd.f32 %v3269, %v3392
        %v3394 = vpop.f32.mrf.mxu0
        %3395 = vmatprep.mubr.f32.mxu0 0.0
        %v3396 = vand.u32 %v3160, 4294901760
        %3397 = vmatmul.mubr.f32.gmra.mxu0 %v3396
        %v3398 = vpop.f32.mrf.mxu0
        %v3399 = vadd.f32 %v3279, %v3398
        %v3400 = vpop.f32.mrf.mxu0
        %3401 = vdwg.mxu0
        %3402 = vmatprep.subr.mxu0 0.0
        %3403 = vmatpush1.msra.mxu0 0.0
        %3404 = vmatprep.subr.mxu0 0.0
        %3405 = vmatpush1.msra.mxu0 0.0
        %3406 = vmatprep.subr.mxu0 0.0
        %3407 = vmatpush1.msra.mxu0 0.0
        %3408 = vmatprep.subr.mxu0 0.0
        %3409 = vmatpush1.msra.mxu0 0.0
        %3410 = vmatprep.subr.mxu0 0.0
        %3411 = vmatpush1.msra.mxu0 0.0
        %3412 = vmatprep.subr.mxu0 0.0
        %3413 = vmatpush1.msra.mxu0 0.0
        %3414 = vmatprep.subr.mxu0 0.0
        %3415 = vmatpush1.msra.mxu0 0.0
        %3416 = vmatprep.subr.mxu0 0.0
        %3417 = vmatpush1.msra.mxu0 0.0
        %3418 = vmatprep.subr.mxu0 0.0
        %3419 = vmatpush1.msra.mxu0 0.0
        %3420 = vmatprep.subr.mxu0 0.0
        %3421 = vmatpush1.msra.mxu0 0.0
        %3422 = vmatprep.subr.mxu0 0.0
        %3423 = vmatpush1.msra.mxu0 0.0
        %3424 = vmatprep.subr.mxu0 0.0
        %v3425 = vand.u32 %v3109, 4294901760
        %v3426 = vsub.f32 %v3109, %v3425
        %3427 = vmatpush1.msra.mxu0 %v3426
        %3428 = vmatprep.subr.mxu0 0.0
        %v3429 = vand.u32 %v3108, 4294901760
        %v3430 = vsub.f32 %v3108, %v3429
        %3431 = vmatpush1.msra.mxu0 %v3430
        %3432 = vmatprep.subr.mxu0 0.0
        %v3433 = vand.u32 %v3107, 4294901760
        %v3434 = vsub.f32 %v3107, %v3433
        %3435 = vmatpush1.msra.mxu0 %v3434
        %3436 = vmatprep.subr.mxu0 0.0
        %v3437 = vand.u32 %v3106, 4294901760
        %v3438 = vsub.f32 %v3106, %v3437
        %3439 = vmatpush1.msra.mxu0 %v3438
        %3440 = vmatprep.subr.mxu0 0.0
        %v3441 = vand.u32 %v3105, 4294901760
        %v3442 = vsub.f32 %v3105, %v3441
        %3443 = vmatpush1.msra.mxu0 %v3442
        %3444 = vmatprep.subr.mxu0 0.0
        %3445 = vmatpush2.msra.mxu0 0.0
        %3446 = vmatprep.subr.mxu0 0.0
        %3447 = vmatpush2.msra.mxu0 0.0
        %3448 = vmatprep.subr.mxu0 0.0
        %3449 = vmatpush2.msra.mxu0 0.0
        %3450 = vmatprep.subr.mxu0 0.0
        %3451 = vmatpush2.msra.mxu0 0.0
        %3452 = vmatprep.subr.mxu0 0.0
        %3453 = vmatpush2.msra.mxu0 0.0
        %3454 = vmatprep.subr.mxu0 0.0
        %3455 = vmatpush2.msra.mxu0 0.0
        %3456 = vmatprep.subr.mxu0 0.0
        %3457 = vmatpush2.msra.mxu0 0.0
        %3458 = vmatprep.subr.mxu0 0.0
        %3459 = vmatpush2.msra.mxu0 0.0
        %3460 = vmatprep.subr.mxu0 0.0
        %3461 = vmatpush2.msra.mxu0 0.0
        %3462 = vmatprep.subr.mxu0 0.0
        %3463 = vmatpush2.msra.mxu0 0.0
        %3464 = vmatprep.subr.mxu0 0.0
        %3465 = vmatpush2.msra.mxu0 0.0
        %3466 = vmatprep.subr.mxu0 0.0
        %3467 = vmatpush2.msra.mxu0 0.0
        %3468 = vmatprep.subr.mxu0 0.0
        %3469 = vmatpush2.msra.mxu0 0.0
        %3470 = vmatprep.subr.mxu0 0.0
        %3471 = vmatpush2.msra.mxu0 0.0
        %3472 = vmatprep.subr.mxu0 0.0
        %3473 = vmatpush2.msra.mxu0 0.0
        %3474 = vmatprep.subr.mxu0 0.0
        %3475 = vmatpush2.msra.mxu0 0.0
        %3476 = vmatprep.mubr.f32.mxu0 0.0
        %v3477 = vand.u32 %v3148, 4294901760
        %v3478 = vsub.f32 %v3148, %v3477
        %3479 = vmatmul.mubr.f32.gmra.mxu0 %v3478
        %v3480 = vpop.f32.mrf.mxu0
        %v3481 = vadd.f32 %v3375, %v3480
        %v3482 = vpop.f32.mrf.mxu0
        %3483 = vmatprep.mubr.f32.mxu0 0.0
        %v3484 = vand.u32 %v3151, 4294901760
        %v3485 = vsub.f32 %v3151, %v3484
        %3486 = vmatmul.mubr.f32.gmra.mxu0 %v3485
        %v3487 = vpop.f32.mrf.mxu0
        %v3488 = vadd.f32 %v3381, %v3487
        %v3489 = vpop.f32.mrf.mxu0
        %3490 = vmatprep.mubr.f32.mxu0 0.0
        %v3491 = vand.u32 %v3154, 4294901760
        %v3492 = vsub.f32 %v3154, %v3491
        %3493 = vmatmul.mubr.f32.gmra.mxu0 %v3492
        %v3494 = vpop.f32.mrf.mxu0
        %v3495 = vadd.f32 %v3387, %v3494
        %v3496 = vpop.f32.mrf.mxu0
        %3497 = vmatprep.mubr.f32.mxu0 0.0
        %v3498 = vand.u32 %v3157, 4294901760
        %v3499 = vsub.f32 %v3157, %v3498
        %3500 = vmatmul.mubr.f32.gmra.mxu0 %v3499
        %v3501 = vpop.f32.mrf.mxu0
        %v3502 = vadd.f32 %v3393, %v3501
        %v3503 = vpop.f32.mrf.mxu0
        %3504 = vmatprep.mubr.f32.mxu0 0.0
        %v3505 = vand.u32 %v3160, 4294901760
        %v3506 = vsub.f32 %v3160, %v3505
        %3507 = vmatmul.mubr.f32.gmra.mxu0 %v3506
        %v3508 = vpop.f32.mrf.mxu0
        %v3509 = vadd.f32 %v3399, %v3508
        %v3510 = vpop.f32.mrf.mxu0
        %3511 = vdwg.mxu0
        %3512 = vmatprep.subr.mxu0 0.0
        %3513 = vmatpush1.msra.mxu0 0.0
        %3514 = vmatprep.subr.mxu0 0.0
        %3515 = vmatpush1.msra.mxu0 0.0
        %3516 = vmatprep.subr.mxu0 0.0
        %3517 = vmatpush1.msra.mxu0 0.0
        %3518 = vmatprep.subr.mxu0 0.0
        %3519 = vmatpush1.msra.mxu0 0.0
        %3520 = vmatprep.subr.mxu0 0.0
        %3521 = vmatpush1.msra.mxu0 0.0
        %3522 = vmatprep.subr.mxu0 0.0
        %3523 = vmatpush1.msra.mxu0 0.0
        %3524 = vmatprep.subr.mxu0 0.0
        %3525 = vmatpush1.msra.mxu0 0.0
        %3526 = vmatprep.subr.mxu0 0.0
        %3527 = vmatpush1.msra.mxu0 0.0
        %3528 = vmatprep.subr.mxu0 0.0
        %3529 = vmatpush1.msra.mxu0 0.0
        %3530 = vmatprep.subr.mxu0 0.0
        %3531 = vmatpush1.msra.mxu0 0.0
        %3532 = vmatprep.subr.mxu0 0.0
        %3533 = vmatpush1.msra.mxu0 0.0
        %3534 = vmatprep.subr.mxu0 0.0
        %v3535 = vand.u32 %v3109, 4294901760
        %3536 = vmatpush1.msra.mxu0 %v3535
        %3537 = vmatprep.subr.mxu0 0.0
        %v3538 = vand.u32 %v3108, 4294901760
        %3539 = vmatpush1.msra.mxu0 %v3538
        %3540 = vmatprep.subr.mxu0 0.0
        %v3541 = vand.u32 %v3107, 4294901760
        %3542 = vmatpush1.msra.mxu0 %v3541
        %3543 = vmatprep.subr.mxu0 0.0
        %v3544 = vand.u32 %v3106, 4294901760
        %3545 = vmatpush1.msra.mxu0 %v3544
        %3546 = vmatprep.subr.mxu0 0.0
        %v3547 = vand.u32 %v3105, 4294901760
        %3548 = vmatpush1.msra.mxu0 %v3547
        %3549 = vmatprep.subr.mxu0 0.0
        %3550 = vmatpush2.msra.mxu0 0.0
        %3551 = vmatprep.subr.mxu0 0.0
        %3552 = vmatpush2.msra.mxu0 0.0
        %3553 = vmatprep.subr.mxu0 0.0
        %3554 = vmatpush2.msra.mxu0 0.0
        %3555 = vmatprep.subr.mxu0 0.0
        %3556 = vmatpush2.msra.mxu0 0.0
        %3557 = vmatprep.subr.mxu0 0.0
        %3558 = vmatpush2.msra.mxu0 0.0
        %3559 = vmatprep.subr.mxu0 0.0
        %3560 = vmatpush2.msra.mxu0 0.0
        %3561 = vmatprep.subr.mxu0 0.0
        %3562 = vmatpush2.msra.mxu0 0.0
        %3563 = vmatprep.subr.mxu0 0.0
        %3564 = vmatpush2.msra.mxu0 0.0
        %3565 = vmatprep.subr.mxu0 0.0
        %3566 = vmatpush2.msra.mxu0 0.0
        %3567 = vmatprep.subr.mxu0 0.0
        %3568 = vmatpush2.msra.mxu0 0.0
        %3569 = vmatprep.subr.mxu0 0.0
        %3570 = vmatpush2.msra.mxu0 0.0
        %3571 = vmatprep.subr.mxu0 0.0
        %3572 = vmatpush2.msra.mxu0 0.0
        %3573 = vmatprep.subr.mxu0 0.0
        %3574 = vmatpush2.msra.mxu0 0.0
        %3575 = vmatprep.subr.mxu0 0.0
        %3576 = vmatpush2.msra.mxu0 0.0
        %3577 = vmatprep.subr.mxu0 0.0
        %3578 = vmatpush2.msra.mxu0 0.0
        %3579 = vmatprep.subr.mxu0 0.0
        %3580 = vmatpush2.msra.mxu0 0.0
        %3581 = vmatprep.mubr.f32.mxu0 0.0
        %v3582 = vand.u32 %v3148, 4294901760
        %v3583 = vsub.f32 %v3148, %v3582
        %v3584 = vand.u32 %v3583, 4294901760
        %3585 = vmatmul.mubr.f32.gmra.mxu0 %v3584
        %v3586 = vpop.f32.mrf.mxu0
        %v3587 = vadd.f32 %v3481, %v3586
        %v3588 = vpop.f32.mrf.mxu0
        %3589 = vmatprep.mubr.f32.mxu0 0.0
        %v3590 = vand.u32 %v3151, 4294901760
        %v3591 = vsub.f32 %v3151, %v3590
        %v3592 = vand.u32 %v3591, 4294901760
        %3593 = vmatmul.mubr.f32.gmra.mxu0 %v3592
        %v3594 = vpop.f32.mrf.mxu0
        %v3595 = vadd.f32 %v3488, %v3594
        %v3596 = vpop.f32.mrf.mxu0
        %3597 = vmatprep.mubr.f32.mxu0 0.0
        %v3598 = vand.u32 %v3154, 4294901760
        %v3599 = vsub.f32 %v3154, %v3598
        %v3600 = vand.u32 %v3599, 4294901760
        %3601 = vmatmul.mubr.f32.gmra.mxu0 %v3600
        %v3602 = vpop.f32.mrf.mxu0
        %v3603 = vadd.f32 %v3495, %v3602
        %v3604 = vpop.f32.mrf.mxu0
        %3605 = vmatprep.mubr.f32.mxu0 0.0
        %v3606 = vand.u32 %v3157, 4294901760
        %v3607 = vsub.f32 %v3157, %v3606
        %v3608 = vand.u32 %v3607, 4294901760
        %3609 = vmatmul.mubr.f32.gmra.mxu0 %v3608
        %v3610 = vpop.f32.mrf.mxu0
        %v3611 = vadd.f32 %v3502, %v3610
        %v3612 = vpop.f32.mrf.mxu0
        %3613 = vmatprep.mubr.f32.mxu0 0.0
        %v3614 = vand.u32 %v3160, 4294901760
        %v3615 = vsub.f32 %v3160, %v3614
        %v3616 = vand.u32 %v3615, 4294901760
        %3617 = vmatmul.mubr.f32.gmra.mxu0 %v3616
        %v3618 = vpop.f32.mrf.mxu0
        %v3619 = vadd.f32 %v3509, %v3618
        %v3620 = vpop.f32.mrf.mxu0
        %3621 = vdwg.mxu0
        %3622 = vmatprep.subr.mxu0 0.0
        %3623 = vmatpush1.msra.mxu0 0.0
        %3624 = vmatprep.subr.mxu0 0.0
        %3625 = vmatpush1.msra.mxu0 0.0
        %3626 = vmatprep.subr.mxu0 0.0
        %3627 = vmatpush1.msra.mxu0 0.0
        %3628 = vmatprep.subr.mxu0 0.0
        %3629 = vmatpush1.msra.mxu0 0.0
        %3630 = vmatprep.subr.mxu0 0.0
        %3631 = vmatpush1.msra.mxu0 0.0
        %3632 = vmatprep.subr.mxu0 0.0
        %3633 = vmatpush1.msra.mxu0 0.0
        %3634 = vmatprep.subr.mxu0 0.0
        %3635 = vmatpush1.msra.mxu0 0.0
        %3636 = vmatprep.subr.mxu0 0.0
        %3637 = vmatpush1.msra.mxu0 0.0
        %3638 = vmatprep.subr.mxu0 0.0
        %3639 = vmatpush1.msra.mxu0 0.0
        %3640 = vmatprep.subr.mxu0 0.0
        %3641 = vmatpush1.msra.mxu0 0.0
        %3642 = vmatprep.subr.mxu0 0.0
        %3643 = vmatpush1.msra.mxu0 0.0
        %3644 = vmatprep.subr.mxu0 0.0
        %v3645 = vand.u32 %v3109, 4294901760
        %v3646 = vsub.f32 %v3109, %v3645
        %v3647 = vand.u32 %v3646, 4294901760
        %3648 = vmatpush1.msra.mxu0 %v3647
        %3649 = vmatprep.subr.mxu0 0.0
        %v3650 = vand.u32 %v3108, 4294901760
        %v3651 = vsub.f32 %v3108, %v3650
        %v3652 = vand.u32 %v3651, 4294901760
        %3653 = vmatpush1.msra.mxu0 %v3652
        %3654 = vmatprep.subr.mxu0 0.0
        %v3655 = vand.u32 %v3107, 4294901760
        %v3656 = vsub.f32 %v3107, %v3655
        %v3657 = vand.u32 %v3656, 4294901760
        %3658 = vmatpush1.msra.mxu0 %v3657
        %3659 = vmatprep.subr.mxu0 0.0
        %v3660 = vand.u32 %v3106, 4294901760
        %v3661 = vsub.f32 %v3106, %v3660
        %v3662 = vand.u32 %v3661, 4294901760
        %3663 = vmatpush1.msra.mxu0 %v3662
        %3664 = vmatprep.subr.mxu0 0.0
        %v3665 = vand.u32 %v3105, 4294901760
        %v3666 = vsub.f32 %v3105, %v3665
        %v3667 = vand.u32 %v3666, 4294901760
        %3668 = vmatpush1.msra.mxu0 %v3667
        %3669 = vmatprep.subr.mxu0 0.0
        %3670 = vmatpush2.msra.mxu0 0.0
        %3671 = vmatprep.subr.mxu0 0.0
        %3672 = vmatpush2.msra.mxu0 0.0
        %3673 = vmatprep.subr.mxu0 0.0
        %3674 = vmatpush2.msra.mxu0 0.0
        %3675 = vmatprep.subr.mxu0 0.0
        %3676 = vmatpush2.msra.mxu0 0.0
        %3677 = vmatprep.subr.mxu0 0.0
        %3678 = vmatpush2.msra.mxu0 0.0
        %3679 = vmatprep.subr.mxu0 0.0
        %3680 = vmatpush2.msra.mxu0 0.0
        %3681 = vmatprep.subr.mxu0 0.0
        %3682 = vmatpush2.msra.mxu0 0.0
        %3683 = vmatprep.subr.mxu0 0.0
        %3684 = vmatpush2.msra.mxu0 0.0
        %3685 = vmatprep.subr.mxu0 0.0
        %3686 = vmatpush2.msra.mxu0 0.0
        %3687 = vmatprep.subr.mxu0 0.0
        %3688 = vmatpush2.msra.mxu0 0.0
        %3689 = vmatprep.subr.mxu0 0.0
        %3690 = vmatpush2.msra.mxu0 0.0
        %3691 = vmatprep.subr.mxu0 0.0
        %3692 = vmatpush2.msra.mxu0 0.0
        %3693 = vmatprep.subr.mxu0 0.0
        %3694 = vmatpush2.msra.mxu0 0.0
        %3695 = vmatprep.subr.mxu0 0.0
        %3696 = vmatpush2.msra.mxu0 0.0
        %3697 = vmatprep.subr.mxu0 0.0
        %3698 = vmatpush2.msra.mxu0 0.0
        %3699 = vmatprep.subr.mxu0 0.0
        %3700 = vmatpush2.msra.mxu0 0.0
        %3701 = vmatprep.mubr.f32.mxu0 0.0
        %v3702 = vand.u32 %v3148, 4294901760
        %3703 = vmatmul.mubr.f32.gmra.mxu0 %v3702
        %v3704 = vpop.f32.mrf.mxu0
        %v3705 = vadd.f32 %v3587, %v3704
        %v3706 = vpop.f32.mrf.mxu0
        %3707 = vmatprep.mubr.f32.mxu0 0.0
        %v3708 = vand.u32 %v3151, 4294901760
        %3709 = vmatmul.mubr.f32.gmra.mxu0 %v3708
        %v3710 = vpop.f32.mrf.mxu0
        %v3711 = vadd.f32 %v3595, %v3710
        %v3712 = vpop.f32.mrf.mxu0
        %3713 = vmatprep.mubr.f32.mxu0 0.0
        %v3714 = vand.u32 %v3154, 4294901760
        %3715 = vmatmul.mubr.f32.gmra.mxu0 %v3714
        %v3716 = vpop.f32.mrf.mxu0
        %v3717 = vadd.f32 %v3603, %v3716
        %v3718 = vpop.f32.mrf.mxu0
        %3719 = vmatprep.mubr.f32.mxu0 0.0
        %v3720 = vand.u32 %v3157, 4294901760
        %3721 = vmatmul.mubr.f32.gmra.mxu0 %v3720
        %v3722 = vpop.f32.mrf.mxu0
        %v3723 = vadd.f32 %v3611, %v3722
        %v3724 = vpop.f32.mrf.mxu0
        %3725 = vmatprep.mubr.f32.mxu0 0.0
        %v3726 = vand.u32 %v3160, 4294901760
        %3727 = vmatmul.mubr.f32.gmra.mxu0 %v3726
        %v3728 = vpop.f32.mrf.mxu0
        %v3729 = vadd.f32 %v3619, %v3728
        %v3730 = vpop.f32.mrf.mxu0
        %3731 = vdwg.mxu0
        %3732 = vmatprep.subr.mxu0 0.0
        %3733 = vmatpush1.msra.mxu0 0.0
        %3734 = vmatprep.subr.mxu0 0.0
        %3735 = vmatpush1.msra.mxu0 0.0
        %3736 = vmatprep.subr.mxu0 0.0
        %3737 = vmatpush1.msra.mxu0 0.0
        %3738 = vmatprep.subr.mxu0 0.0
        %3739 = vmatpush1.msra.mxu0 0.0
        %3740 = vmatprep.subr.mxu0 0.0
        %3741 = vmatpush1.msra.mxu0 0.0
        %3742 = vmatprep.subr.mxu0 0.0
        %3743 = vmatpush1.msra.mxu0 0.0
        %3744 = vmatprep.subr.mxu0 0.0
        %3745 = vmatpush1.msra.mxu0 0.0
        %3746 = vmatprep.subr.mxu0 0.0
        %3747 = vmatpush1.msra.mxu0 0.0
        %3748 = vmatprep.subr.mxu0 0.0
        %3749 = vmatpush1.msra.mxu0 0.0
        %3750 = vmatprep.subr.mxu0 0.0
        %3751 = vmatpush1.msra.mxu0 0.0
        %3752 = vmatprep.subr.mxu0 0.0
        %3753 = vmatpush1.msra.mxu0 0.0
        %3754 = vmatprep.subr.mxu0 0.0
        %v3755 = vand.u32 %v3109, 4294901760
        %3756 = vmatpush1.msra.mxu0 %v3755
        %3757 = vmatprep.subr.mxu0 0.0
        %v3758 = vand.u32 %v3108, 4294901760
        %3759 = vmatpush1.msra.mxu0 %v3758
        %3760 = vmatprep.subr.mxu0 0.0
        %v3761 = vand.u32 %v3107, 4294901760
        %3762 = vmatpush1.msra.mxu0 %v3761
        %3763 = vmatprep.subr.mxu0 0.0
        %v3764 = vand.u32 %v3106, 4294901760
        %3765 = vmatpush1.msra.mxu0 %v3764
        %3766 = vmatprep.subr.mxu0 0.0
        %v3767 = vand.u32 %v3105, 4294901760
        %3768 = vmatpush1.msra.mxu0 %v3767
        %3769 = vmatprep.subr.mxu0 0.0
        %3770 = vmatpush2.msra.mxu0 0.0
        %3771 = vmatprep.subr.mxu0 0.0
        %3772 = vmatpush2.msra.mxu0 0.0
        %3773 = vmatprep.subr.mxu0 0.0
        %3774 = vmatpush2.msra.mxu0 0.0
        %3775 = vmatprep.subr.mxu0 0.0
        %3776 = vmatpush2.msra.mxu0 0.0
        %3777 = vmatprep.subr.mxu0 0.0
        %3778 = vmatpush2.msra.mxu0 0.0
        %3779 = vmatprep.subr.mxu0 0.0
        %3780 = vmatpush2.msra.mxu0 0.0
        %3781 = vmatprep.subr.mxu0 0.0
        %3782 = vmatpush2.msra.mxu0 0.0
        %3783 = vmatprep.subr.mxu0 0.0
        %3784 = vmatpush2.msra.mxu0 0.0
        %3785 = vmatprep.subr.mxu0 0.0
        %3786 = vmatpush2.msra.mxu0 0.0
        %3787 = vmatprep.subr.mxu0 0.0
        %3788 = vmatpush2.msra.mxu0 0.0
        %3789 = vmatprep.subr.mxu0 0.0
        %3790 = vmatpush2.msra.mxu0 0.0
        %3791 = vmatprep.subr.mxu0 0.0
        %3792 = vmatpush2.msra.mxu0 0.0
        %3793 = vmatprep.subr.mxu0 0.0
        %3794 = vmatpush2.msra.mxu0 0.0
        %3795 = vmatprep.subr.mxu0 0.0
        %3796 = vmatpush2.msra.mxu0 0.0
        %3797 = vmatprep.subr.mxu0 0.0
        %3798 = vmatpush2.msra.mxu0 0.0
        %3799 = vmatprep.subr.mxu0 0.0
        %3800 = vmatpush2.msra.mxu0 0.0
        %3801 = vmatprep.mubr.f32.mxu0 0.0
        %v3802 = vand.u32 %v3148, 4294901760
        %3803 = vmatmul.mubr.f32.gmra.mxu0 %v3802
        %v3804 = vpop.f32.mrf.mxu0
        %v3805 = vadd.f32 %v3705, %v3804
        %v3806 = vpop.f32.mrf.mxu0
        %3807 = vmatprep.mubr.f32.mxu0 0.0
        %v3808 = vand.u32 %v3151, 4294901760
        %3809 = vmatmul.mubr.f32.gmra.mxu0 %v3808
        %v3810 = vpop.f32.mrf.mxu0
        %v3811 = vadd.f32 %v3711, %v3810
        %v3812 = vpop.f32.mrf.mxu0
        %3813 = vmatprep.mubr.f32.mxu0 0.0
        %v3814 = vand.u32 %v3154, 4294901760
        %3815 = vmatmul.mubr.f32.gmra.mxu0 %v3814
        %v3816 = vpop.f32.mrf.mxu0
        %v3817 = vadd.f32 %v3717, %v3816
        %v3818 = vpop.f32.mrf.mxu0
        %3819 = vmatprep.mubr.f32.mxu0 0.0
        %v3820 = vand.u32 %v3157, 4294901760
        %3821 = vmatmul.mubr.f32.gmra.mxu0 %v3820
        %v3822 = vpop.f32.mrf.mxu0
        %v3823 = vadd.f32 %v3723, %v3822
        %v3824 = vpop.f32.mrf.mxu0
        %3825 = vmatprep.mubr.f32.mxu0 0.0
        %v3826 = vand.u32 %v3160, 4294901760
        %3827 = vmatmul.mubr.f32.gmra.mxu0 %v3826
        %v3828 = vpop.f32.mrf.mxu0
        %v3829 = vadd.f32 %v3729, %v3828
        %v3830 = vpop.f32.mrf.mxu0
        %3831 = vdwg.mxu0
        %v3832 = vtanh.pop %v3805
        %v3833 = vtanh.pop %v3811
        %v3834 = vtanh.pop %v3817
        %v3835 = vtanh.pop %v3823
        %v3836 = vtanh.pop %v3829
        %s3837 = scalar_lea.vmem %s2, 160
        %v3838 = vld [vmem:[%s3837] sm:$0xff]
        %v3839 = vld [vmem:[%s3837 + $0x8] sm:$0xff]
        %v3840 = vld [vmem:[%s3837 + $0x10] sm:$0xff]
        %v3841 = vld [vmem:[%s3837 + $0x18] sm:$0xff]
        %v3842 = vld [vmem:[%s3837 + $0x20] sm:$0xff]
        %s3843 = scalar_lea.vmem %s4, 200
        %v3844 = vld [vmem:[%s3843] sm:$0xff]
        %v3845 = vld [vmem:[%s3843 + $0x8] sm:$0xff]
        %v3846 = vld [vmem:[%s3843 + $0x10] sm:$0xff]
        %v3847 = vld [vmem:[%s3843 + $0x18] sm:$0xff]
        %v3848 = vld [vmem:[%s3843 + $0x20] sm:$0xff]
        %3850 = vset.pattern.permute.xlu0 0
        %3851 = vperm.xlu0 %3850, %v3844
        %v3852 = vpop.permute.xlu0 %3851
        %3855 = vset.pattern.permute.xlu0 0
        %3856 = vperm.xlu0 %3855, %v3845
        %v3857 = vpop.permute.xlu0 %3856
        %3860 = vset.pattern.permute.xlu0 0
        %3861 = vperm.xlu0 %3860, %v3846
        %v3862 = vpop.permute.xlu0 %3861
        %3865 = vset.pattern.permute.xlu0 0
        %3866 = vperm.xlu0 %3865, %v3847
        %v3867 = vpop.permute.xlu0 %3866
        %3870 = vset.pattern.permute.xlu0 0
        %3871 = vperm.xlu0 %3870, %v3848
        %v3872 = vpop.permute.xlu0 %3871
        %v3875 = vsel %vm965, %v3838, 0
        %v3878 = vsel %vm965, %v3839, 0
        %v3881 = vsel %vm965, %v3840, 0
        %v3884 = vsel %vm965, %v3841, 0
        %v3887 = vsel %vm965, %v3842, 0
        %3889 = vmatprep.subr.mxu0 0.0
        %3890 = vmatpush1.msra.mxu0 0.0
        %3891 = vmatprep.subr.mxu0 0.0
        %3892 = vmatpush1.msra.mxu0 0.0
        %3893 = vmatprep.subr.mxu0 0.0
        %3894 = vmatpush1.msra.mxu0 0.0
        %3895 = vmatprep.subr.mxu0 0.0
        %3896 = vmatpush1.msra.mxu0 0.0
        %3897 = vmatprep.subr.mxu0 0.0
        %3898 = vmatpush1.msra.mxu0 0.0
        %3899 = vmatprep.subr.mxu0 0.0
        %3900 = vmatpush1.msra.mxu0 0.0
        %3901 = vmatprep.subr.mxu0 0.0
        %3902 = vmatpush1.msra.mxu0 0.0
        %3903 = vmatprep.subr.mxu0 0.0
        %3904 = vmatpush1.msra.mxu0 0.0
        %3905 = vmatprep.subr.mxu0 0.0
        %3906 = vmatpush1.msra.mxu0 0.0
        %3907 = vmatprep.subr.mxu0 0.0
        %3908 = vmatpush1.msra.mxu0 0.0
        %3909 = vmatprep.subr.mxu0 0.0
        %3910 = vmatpush1.msra.mxu0 0.0
        %3911 = vmatprep.subr.mxu0 0.0
        %v3912 = vand.u32 %v3836, 4294901760
        %3913 = vmatpush1.msra.mxu0 %v3912
        %3914 = vmatprep.subr.mxu0 0.0
        %v3915 = vand.u32 %v3835, 4294901760
        %3916 = vmatpush1.msra.mxu0 %v3915
        %3917 = vmatprep.subr.mxu0 0.0
        %v3918 = vand.u32 %v3834, 4294901760
        %3919 = vmatpush1.msra.mxu0 %v3918
        %3920 = vmatprep.subr.mxu0 0.0
        %v3921 = vand.u32 %v3833, 4294901760
        %3922 = vmatpush1.msra.mxu0 %v3921
        %3923 = vmatprep.subr.mxu0 0.0
        %v3924 = vand.u32 %v3832, 4294901760
        %3925 = vmatpush1.msra.mxu0 %v3924
        %3926 = vmatprep.subr.mxu0 0.0
        %3927 = vmatpush2.msra.mxu0 0.0
        %3928 = vmatprep.subr.mxu0 0.0
        %3929 = vmatpush2.msra.mxu0 0.0
        %3930 = vmatprep.subr.mxu0 0.0
        %3931 = vmatpush2.msra.mxu0 0.0
        %3932 = vmatprep.subr.mxu0 0.0
        %3933 = vmatpush2.msra.mxu0 0.0
        %3934 = vmatprep.subr.mxu0 0.0
        %3935 = vmatpush2.msra.mxu0 0.0
        %3936 = vmatprep.subr.mxu0 0.0
        %3937 = vmatpush2.msra.mxu0 0.0
        %3938 = vmatprep.subr.mxu0 0.0
        %3939 = vmatpush2.msra.mxu0 0.0
        %3940 = vmatprep.subr.mxu0 0.0
        %3941 = vmatpush2.msra.mxu0 0.0
        %3942 = vmatprep.subr.mxu0 0.0
        %3943 = vmatpush2.msra.mxu0 0.0
        %3944 = vmatprep.subr.mxu0 0.0
        %3945 = vmatpush2.msra.mxu0 0.0
        %3946 = vmatprep.subr.mxu0 0.0
        %3947 = vmatpush2.msra.mxu0 0.0
        %3948 = vmatprep.subr.mxu0 0.0
        %3949 = vmatpush2.msra.mxu0 0.0
        %3950 = vmatprep.subr.mxu0 0.0
        %3951 = vmatpush2.msra.mxu0 0.0
        %3952 = vmatprep.subr.mxu0 0.0
        %3953 = vmatpush2.msra.mxu0 0.0
        %3954 = vmatprep.subr.mxu0 0.0
        %3955 = vmatpush2.msra.mxu0 0.0
        %3956 = vmatprep.subr.mxu0 0.0
        %3957 = vmatpush2.msra.mxu0 0.0
        %3958 = vmatprep.mubr.f32.mxu0 0.0
        %v3959 = vand.u32 %v3875, 4294901760
        %v3960 = vsub.f32 %v3875, %v3959
        %v3961 = vand.u32 %v3960, 4294901760
        %v3962 = vsub.f32 %v3960, %v3961
        %v3963 = vand.u32 %v3962, 4294901760
        %3964 = vmatmul.mubr.f32.gmra.mxu0 %v3963
        %v3965 = vpop.f32.mrf.mxu0
        %v3966 = vadd.f32 %v3852, %v3965
        %v3967 = vpop.f32.mrf.mxu0
        %3968 = vmatprep.mubr.f32.mxu0 0.0
        %v3969 = vand.u32 %v3878, 4294901760
        %v3970 = vsub.f32 %v3878, %v3969
        %v3971 = vand.u32 %v3970, 4294901760
        %v3972 = vsub.f32 %v3970, %v3971
        %v3973 = vand.u32 %v3972, 4294901760
        %3974 = vmatmul.mubr.f32.gmra.mxu0 %v3973
        %v3975 = vpop.f32.mrf.mxu0
        %v3976 = vadd.f32 %v3857, %v3975
        %v3977 = vpop.f32.mrf.mxu0
        %3978 = vmatprep.mubr.f32.mxu0 0.0
        %v3979 = vand.u32 %v3881, 4294901760
        %v3980 = vsub.f32 %v3881, %v3979
        %v3981 = vand.u32 %v3980, 4294901760
        %v3982 = vsub.f32 %v3980, %v3981
        %v3983 = vand.u32 %v3982, 4294901760
        %3984 = vmatmul.mubr.f32.gmra.mxu0 %v3983
        %v3985 = vpop.f32.mrf.mxu0
        %v3986 = vadd.f32 %v3862, %v3985
        %v3987 = vpop.f32.mrf.mxu0
        %3988 = vmatprep.mubr.f32.mxu0 0.0
        %v3989 = vand.u32 %v3884, 4294901760
        %v3990 = vsub.f32 %v3884, %v3989
        %v3991 = vand.u32 %v3990, 4294901760
        %v3992 = vsub.f32 %v3990, %v3991
        %v3993 = vand.u32 %v3992, 4294901760
        %3994 = vmatmul.mubr.f32.gmra.mxu0 %v3993
        %v3995 = vpop.f32.mrf.mxu0
        %v3996 = vadd.f32 %v3867, %v3995
        %v3997 = vpop.f32.mrf.mxu0
        %3998 = vmatprep.mubr.f32.mxu0 0.0
        %v3999 = vand.u32 %v3887, 4294901760
        %v4000 = vsub.f32 %v3887, %v3999
        %v4001 = vand.u32 %v4000, 4294901760
        %v4002 = vsub.f32 %v4000, %v4001
        %v4003 = vand.u32 %v4002, 4294901760
        %4004 = vmatmul.mubr.f32.gmra.mxu0 %v4003
        %v4005 = vpop.f32.mrf.mxu0
        %v4006 = vadd.f32 %v3872, %v4005
        %v4007 = vpop.f32.mrf.mxu0
        %4008 = vdwg.mxu0
        %4009 = vmatprep.subr.mxu0 0.0
        %4010 = vmatpush1.msra.mxu0 0.0
        %4011 = vmatprep.subr.mxu0 0.0
        %4012 = vmatpush1.msra.mxu0 0.0
        %4013 = vmatprep.subr.mxu0 0.0
        %4014 = vmatpush1.msra.mxu0 0.0
        %4015 = vmatprep.subr.mxu0 0.0
        %4016 = vmatpush1.msra.mxu0 0.0
        %4017 = vmatprep.subr.mxu0 0.0
        %4018 = vmatpush1.msra.mxu0 0.0
        %4019 = vmatprep.subr.mxu0 0.0
        %4020 = vmatpush1.msra.mxu0 0.0
        %4021 = vmatprep.subr.mxu0 0.0
        %4022 = vmatpush1.msra.mxu0 0.0
        %4023 = vmatprep.subr.mxu0 0.0
        %4024 = vmatpush1.msra.mxu0 0.0
        %4025 = vmatprep.subr.mxu0 0.0
        %4026 = vmatpush1.msra.mxu0 0.0
        %4027 = vmatprep.subr.mxu0 0.0
        %4028 = vmatpush1.msra.mxu0 0.0
        %4029 = vmatprep.subr.mxu0 0.0
        %4030 = vmatpush1.msra.mxu0 0.0
        %4031 = vmatprep.subr.mxu0 0.0
        %v4032 = vand.u32 %v3836, 4294901760
        %v4033 = vsub.f32 %v3836, %v4032
        %v4034 = vand.u32 %v4033, 4294901760
        %v4035 = vsub.f32 %v4033, %v4034
        %v4036 = vand.u32 %v4035, 4294901760
        %4037 = vmatpush1.msra.mxu0 %v4036
        %4038 = vmatprep.subr.mxu0 0.0
        %v4039 = vand.u32 %v3835, 4294901760
        %v4040 = vsub.f32 %v3835, %v4039
        %v4041 = vand.u32 %v4040, 4294901760
        %v4042 = vsub.f32 %v4040, %v4041
        %v4043 = vand.u32 %v4042, 4294901760
        %4044 = vmatpush1.msra.mxu0 %v4043
        %4045 = vmatprep.subr.mxu0 0.0
        %v4046 = vand.u32 %v3834, 4294901760
        %v4047 = vsub.f32 %v3834, %v4046
        %v4048 = vand.u32 %v4047, 4294901760
        %v4049 = vsub.f32 %v4047, %v4048
        %v4050 = vand.u32 %v4049, 4294901760
        %4051 = vmatpush1.msra.mxu0 %v4050
        %4052 = vmatprep.subr.mxu0 0.0
        %v4053 = vand.u32 %v3833, 4294901760
        %v4054 = vsub.f32 %v3833, %v4053
        %v4055 = vand.u32 %v4054, 4294901760
        %v4056 = vsub.f32 %v4054, %v4055
        %v4057 = vand.u32 %v4056, 4294901760
        %4058 = vmatpush1.msra.mxu0 %v4057
        %4059 = vmatprep.subr.mxu0 0.0
        %v4060 = vand.u32 %v3832, 4294901760
        %v4061 = vsub.f32 %v3832, %v4060
        %v4062 = vand.u32 %v4061, 4294901760
        %v4063 = vsub.f32 %v4061, %v4062
        %v4064 = vand.u32 %v4063, 4294901760
        %4065 = vmatpush1.msra.mxu0 %v4064
        %4066 = vmatprep.subr.mxu0 0.0
        %4067 = vmatpush2.msra.mxu0 0.0
        %4068 = vmatprep.subr.mxu0 0.0
        %4069 = vmatpush2.msra.mxu0 0.0
        %4070 = vmatprep.subr.mxu0 0.0
        %4071 = vmatpush2.msra.mxu0 0.0
        %4072 = vmatprep.subr.mxu0 0.0
        %4073 = vmatpush2.msra.mxu0 0.0
        %4074 = vmatprep.subr.mxu0 0.0
        %4075 = vmatpush2.msra.mxu0 0.0
        %4076 = vmatprep.subr.mxu0 0.0
        %4077 = vmatpush2.msra.mxu0 0.0
        %4078 = vmatprep.subr.mxu0 0.0
        %4079 = vmatpush2.msra.mxu0 0.0
        %4080 = vmatprep.subr.mxu0 0.0
        %4081 = vmatpush2.msra.mxu0 0.0
        %4082 = vmatprep.subr.mxu0 0.0
        %4083 = vmatpush2.msra.mxu0 0.0
        %4084 = vmatprep.subr.mxu0 0.0
        %4085 = vmatpush2.msra.mxu0 0.0
        %4086 = vmatprep.subr.mxu0 0.0
        %4087 = vmatpush2.msra.mxu0 0.0
        %4088 = vmatprep.subr.mxu0 0.0
        %4089 = vmatpush2.msra.mxu0 0.0
        %4090 = vmatprep.subr.mxu0 0.0
        %4091 = vmatpush2.msra.mxu0 0.0
        %4092 = vmatprep.subr.mxu0 0.0
        %4093 = vmatpush2.msra.mxu0 0.0
        %4094 = vmatprep.subr.mxu0 0.0
        %4095 = vmatpush2.msra.mxu0 0.0
        %4096 = vmatprep.subr.mxu0 0.0
        %4097 = vmatpush2.msra.mxu0 0.0
        %4098 = vmatprep.mubr.f32.mxu0 0.0
        %v4099 = vand.u32 %v3875, 4294901760
        %4100 = vmatmul.mubr.f32.gmra.mxu0 %v4099
        %v4101 = vpop.f32.mrf.mxu0
        %v4102 = vadd.f32 %v3966, %v4101
        %v4103 = vpop.f32.mrf.mxu0
        %4104 = vmatprep.mubr.f32.mxu0 0.0
        %v4105 = vand.u32 %v3878, 4294901760
        %4106 = vmatmul.mubr.f32.gmra.mxu0 %v4105
        %v4107 = vpop.f32.mrf.mxu0
        %v4108 = vadd.f32 %v3976, %v4107
        %v4109 = vpop.f32.mrf.mxu0
        %4110 = vmatprep.mubr.f32.mxu0 0.0
        %v4111 = vand.u32 %v3881, 4294901760
        %4112 = vmatmul.mubr.f32.gmra.mxu0 %v4111
        %v4113 = vpop.f32.mrf.mxu0
        %v4114 = vadd.f32 %v3986, %v4113
        %v4115 = vpop.f32.mrf.mxu0
        %4116 = vmatprep.mubr.f32.mxu0 0.0
        %v4117 = vand.u32 %v3884, 4294901760
        %4118 = vmatmul.mubr.f32.gmra.mxu0 %v4117
        %v4119 = vpop.f32.mrf.mxu0
        %v4120 = vadd.f32 %v3996, %v4119
        %v4121 = vpop.f32.mrf.mxu0
        %4122 = vmatprep.mubr.f32.mxu0 0.0
        %v4123 = vand.u32 %v3887, 4294901760
        %4124 = vmatmul.mubr.f32.gmra.mxu0 %v4123
        %v4125 = vpop.f32.mrf.mxu0
        %v4126 = vadd.f32 %v4006, %v4125
        %v4127 = vpop.f32.mrf.mxu0
        %4128 = vdwg.mxu0
        %4129 = vmatprep.subr.mxu0 0.0
        %4130 = vmatpush1.msra.mxu0 0.0
        %4131 = vmatprep.subr.mxu0 0.0
        %4132 = vmatpush1.msra.mxu0 0.0
        %4133 = vmatprep.subr.mxu0 0.0
        %4134 = vmatpush1.msra.mxu0 0.0
        %4135 = vmatprep.subr.mxu0 0.0
        %4136 = vmatpush1.msra.mxu0 0.0
        %4137 = vmatprep.subr.mxu0 0.0
        %4138 = vmatpush1.msra.mxu0 0.0
        %4139 = vmatprep.subr.mxu0 0.0
        %4140 = vmatpush1.msra.mxu0 0.0
        %4141 = vmatprep.subr.mxu0 0.0
        %4142 = vmatpush1.msra.mxu0 0.0
        %4143 = vmatprep.subr.mxu0 0.0
        %4144 = vmatpush1.msra.mxu0 0.0
        %4145 = vmatprep.subr.mxu0 0.0
        %4146 = vmatpush1.msra.mxu0 0.0
        %4147 = vmatprep.subr.mxu0 0.0
        %4148 = vmatpush1.msra.mxu0 0.0
        %4149 = vmatprep.subr.mxu0 0.0
        %4150 = vmatpush1.msra.mxu0 0.0
        %4151 = vmatprep.subr.mxu0 0.0
        %v4152 = vand.u32 %v3836, 4294901760
        %v4153 = vsub.f32 %v3836, %v4152
        %4154 = vmatpush1.msra.mxu0 %v4153
        %4155 = vmatprep.subr.mxu0 0.0
        %v4156 = vand.u32 %v3835, 4294901760
        %v4157 = vsub.f32 %v3835, %v4156
        %4158 = vmatpush1.msra.mxu0 %v4157
        %4159 = vmatprep.subr.mxu0 0.0
        %v4160 = vand.u32 %v3834, 4294901760
        %v4161 = vsub.f32 %v3834, %v4160
        %4162 = vmatpush1.msra.mxu0 %v4161
        %4163 = vmatprep.subr.mxu0 0.0
        %v4164 = vand.u32 %v3833, 4294901760
        %v4165 = vsub.f32 %v3833, %v4164
        %4166 = vmatpush1.msra.mxu0 %v4165
        %4167 = vmatprep.subr.mxu0 0.0
        %v4168 = vand.u32 %v3832, 4294901760
        %v4169 = vsub.f32 %v3832, %v4168
        %4170 = vmatpush1.msra.mxu0 %v4169
        %4171 = vmatprep.subr.mxu0 0.0
        %4172 = vmatpush2.msra.mxu0 0.0
        %4173 = vmatprep.subr.mxu0 0.0
        %4174 = vmatpush2.msra.mxu0 0.0
        %4175 = vmatprep.subr.mxu0 0.0
        %4176 = vmatpush2.msra.mxu0 0.0
        %4177 = vmatprep.subr.mxu0 0.0
        %4178 = vmatpush2.msra.mxu0 0.0
        %4179 = vmatprep.subr.mxu0 0.0
        %4180 = vmatpush2.msra.mxu0 0.0
        %4181 = vmatprep.subr.mxu0 0.0
        %4182 = vmatpush2.msra.mxu0 0.0
        %4183 = vmatprep.subr.mxu0 0.0
        %4184 = vmatpush2.msra.mxu0 0.0
        %4185 = vmatprep.subr.mxu0 0.0
        %4186 = vmatpush2.msra.mxu0 0.0
        %4187 = vmatprep.subr.mxu0 0.0
        %4188 = vmatpush2.msra.mxu0 0.0
        %4189 = vmatprep.subr.mxu0 0.0
        %4190 = vmatpush2.msra.mxu0 0.0
        %4191 = vmatprep.subr.mxu0 0.0
        %4192 = vmatpush2.msra.mxu0 0.0
        %4193 = vmatprep.subr.mxu0 0.0
        %4194 = vmatpush2.msra.mxu0 0.0
        %4195 = vmatprep.subr.mxu0 0.0
        %4196 = vmatpush2.msra.mxu0 0.0
        %4197 = vmatprep.subr.mxu0 0.0
        %4198 = vmatpush2.msra.mxu0 0.0
        %4199 = vmatprep.subr.mxu0 0.0
        %4200 = vmatpush2.msra.mxu0 0.0
        %4201 = vmatprep.subr.mxu0 0.0
        %4202 = vmatpush2.msra.mxu0 0.0
        %4203 = vmatprep.mubr.f32.mxu0 0.0
        %v4204 = vand.u32 %v3875, 4294901760
        %v4205 = vsub.f32 %v3875, %v4204
        %4206 = vmatmul.mubr.f32.gmra.mxu0 %v4205
        %v4207 = vpop.f32.mrf.mxu0
        %v4208 = vadd.f32 %v4102, %v4207
        %v4209 = vpop.f32.mrf.mxu0
        %4210 = vmatprep.mubr.f32.mxu0 0.0
        %v4211 = vand.u32 %v3878, 4294901760
        %v4212 = vsub.f32 %v3878, %v4211
        %4213 = vmatmul.mubr.f32.gmra.mxu0 %v4212
        %v4214 = vpop.f32.mrf.mxu0
        %v4215 = vadd.f32 %v4108, %v4214
        %v4216 = vpop.f32.mrf.mxu0
        %4217 = vmatprep.mubr.f32.mxu0 0.0
        %v4218 = vand.u32 %v3881, 4294901760
        %v4219 = vsub.f32 %v3881, %v4218
        %4220 = vmatmul.mubr.f32.gmra.mxu0 %v4219
        %v4221 = vpop.f32.mrf.mxu0
        %v4222 = vadd.f32 %v4114, %v4221
        %v4223 = vpop.f32.mrf.mxu0
        %4224 = vmatprep.mubr.f32.mxu0 0.0
        %v4225 = vand.u32 %v3884, 4294901760
        %v4226 = vsub.f32 %v3884, %v4225
        %4227 = vmatmul.mubr.f32.gmra.mxu0 %v4226
        %v4228 = vpop.f32.mrf.mxu0
        %v4229 = vadd.f32 %v4120, %v4228
        %v4230 = vpop.f32.mrf.mxu0
        %4231 = vmatprep.mubr.f32.mxu0 0.0
        %v4232 = vand.u32 %v3887, 4294901760
        %v4233 = vsub.f32 %v3887, %v4232
        %4234 = vmatmul.mubr.f32.gmra.mxu0 %v4233
        %v4235 = vpop.f32.mrf.mxu0
        %v4236 = vadd.f32 %v4126, %v4235
        %v4237 = vpop.f32.mrf.mxu0
        %4238 = vdwg.mxu0
        %4239 = vmatprep.subr.mxu0 0.0
        %4240 = vmatpush1.msra.mxu0 0.0
        %4241 = vmatprep.subr.mxu0 0.0
        %4242 = vmatpush1.msra.mxu0 0.0
        %4243 = vmatprep.subr.mxu0 0.0
        %4244 = vmatpush1.msra.mxu0 0.0
        %4245 = vmatprep.subr.mxu0 0.0
        %4246 = vmatpush1.msra.mxu0 0.0
        %4247 = vmatprep.subr.mxu0 0.0
        %4248 = vmatpush1.msra.mxu0 0.0
        %4249 = vmatprep.subr.mxu0 0.0
        %4250 = vmatpush1.msra.mxu0 0.0
        %4251 = vmatprep.subr.mxu0 0.0
        %4252 = vmatpush1.msra.mxu0 0.0
        %4253 = vmatprep.subr.mxu0 0.0
        %4254 = vmatpush1.msra.mxu0 0.0
        %4255 = vmatprep.subr.mxu0 0.0
        %4256 = vmatpush1.msra.mxu0 0.0
        %4257 = vmatprep.subr.mxu0 0.0
        %4258 = vmatpush1.msra.mxu0 0.0
        %4259 = vmatprep.subr.mxu0 0.0
        %4260 = vmatpush1.msra.mxu0 0.0
        %4261 = vmatprep.subr.mxu0 0.0
        %v4262 = vand.u32 %v3836, 4294901760
        %4263 = vmatpush1.msra.mxu0 %v4262
        %4264 = vmatprep.subr.mxu0 0.0
        %v4265 = vand.u32 %v3835, 4294901760
        %4266 = vmatpush1.msra.mxu0 %v4265
        %4267 = vmatprep.subr.mxu0 0.0
        %v4268 = vand.u32 %v3834, 4294901760
        %4269 = vmatpush1.msra.mxu0 %v4268
        %4270 = vmatprep.subr.mxu0 0.0
        %v4271 = vand.u32 %v3833, 4294901760
        %4272 = vmatpush1.msra.mxu0 %v4271
        %4273 = vmatprep.subr.mxu0 0.0
        %v4274 = vand.u32 %v3832, 4294901760
        %4275 = vmatpush1.msra.mxu0 %v4274
        %4276 = vmatprep.subr.mxu0 0.0
        %4277 = vmatpush2.msra.mxu0 0.0
        %4278 = vmatprep.subr.mxu0 0.0
        %4279 = vmatpush2.msra.mxu0 0.0
        %4280 = vmatprep.subr.mxu0 0.0
        %4281 = vmatpush2.msra.mxu0 0.0
        %4282 = vmatprep.subr.mxu0 0.0
        %4283 = vmatpush2.msra.mxu0 0.0
        %4284 = vmatprep.subr.mxu0 0.0
        %4285 = vmatpush2.msra.mxu0 0.0
        %4286 = vmatprep.subr.mxu0 0.0
        %4287 = vmatpush2.msra.mxu0 0.0
        %4288 = vmatprep.subr.mxu0 0.0
        %4289 = vmatpush2.msra.mxu0 0.0
        %4290 = vmatprep.subr.mxu0 0.0
        %4291 = vmatpush2.msra.mxu0 0.0
        %4292 = vmatprep.subr.mxu0 0.0
        %4293 = vmatpush2.msra.mxu0 0.0
        %4294 = vmatprep.subr.mxu0 0.0
        %4295 = vmatpush2.msra.mxu0 0.0
        %4296 = vmatprep.subr.mxu0 0.0
        %4297 = vmatpush2.msra.mxu0 0.0
        %4298 = vmatprep.subr.mxu0 0.0
        %4299 = vmatpush2.msra.mxu0 0.0
        %4300 = vmatprep.subr.mxu0 0.0
        %4301 = vmatpush2.msra.mxu0 0.0
        %4302 = vmatprep.subr.mxu0 0.0
        %4303 = vmatpush2.msra.mxu0 0.0
        %4304 = vmatprep.subr.mxu0 0.0
        %4305 = vmatpush2.msra.mxu0 0.0
        %4306 = vmatprep.subr.mxu0 0.0
        %4307 = vmatpush2.msra.mxu0 0.0
        %4308 = vmatprep.mubr.f32.mxu0 0.0
        %v4309 = vand.u32 %v3875, 4294901760
        %v4310 = vsub.f32 %v3875, %v4309
        %v4311 = vand.u32 %v4310, 4294901760
        %4312 = vmatmul.mubr.f32.gmra.mxu0 %v4311
        %v4313 = vpop.f32.mrf.mxu0
        %v4314 = vadd.f32 %v4208, %v4313
        %v4315 = vpop.f32.mrf.mxu0
        %4316 = vmatprep.mubr.f32.mxu0 0.0
        %v4317 = vand.u32 %v3878, 4294901760
        %v4318 = vsub.f32 %v3878, %v4317
        %v4319 = vand.u32 %v4318, 4294901760
        %4320 = vmatmul.mubr.f32.gmra.mxu0 %v4319
        %v4321 = vpop.f32.mrf.mxu0
        %v4322 = vadd.f32 %v4215, %v4321
        %v4323 = vpop.f32.mrf.mxu0
        %4324 = vmatprep.mubr.f32.mxu0 0.0
        %v4325 = vand.u32 %v3881, 4294901760
        %v4326 = vsub.f32 %v3881, %v4325
        %v4327 = vand.u32 %v4326, 4294901760
        %4328 = vmatmul.mubr.f32.gmra.mxu0 %v4327
        %v4329 = vpop.f32.mrf.mxu0
        %v4330 = vadd.f32 %v4222, %v4329
        %v4331 = vpop.f32.mrf.mxu0
        %4332 = vmatprep.mubr.f32.mxu0 0.0
        %v4333 = vand.u32 %v3884, 4294901760
        %v4334 = vsub.f32 %v3884, %v4333
        %v4335 = vand.u32 %v4334, 4294901760
        %4336 = vmatmul.mubr.f32.gmra.mxu0 %v4335
        %v4337 = vpop.f32.mrf.mxu0
        %v4338 = vadd.f32 %v4229, %v4337
        %v4339 = vpop.f32.mrf.mxu0
        %4340 = vmatprep.mubr.f32.mxu0 0.0
        %v4341 = vand.u32 %v3887, 4294901760
        %v4342 = vsub.f32 %v3887, %v4341
        %v4343 = vand.u32 %v4342, 4294901760
        %4344 = vmatmul.mubr.f32.gmra.mxu0 %v4343
        %v4345 = vpop.f32.mrf.mxu0
        %v4346 = vadd.f32 %v4236, %v4345
        %v4347 = vpop.f32.mrf.mxu0
        %4348 = vdwg.mxu0
        %4349 = vmatprep.subr.mxu0 0.0
        %4350 = vmatpush1.msra.mxu0 0.0
        %4351 = vmatprep.subr.mxu0 0.0
        %4352 = vmatpush1.msra.mxu0 0.0
        %4353 = vmatprep.subr.mxu0 0.0
        %4354 = vmatpush1.msra.mxu0 0.0
        %4355 = vmatprep.subr.mxu0 0.0
        %4356 = vmatpush1.msra.mxu0 0.0
        %4357 = vmatprep.subr.mxu0 0.0
        %4358 = vmatpush1.msra.mxu0 0.0
        %4359 = vmatprep.subr.mxu0 0.0
        %4360 = vmatpush1.msra.mxu0 0.0
        %4361 = vmatprep.subr.mxu0 0.0
        %4362 = vmatpush1.msra.mxu0 0.0
        %4363 = vmatprep.subr.mxu0 0.0
        %4364 = vmatpush1.msra.mxu0 0.0
        %4365 = vmatprep.subr.mxu0 0.0
        %4366 = vmatpush1.msra.mxu0 0.0
        %4367 = vmatprep.subr.mxu0 0.0
        %4368 = vmatpush1.msra.mxu0 0.0
        %4369 = vmatprep.subr.mxu0 0.0
        %4370 = vmatpush1.msra.mxu0 0.0
        %4371 = vmatprep.subr.mxu0 0.0
        %v4372 = vand.u32 %v3836, 4294901760
        %v4373 = vsub.f32 %v3836, %v4372
        %v4374 = vand.u32 %v4373, 4294901760
        %4375 = vmatpush1.msra.mxu0 %v4374
        %4376 = vmatprep.subr.mxu0 0.0
        %v4377 = vand.u32 %v3835, 4294901760
        %v4378 = vsub.f32 %v3835, %v4377
        %v4379 = vand.u32 %v4378, 4294901760
        %4380 = vmatpush1.msra.mxu0 %v4379
        %4381 = vmatprep.subr.mxu0 0.0
        %v4382 = vand.u32 %v3834, 4294901760
        %v4383 = vsub.f32 %v3834, %v4382
        %v4384 = vand.u32 %v4383, 4294901760
        %4385 = vmatpush1.msra.mxu0 %v4384
        %4386 = vmatprep.subr.mxu0 0.0
        %v4387 = vand.u32 %v3833, 4294901760
        %v4388 = vsub.f32 %v3833, %v4387
        %v4389 = vand.u32 %v4388, 4294901760
        %4390 = vmatpush1.msra.mxu0 %v4389
        %4391 = vmatprep.subr.mxu0 0.0
        %v4392 = vand.u32 %v3832, 4294901760
        %v4393 = vsub.f32 %v3832, %v4392
        %v4394 = vand.u32 %v4393, 4294901760
        %4395 = vmatpush1.msra.mxu0 %v4394
        %4396 = vmatprep.subr.mxu0 0.0
        %4397 = vmatpush2.msra.mxu0 0.0
        %4398 = vmatprep.subr.mxu0 0.0
        %4399 = vmatpush2.msra.mxu0 0.0
        %4400 = vmatprep.subr.mxu0 0.0
        %4401 = vmatpush2.msra.mxu0 0.0
        %4402 = vmatprep.subr.mxu0 0.0
        %4403 = vmatpush2.msra.mxu0 0.0
        %4404 = vmatprep.subr.mxu0 0.0
        %4405 = vmatpush2.msra.mxu0 0.0
        %4406 = vmatprep.subr.mxu0 0.0
        %4407 = vmatpush2.msra.mxu0 0.0
        %4408 = vmatprep.subr.mxu0 0.0
        %4409 = vmatpush2.msra.mxu0 0.0
        %4410 = vmatprep.subr.mxu0 0.0
        %4411 = vmatpush2.msra.mxu0 0.0
        %4412 = vmatprep.subr.mxu0 0.0
        %4413 = vmatpush2.msra.mxu0 0.0
        %4414 = vmatprep.subr.mxu0 0.0
        %4415 = vmatpush2.msra.mxu0 0.0
        %4416 = vmatprep.subr.mxu0 0.0
        %4417 = vmatpush2.msra.mxu0 0.0
        %4418 = vmatprep.subr.mxu0 0.0
        %4419 = vmatpush2.msra.mxu0 0.0
        %4420 = vmatprep.subr.mxu0 0.0
        %4421 = vmatpush2.msra.mxu0 0.0
        %4422 = vmatprep.subr.mxu0 0.0
        %4423 = vmatpush2.msra.mxu0 0.0
        %4424 = vmatprep.subr.mxu0 0.0
        %4425 = vmatpush2.msra.mxu0 0.0
        %4426 = vmatprep.subr.mxu0 0.0
        %4427 = vmatpush2.msra.mxu0 0.0
        %4428 = vmatprep.mubr.f32.mxu0 0.0
        %v4429 = vand.u32 %v3875, 4294901760
        %4430 = vmatmul.mubr.f32.gmra.mxu0 %v4429
        %v4431 = vpop.f32.mrf.mxu0
        %v4432 = vadd.f32 %v4314, %v4431
        %v4433 = vpop.f32.mrf.mxu0
        %4434 = vmatprep.mubr.f32.mxu0 0.0
        %v4435 = vand.u32 %v3878, 4294901760
        %4436 = vmatmul.mubr.f32.gmra.mxu0 %v4435
        %v4437 = vpop.f32.mrf.mxu0
        %v4438 = vadd.f32 %v4322, %v4437
        %v4439 = vpop.f32.mrf.mxu0
        %4440 = vmatprep.mubr.f32.mxu0 0.0
        %v4441 = vand.u32 %v3881, 4294901760
        %4442 = vmatmul.mubr.f32.gmra.mxu0 %v4441
        %v4443 = vpop.f32.mrf.mxu0
        %v4444 = vadd.f32 %v4330, %v4443
        %v4445 = vpop.f32.mrf.mxu0
        %4446 = vmatprep.mubr.f32.mxu0 0.0
        %v4447 = vand.u32 %v3884, 4294901760
        %4448 = vmatmul.mubr.f32.gmra.mxu0 %v4447
        %v4449 = vpop.f32.mrf.mxu0
        %v4450 = vadd.f32 %v4338, %v4449
        %v4451 = vpop.f32.mrf.mxu0
        %4452 = vmatprep.mubr.f32.mxu0 0.0
        %v4453 = vand.u32 %v3887, 4294901760
        %4454 = vmatmul.mubr.f32.gmra.mxu0 %v4453
        %v4455 = vpop.f32.mrf.mxu0
        %v4456 = vadd.f32 %v4346, %v4455
        %v4457 = vpop.f32.mrf.mxu0
        %4458 = vdwg.mxu0
        %4459 = vmatprep.subr.mxu0 0.0
        %4460 = vmatpush1.msra.mxu0 0.0
        %4461 = vmatprep.subr.mxu0 0.0
        %4462 = vmatpush1.msra.mxu0 0.0
        %4463 = vmatprep.subr.mxu0 0.0
        %4464 = vmatpush1.msra.mxu0 0.0
        %4465 = vmatprep.subr.mxu0 0.0
        %4466 = vmatpush1.msra.mxu0 0.0
        %4467 = vmatprep.subr.mxu0 0.0
        %4468 = vmatpush1.msra.mxu0 0.0
        %4469 = vmatprep.subr.mxu0 0.0
        %4470 = vmatpush1.msra.mxu0 0.0
        %4471 = vmatprep.subr.mxu0 0.0
        %4472 = vmatpush1.msra.mxu0 0.0
        %4473 = vmatprep.subr.mxu0 0.0
        %4474 = vmatpush1.msra.mxu0 0.0
        %4475 = vmatprep.subr.mxu0 0.0
        %4476 = vmatpush1.msra.mxu0 0.0
        %4477 = vmatprep.subr.mxu0 0.0
        %4478 = vmatpush1.msra.mxu0 0.0
        %4479 = vmatprep.subr.mxu0 0.0
        %4480 = vmatpush1.msra.mxu0 0.0
        %4481 = vmatprep.subr.mxu0 0.0
        %v4482 = vand.u32 %v3836, 4294901760
        %4483 = vmatpush1.msra.mxu0 %v4482
        %4484 = vmatprep.subr.mxu0 0.0
        %v4485 = vand.u32 %v3835, 4294901760
        %4486 = vmatpush1.msra.mxu0 %v4485
        %4487 = vmatprep.subr.mxu0 0.0
        %v4488 = vand.u32 %v3834, 4294901760
        %4489 = vmatpush1.msra.mxu0 %v4488
        %4490 = vmatprep.subr.mxu0 0.0
        %v4491 = vand.u32 %v3833, 4294901760
        %4492 = vmatpush1.msra.mxu0 %v4491
        %4493 = vmatprep.subr.mxu0 0.0
        %v4494 = vand.u32 %v3832, 4294901760
        %4495 = vmatpush1.msra.mxu0 %v4494
        %4496 = vmatprep.subr.mxu0 0.0
        %4497 = vmatpush2.msra.mxu0 0.0
        %4498 = vmatprep.subr.mxu0 0.0
        %4499 = vmatpush2.msra.mxu0 0.0
        %4500 = vmatprep.subr.mxu0 0.0
        %4501 = vmatpush2.msra.mxu0 0.0
        %4502 = vmatprep.subr.mxu0 0.0
        %4503 = vmatpush2.msra.mxu0 0.0
        %4504 = vmatprep.subr.mxu0 0.0
        %4505 = vmatpush2.msra.mxu0 0.0
        %4506 = vmatprep.subr.mxu0 0.0
        %4507 = vmatpush2.msra.mxu0 0.0
        %4508 = vmatprep.subr.mxu0 0.0
        %4509 = vmatpush2.msra.mxu0 0.0
        %4510 = vmatprep.subr.mxu0 0.0
        %4511 = vmatpush2.msra.mxu0 0.0
        %4512 = vmatprep.subr.mxu0 0.0
        %4513 = vmatpush2.msra.mxu0 0.0
        %4514 = vmatprep.subr.mxu0 0.0
        %4515 = vmatpush2.msra.mxu0 0.0
        %4516 = vmatprep.subr.mxu0 0.0
        %4517 = vmatpush2.msra.mxu0 0.0
        %4518 = vmatprep.subr.mxu0 0.0
        %4519 = vmatpush2.msra.mxu0 0.0
        %4520 = vmatprep.subr.mxu0 0.0
        %4521 = vmatpush2.msra.mxu0 0.0
        %4522 = vmatprep.subr.mxu0 0.0
        %4523 = vmatpush2.msra.mxu0 0.0
        %4524 = vmatprep.subr.mxu0 0.0
        %4525 = vmatpush2.msra.mxu0 0.0
        %4526 = vmatprep.subr.mxu0 0.0
        %4527 = vmatpush2.msra.mxu0 0.0
        %4528 = vmatprep.mubr.f32.mxu0 0.0
        %v4529 = vand.u32 %v3875, 4294901760
        %4530 = vmatmul.mubr.f32.gmra.mxu0 %v4529
        %v4531 = vpop.f32.mrf.mxu0
        %v4532 = vadd.f32 %v4432, %v4531
        %v4533 = vpop.f32.mrf.mxu0
        %4534 = vmatprep.mubr.f32.mxu0 0.0
        %v4535 = vand.u32 %v3878, 4294901760
        %4536 = vmatmul.mubr.f32.gmra.mxu0 %v4535
        %v4537 = vpop.f32.mrf.mxu0
        %v4538 = vadd.f32 %v4438, %v4537
        %v4539 = vpop.f32.mrf.mxu0
        %4540 = vmatprep.mubr.f32.mxu0 0.0
        %v4541 = vand.u32 %v3881, 4294901760
        %4542 = vmatmul.mubr.f32.gmra.mxu0 %v4541
        %v4543 = vpop.f32.mrf.mxu0
        %v4544 = vadd.f32 %v4444, %v4543
        %v4545 = vpop.f32.mrf.mxu0
        %4546 = vmatprep.mubr.f32.mxu0 0.0
        %v4547 = vand.u32 %v3884, 4294901760
        %4548 = vmatmul.mubr.f32.gmra.mxu0 %v4547
        %v4549 = vpop.f32.mrf.mxu0
        %v4550 = vadd.f32 %v4450, %v4549
        %v4551 = vpop.f32.mrf.mxu0
        %4552 = vmatprep.mubr.f32.mxu0 0.0
        %v4553 = vand.u32 %v3887, 4294901760
        %4554 = vmatmul.mubr.f32.gmra.mxu0 %v4553
        %v4555 = vpop.f32.mrf.mxu0
        %v4556 = vadd.f32 %v4456, %v4555
        %v4557 = vpop.f32.mrf.mxu0
        %4558 = vdwg.mxu0
        %v4559 = vtanh.pop %v4532
        %v4560 = vtanh.pop %v4538
        %v4561 = vtanh.pop %v4544
        %v4562 = vtanh.pop %v4550
        %v4563 = vtanh.pop %v4556
        %v4565 = vsel %vm965, %v253, 0
        %4567 = vmatprep.subr.mxu0 0.0
        %4568 = vmatpush1.msra.mxu0 0.0
        %4569 = vmatprep.subr.mxu0 0.0
        %4570 = vmatpush1.msra.mxu0 0.0
        %4571 = vmatprep.subr.mxu0 0.0
        %4572 = vmatpush1.msra.mxu0 0.0
        %4573 = vmatprep.subr.mxu0 0.0
        %4574 = vmatpush1.msra.mxu0 0.0
        %4575 = vmatprep.subr.mxu0 0.0
        %4576 = vmatpush1.msra.mxu0 0.0
        %4577 = vmatprep.subr.mxu0 0.0
        %4578 = vmatpush1.msra.mxu0 0.0
        %4579 = vmatprep.subr.mxu0 0.0
        %4580 = vmatpush1.msra.mxu0 0.0
        %4581 = vmatprep.subr.mxu0 0.0
        %4582 = vmatpush1.msra.mxu0 0.0
        %4583 = vmatprep.subr.mxu0 0.0
        %4584 = vmatpush1.msra.mxu0 0.0
        %4585 = vmatprep.subr.mxu0 0.0
        %4586 = vmatpush1.msra.mxu0 0.0
        %4587 = vmatprep.subr.mxu0 0.0
        %4588 = vmatpush1.msra.mxu0 0.0
        %4589 = vmatprep.subr.mxu0 0.0
        %v4590 = vand.u32 %v4563, 4294901760
        %4591 = vmatpush1.msra.mxu0 %v4590
        %4592 = vmatprep.subr.mxu0 0.0
        %v4593 = vand.u32 %v4562, 4294901760
        %4594 = vmatpush1.msra.mxu0 %v4593
        %4595 = vmatprep.subr.mxu0 0.0
        %v4596 = vand.u32 %v4561, 4294901760
        %4597 = vmatpush1.msra.mxu0 %v4596
        %4598 = vmatprep.subr.mxu0 0.0
        %v4599 = vand.u32 %v4560, 4294901760
        %4600 = vmatpush1.msra.mxu0 %v4599
        %4601 = vmatprep.subr.mxu0 0.0
        %v4602 = vand.u32 %v4559, 4294901760
        %4603 = vmatpush1.msra.mxu0 %v4602
        %4604 = vmatprep.subr.mxu0 0.0
        %4605 = vmatpush2.msra.mxu0 0.0
        %4606 = vmatprep.subr.mxu0 0.0
        %4607 = vmatpush2.msra.mxu0 0.0
        %4608 = vmatprep.subr.mxu0 0.0
        %4609 = vmatpush2.msra.mxu0 0.0
        %4610 = vmatprep.subr.mxu0 0.0
        %4611 = vmatpush2.msra.mxu0 0.0
        %4612 = vmatprep.subr.mxu0 0.0
        %4613 = vmatpush2.msra.mxu0 0.0
        %4614 = vmatprep.subr.mxu0 0.0
        %4615 = vmatpush2.msra.mxu0 0.0
        %4616 = vmatprep.subr.mxu0 0.0
        %4617 = vmatpush2.msra.mxu0 0.0
        %4618 = vmatprep.subr.mxu0 0.0
        %4619 = vmatpush2.msra.mxu0 0.0
        %4620 = vmatprep.subr.mxu0 0.0
        %4621 = vmatpush2.msra.mxu0 0.0
        %4622 = vmatprep.subr.mxu0 0.0
        %4623 = vmatpush2.msra.mxu0 0.0
        %4624 = vmatprep.subr.mxu0 0.0
        %4625 = vmatpush2.msra.mxu0 0.0
        %4626 = vmatprep.subr.mxu0 0.0
        %4627 = vmatpush2.msra.mxu0 0.0
        %4628 = vmatprep.subr.mxu0 0.0
        %4629 = vmatpush2.msra.mxu0 0.0
        %4630 = vmatprep.subr.mxu0 0.0
        %4631 = vmatpush2.msra.mxu0 0.0
        %4632 = vmatprep.subr.mxu0 0.0
        %4633 = vmatpush2.msra.mxu0 0.0
        %4634 = vmatprep.subr.mxu0 0.0
        %4635 = vmatpush2.msra.mxu0 0.0
        %4636 = vmatprep.mubr.f32.mxu0 0.0
        %v4637 = vand.u32 %v4565, 4294901760
        %v4638 = vsub.f32 %v4565, %v4637
        %v4639 = vand.u32 %v4638, 4294901760
        %v4640 = vsub.f32 %v4638, %v4639
        %v4641 = vand.u32 %v4640, 4294901760
        %4642 = vmatmul.mubr.f32.gmra.mxu0 %v4641
        %v4643 = vpop.f32.mrf.mxu0
        %v4644 = vadd.f32 0.0, %v4643
        %v4645 = vpop.f32.mrf.mxu0
        %4646 = vdwg.mxu0
        %4647 = vmatprep.subr.mxu0 0.0
        %4648 = vmatpush1.msra.mxu0 0.0
        %4649 = vmatprep.subr.mxu0 0.0
        %4650 = vmatpush1.msra.mxu0 0.0
        %4651 = vmatprep.subr.mxu0 0.0
        %4652 = vmatpush1.msra.mxu0 0.0
        %4653 = vmatprep.subr.mxu0 0.0
        %4654 = vmatpush1.msra.mxu0 0.0
        %4655 = vmatprep.subr.mxu0 0.0
        %4656 = vmatpush1.msra.mxu0 0.0
        %4657 = vmatprep.subr.mxu0 0.0
        %4658 = vmatpush1.msra.mxu0 0.0
        %4659 = vmatprep.subr.mxu0 0.0
        %4660 = vmatpush1.msra.mxu0 0.0
        %4661 = vmatprep.subr.mxu0 0.0
        %4662 = vmatpush1.msra.mxu0 0.0
        %4663 = vmatprep.subr.mxu0 0.0
        %4664 = vmatpush1.msra.mxu0 0.0
        %4665 = vmatprep.subr.mxu0 0.0
        %4666 = vmatpush1.msra.mxu0 0.0
        %4667 = vmatprep.subr.mxu0 0.0
        %4668 = vmatpush1.msra.mxu0 0.0
        %4669 = vmatprep.subr.mxu0 0.0
        %v4670 = vand.u32 %v4563, 4294901760
        %v4671 = vsub.f32 %v4563, %v4670
        %v4672 = vand.u32 %v4671, 4294901760
        %v4673 = vsub.f32 %v4671, %v4672
        %v4674 = vand.u32 %v4673, 4294901760
        %4675 = vmatpush1.msra.mxu0 %v4674
        %4676 = vmatprep.subr.mxu0 0.0
        %v4677 = vand.u32 %v4562, 4294901760
        %v4678 = vsub.f32 %v4562, %v4677
        %v4679 = vand.u32 %v4678, 4294901760
        %v4680 = vsub.f32 %v4678, %v4679
        %v4681 = vand.u32 %v4680, 4294901760
        %4682 = vmatpush1.msra.mxu0 %v4681
        %4683 = vmatprep.subr.mxu0 0.0
        %v4684 = vand.u32 %v4561, 4294901760
        %v4685 = vsub.f32 %v4561, %v4684
        %v4686 = vand.u32 %v4685, 4294901760
        %v4687 = vsub.f32 %v4685, %v4686
        %v4688 = vand.u32 %v4687, 4294901760
        %4689 = vmatpush1.msra.mxu0 %v4688
        %4690 = vmatprep.subr.mxu0 0.0
        %v4691 = vand.u32 %v4560, 4294901760
        %v4692 = vsub.f32 %v4560, %v4691
        %v4693 = vand.u32 %v4692, 4294901760
        %v4694 = vsub.f32 %v4692, %v4693
        %v4695 = vand.u32 %v4694, 4294901760
        %4696 = vmatpush1.msra.mxu0 %v4695
        %4697 = vmatprep.subr.mxu0 0.0
        %v4698 = vand.u32 %v4559, 4294901760
        %v4699 = vsub.f32 %v4559, %v4698
        %v4700 = vand.u32 %v4699, 4294901760
        %v4701 = vsub.f32 %v4699, %v4700
        %v4702 = vand.u32 %v4701, 4294901760
        %4703 = vmatpush1.msra.mxu0 %v4702
        %4704 = vmatprep.subr.mxu0 0.0
        %4705 = vmatpush2.msra.mxu0 0.0
        %4706 = vmatprep.subr.mxu0 0.0
        %4707 = vmatpush2.msra.mxu0 0.0
        %4708 = vmatprep.subr.mxu0 0.0
        %4709 = vmatpush2.msra.mxu0 0.0
        %4710 = vmatprep.subr.mxu0 0.0
        %4711 = vmatpush2.msra.mxu0 0.0
        %4712 = vmatprep.subr.mxu0 0.0
        %4713 = vmatpush2.msra.mxu0 0.0
        %4714 = vmatprep.subr.mxu0 0.0
        %4715 = vmatpush2.msra.mxu0 0.0
        %4716 = vmatprep.subr.mxu0 0.0
        %4717 = vmatpush2.msra.mxu0 0.0
        %4718 = vmatprep.subr.mxu0 0.0
        %4719 = vmatpush2.msra.mxu0 0.0
        %4720 = vmatprep.subr.mxu0 0.0
        %4721 = vmatpush2.msra.mxu0 0.0
        %4722 = vmatprep.subr.mxu0 0.0
        %4723 = vmatpush2.msra.mxu0 0.0
        %4724 = vmatprep.subr.mxu0 0.0
        %4725 = vmatpush2.msra.mxu0 0.0
        %4726 = vmatprep.subr.mxu0 0.0
        %4727 = vmatpush2.msra.mxu0 0.0
        %4728 = vmatprep.subr.mxu0 0.0
        %4729 = vmatpush2.msra.mxu0 0.0
        %4730 = vmatprep.subr.mxu0 0.0
        %4731 = vmatpush2.msra.mxu0 0.0
        %4732 = vmatprep.subr.mxu0 0.0
        %4733 = vmatpush2.msra.mxu0 0.0
        %4734 = vmatprep.subr.mxu0 0.0
        %4735 = vmatpush2.msra.mxu0 0.0
        %4736 = vmatprep.mubr.f32.mxu0 0.0
        %v4737 = vand.u32 %v4565, 4294901760
        %4738 = vmatmul.mubr.f32.gmra.mxu0 %v4737
        %v4739 = vpop.f32.mrf.mxu0
        %v4740 = vadd.f32 %v4644, %v4739
        %v4741 = vpop.f32.mrf.mxu0
        %4742 = vdwg.mxu0
        %4743 = vmatprep.subr.mxu0 0.0
        %4744 = vmatpush1.msra.mxu0 0.0
        %4745 = vmatprep.subr.mxu0 0.0
        %4746 = vmatpush1.msra.mxu0 0.0
        %4747 = vmatprep.subr.mxu0 0.0
        %4748 = vmatpush1.msra.mxu0 0.0
        %4749 = vmatprep.subr.mxu0 0.0
        %4750 = vmatpush1.msra.mxu0 0.0
        %4751 = vmatprep.subr.mxu0 0.0
        %4752 = vmatpush1.msra.mxu0 0.0
        %4753 = vmatprep.subr.mxu0 0.0
        %4754 = vmatpush1.msra.mxu0 0.0
        %4755 = vmatprep.subr.mxu0 0.0
        %4756 = vmatpush1.msra.mxu0 0.0
        %4757 = vmatprep.subr.mxu0 0.0
        %4758 = vmatpush1.msra.mxu0 0.0
        %4759 = vmatprep.subr.mxu0 0.0
        %4760 = vmatpush1.msra.mxu0 0.0
        %4761 = vmatprep.subr.mxu0 0.0
        %4762 = vmatpush1.msra.mxu0 0.0
        %4763 = vmatprep.subr.mxu0 0.0
        %4764 = vmatpush1.msra.mxu0 0.0
        %4765 = vmatprep.subr.mxu0 0.0
        %v4766 = vand.u32 %v4563, 4294901760
        %v4767 = vsub.f32 %v4563, %v4766
        %4768 = vmatpush1.msra.mxu0 %v4767
        %4769 = vmatprep.subr.mxu0 0.0
        %v4770 = vand.u32 %v4562, 4294901760
        %v4771 = vsub.f32 %v4562, %v4770
        %4772 = vmatpush1.msra.mxu0 %v4771
        %4773 = vmatprep.subr.mxu0 0.0
        %v4774 = vand.u32 %v4561, 4294901760
        %v4775 = vsub.f32 %v4561, %v4774
        %4776 = vmatpush1.msra.mxu0 %v4775
        %4777 = vmatprep.subr.mxu0 0.0
        %v4778 = vand.u32 %v4560, 4294901760
        %v4779 = vsub.f32 %v4560, %v4778
        %4780 = vmatpush1.msra.mxu0 %v4779
        %4781 = vmatprep.subr.mxu0 0.0
        %v4782 = vand.u32 %v4559, 4294901760
        %v4783 = vsub.f32 %v4559, %v4782
        %4784 = vmatpush1.msra.mxu0 %v4783
        %4785 = vmatprep.subr.mxu0 0.0
        %4786 = vmatpush2.msra.mxu0 0.0
        %4787 = vmatprep.subr.mxu0 0.0
        %4788 = vmatpush2.msra.mxu0 0.0
        %4789 = vmatprep.subr.mxu0 0.0
        %4790 = vmatpush2.msra.mxu0 0.0
        %4791 = vmatprep.subr.mxu0 0.0
        %4792 = vmatpush2.msra.mxu0 0.0
        %4793 = vmatprep.subr.mxu0 0.0
        %4794 = vmatpush2.msra.mxu0 0.0
        %4795 = vmatprep.subr.mxu0 0.0
        %4796 = vmatpush2.msra.mxu0 0.0
        %4797 = vmatprep.subr.mxu0 0.0
        %4798 = vmatpush2.msra.mxu0 0.0
        %4799 = vmatprep.subr.mxu0 0.0
        %4800 = vmatpush2.msra.mxu0 0.0
        %4801 = vmatprep.subr.mxu0 0.0
        %4802 = vmatpush2.msra.mxu0 0.0
        %4803 = vmatprep.subr.mxu0 0.0
        %4804 = vmatpush2.msra.mxu0 0.0
        %4805 = vmatprep.subr.mxu0 0.0
        %4806 = vmatpush2.msra.mxu0 0.0
        %4807 = vmatprep.subr.mxu0 0.0
        %4808 = vmatpush2.msra.mxu0 0.0
        %4809 = vmatprep.subr.mxu0 0.0
        %4810 = vmatpush2.msra.mxu0 0.0
        %4811 = vmatprep.subr.mxu0 0.0
        %4812 = vmatpush2.msra.mxu0 0.0
        %4813 = vmatprep.subr.mxu0 0.0
        %4814 = vmatpush2.msra.mxu0 0.0
        %4815 = vmatprep.subr.mxu0 0.0
        %4816 = vmatpush2.msra.mxu0 0.0
        %4817 = vmatprep.mubr.f32.mxu0 0.0
        %v4818 = vand.u32 %v4565, 4294901760
        %v4819 = vsub.f32 %v4565, %v4818
        %4820 = vmatmul.mubr.f32.gmra.mxu0 %v4819
        %v4821 = vpop.f32.mrf.mxu0
        %v4822 = vadd.f32 %v4740, %v4821
        %v4823 = vpop.f32.mrf.mxu0
        %4824 = vdwg.mxu0
        %4825 = vmatprep.subr.mxu0 0.0
        %4826 = vmatpush1.msra.mxu0 0.0
        %4827 = vmatprep.subr.mxu0 0.0
        %4828 = vmatpush1.msra.mxu0 0.0
        %4829 = vmatprep.subr.mxu0 0.0
        %4830 = vmatpush1.msra.mxu0 0.0
        %4831 = vmatprep.subr.mxu0 0.0
        %4832 = vmatpush1.msra.mxu0 0.0
        %4833 = vmatprep.subr.mxu0 0.0
        %4834 = vmatpush1.msra.mxu0 0.0
        %4835 = vmatprep.subr.mxu0 0.0
        %4836 = vmatpush1.msra.mxu0 0.0
        %4837 = vmatprep.subr.mxu0 0.0
        %4838 = vmatpush1.msra.mxu0 0.0
        %4839 = vmatprep.subr.mxu0 0.0
        %4840 = vmatpush1.msra.mxu0 0.0
        %4841 = vmatprep.subr.mxu0 0.0
        %4842 = vmatpush1.msra.mxu0 0.0
        %4843 = vmatprep.subr.mxu0 0.0
        %4844 = vmatpush1.msra.mxu0 0.0
        %4845 = vmatprep.subr.mxu0 0.0
        %4846 = vmatpush1.msra.mxu0 0.0
        %4847 = vmatprep.subr.mxu0 0.0
        %v4848 = vand.u32 %v4563, 4294901760
        %4849 = vmatpush1.msra.mxu0 %v4848
        %4850 = vmatprep.subr.mxu0 0.0
        %v4851 = vand.u32 %v4562, 4294901760
        %4852 = vmatpush1.msra.mxu0 %v4851
        %4853 = vmatprep.subr.mxu0 0.0
        %v4854 = vand.u32 %v4561, 4294901760
        %4855 = vmatpush1.msra.mxu0 %v4854
        %4856 = vmatprep.subr.mxu0 0.0
        %v4857 = vand.u32 %v4560, 4294901760
        %4858 = vmatpush1.msra.mxu0 %v4857
        %4859 = vmatprep.subr.mxu0 0.0
        %v4860 = vand.u32 %v4559, 4294901760
        %4861 = vmatpush1.msra.mxu0 %v4860
        %4862 = vmatprep.subr.mxu0 0.0
        %4863 = vmatpush2.msra.mxu0 0.0
        %4864 = vmatprep.subr.mxu0 0.0
        %4865 = vmatpush2.msra.mxu0 0.0
        %4866 = vmatprep.subr.mxu0 0.0
        %4867 = vmatpush2.msra.mxu0 0.0
        %4868 = vmatprep.subr.mxu0 0.0
        %4869 = vmatpush2.msra.mxu0 0.0
        %4870 = vmatprep.subr.mxu0 0.0
        %4871 = vmatpush2.msra.mxu0 0.0
        %4872 = vmatprep.subr.mxu0 0.0
        %4873 = vmatpush2.msra.mxu0 0.0
        %4874 = vmatprep.subr.mxu0 0.0
        %4875 = vmatpush2.msra.mxu0 0.0
        %4876 = vmatprep.subr.mxu0 0.0
        %4877 = vmatpush2.msra.mxu0 0.0
        %4878 = vmatprep.subr.mxu0 0.0
        %4879 = vmatpush2.msra.mxu0 0.0
        %4880 = vmatprep.subr.mxu0 0.0
        %4881 = vmatpush2.msra.mxu0 0.0
        %4882 = vmatprep.subr.mxu0 0.0
        %4883 = vmatpush2.msra.mxu0 0.0
        %4884 = vmatprep.subr.mxu0 0.0
        %4885 = vmatpush2.msra.mxu0 0.0
        %4886 = vmatprep.subr.mxu0 0.0
        %4887 = vmatpush2.msra.mxu0 0.0
        %4888 = vmatprep.subr.mxu0 0.0
        %4889 = vmatpush2.msra.mxu0 0.0
        %4890 = vmatprep.subr.mxu0 0.0
        %4891 = vmatpush2.msra.mxu0 0.0
        %4892 = vmatprep.subr.mxu0 0.0
        %4893 = vmatpush2.msra.mxu0 0.0
        %4894 = vmatprep.mubr.f32.mxu0 0.0
        %v4895 = vand.u32 %v4565, 4294901760
        %v4896 = vsub.f32 %v4565, %v4895
        %v4897 = vand.u32 %v4896, 4294901760
        %4898 = vmatmul.mubr.f32.gmra.mxu0 %v4897
        %v4899 = vpop.f32.mrf.mxu0
        %v4900 = vadd.f32 %v4822, %v4899
        %v4901 = vpop.f32.mrf.mxu0
        %4902 = vdwg.mxu0
        %4903 = vmatprep.subr.mxu0 0.0
        %4904 = vmatpush1.msra.mxu0 0.0
        %4905 = vmatprep.subr.mxu0 0.0
        %4906 = vmatpush1.msra.mxu0 0.0
        %4907 = vmatprep.subr.mxu0 0.0
        %4908 = vmatpush1.msra.mxu0 0.0
        %4909 = vmatprep.subr.mxu0 0.0
        %4910 = vmatpush1.msra.mxu0 0.0
        %4911 = vmatprep.subr.mxu0 0.0
        %4912 = vmatpush1.msra.mxu0 0.0
        %4913 = vmatprep.subr.mxu0 0.0
        %4914 = vmatpush1.msra.mxu0 0.0
        %4915 = vmatprep.subr.mxu0 0.0
        %4916 = vmatpush1.msra.mxu0 0.0
        %4917 = vmatprep.subr.mxu0 0.0
        %4918 = vmatpush1.msra.mxu0 0.0
        %4919 = vmatprep.subr.mxu0 0.0
        %4920 = vmatpush1.msra.mxu0 0.0
        %4921 = vmatprep.subr.mxu0 0.0
        %4922 = vmatpush1.msra.mxu0 0.0
        %4923 = vmatprep.subr.mxu0 0.0
        %4924 = vmatpush1.msra.mxu0 0.0
        %4925 = vmatprep.subr.mxu0 0.0
        %v4926 = vand.u32 %v4563, 4294901760
        %v4927 = vsub.f32 %v4563, %v4926
        %v4928 = vand.u32 %v4927, 4294901760
        %4929 = vmatpush1.msra.mxu0 %v4928
        %4930 = vmatprep.subr.mxu0 0.0
        %v4931 = vand.u32 %v4562, 4294901760
        %v4932 = vsub.f32 %v4562, %v4931
        %v4933 = vand.u32 %v4932, 4294901760
        %4934 = vmatpush1.msra.mxu0 %v4933
        %4935 = vmatprep.subr.mxu0 0.0
        %v4936 = vand.u32 %v4561, 4294901760
        %v4937 = vsub.f32 %v4561, %v4936
        %v4938 = vand.u32 %v4937, 4294901760
        %4939 = vmatpush1.msra.mxu0 %v4938
        %4940 = vmatprep.subr.mxu0 0.0
        %v4941 = vand.u32 %v4560, 4294901760
        %v4942 = vsub.f32 %v4560, %v4941
        %v4943 = vand.u32 %v4942, 4294901760
        %4944 = vmatpush1.msra.mxu0 %v4943
        %4945 = vmatprep.subr.mxu0 0.0
        %v4946 = vand.u32 %v4559, 4294901760
        %v4947 = vsub.f32 %v4559, %v4946
        %v4948 = vand.u32 %v4947, 4294901760
        %4949 = vmatpush1.msra.mxu0 %v4948
        %4950 = vmatprep.subr.mxu0 0.0
        %4951 = vmatpush2.msra.mxu0 0.0
        %4952 = vmatprep.subr.mxu0 0.0
        %4953 = vmatpush2.msra.mxu0 0.0
        %4954 = vmatprep.subr.mxu0 0.0
        %4955 = vmatpush2.msra.mxu0 0.0
        %4956 = vmatprep.subr.mxu0 0.0
        %4957 = vmatpush2.msra.mxu0 0.0
        %4958 = vmatprep.subr.mxu0 0.0
        %4959 = vmatpush2.msra.mxu0 0.0
        %4960 = vmatprep.subr.mxu0 0.0
        %4961 = vmatpush2.msra.mxu0 0.0
        %4962 = vmatprep.subr.mxu0 0.0
        %4963 = vmatpush2.msra.mxu0 0.0
        %4964 = vmatprep.subr.mxu0 0.0
        %4965 = vmatpush2.msra.mxu0 0.0
        %4966 = vmatprep.subr.mxu0 0.0
        %4967 = vmatpush2.msra.mxu0 0.0
        %4968 = vmatprep.subr.mxu0 0.0
        %4969 = vmatpush2.msra.mxu0 0.0
        %4970 = vmatprep.subr.mxu0 0.0
        %4971 = vmatpush2.msra.mxu0 0.0
        %4972 = vmatprep.subr.mxu0 0.0
        %4973 = vmatpush2.msra.mxu0 0.0
        %4974 = vmatprep.subr.mxu0 0.0
        %4975 = vmatpush2.msra.mxu0 0.0
        %4976 = vmatprep.subr.mxu0 0.0
        %4977 = vmatpush2.msra.mxu0 0.0
        %4978 = vmatprep.subr.mxu0 0.0
        %4979 = vmatpush2.msra.mxu0 0.0
        %4980 = vmatprep.subr.mxu0 0.0
        %4981 = vmatpush2.msra.mxu0 0.0
        %4982 = vmatprep.mubr.f32.mxu0 0.0
        %v4983 = vand.u32 %v4565, 4294901760
        %4984 = vmatmul.mubr.f32.gmra.mxu0 %v4983
        %v4985 = vpop.f32.mrf.mxu0
        %v4986 = vadd.f32 %v4900, %v4985
        %v4987 = vpop.f32.mrf.mxu0
        %4988 = vdwg.mxu0
        %4989 = vmatprep.subr.mxu0 0.0
        %4990 = vmatpush1.msra.mxu0 0.0
        %4991 = vmatprep.subr.mxu0 0.0
        %4992 = vmatpush1.msra.mxu0 0.0
        %4993 = vmatprep.subr.mxu0 0.0
        %4994 = vmatpush1.msra.mxu0 0.0
        %4995 = vmatprep.subr.mxu0 0.0
        %4996 = vmatpush1.msra.mxu0 0.0
        %4997 = vmatprep.subr.mxu0 0.0
        %4998 = vmatpush1.msra.mxu0 0.0
        %4999 = vmatprep.subr.mxu0 0.0
        %5000 = vmatpush1.msra.mxu0 0.0
        %5001 = vmatprep.subr.mxu0 0.0
        %5002 = vmatpush1.msra.mxu0 0.0
        %5003 = vmatprep.subr.mxu0 0.0
        %5004 = vmatpush1.msra.mxu0 0.0
        %5005 = vmatprep.subr.mxu0 0.0
        %5006 = vmatpush1.msra.mxu0 0.0
        %5007 = vmatprep.subr.mxu0 0.0
        %5008 = vmatpush1.msra.mxu0 0.0
        %5009 = vmatprep.subr.mxu0 0.0
        %5010 = vmatpush1.msra.mxu0 0.0
        %5011 = vmatprep.subr.mxu0 0.0
        %v5012 = vand.u32 %v4563, 4294901760
        %5013 = vmatpush1.msra.mxu0 %v5012
        %5014 = vmatprep.subr.mxu0 0.0
        %v5015 = vand.u32 %v4562, 4294901760
        %5016 = vmatpush1.msra.mxu0 %v5015
        %5017 = vmatprep.subr.mxu0 0.0
        %v5018 = vand.u32 %v4561, 4294901760
        %5019 = vmatpush1.msra.mxu0 %v5018
        %5020 = vmatprep.subr.mxu0 0.0
        %v5021 = vand.u32 %v4560, 4294901760
        %5022 = vmatpush1.msra.mxu0 %v5021
        %5023 = vmatprep.subr.mxu0 0.0
        %v5024 = vand.u32 %v4559, 4294901760
        %5025 = vmatpush1.msra.mxu0 %v5024
        %5026 = vmatprep.subr.mxu0 0.0
        %5027 = vmatpush2.msra.mxu0 0.0
        %5028 = vmatprep.subr.mxu0 0.0
        %5029 = vmatpush2.msra.mxu0 0.0
        %5030 = vmatprep.subr.mxu0 0.0
        %5031 = vmatpush2.msra.mxu0 0.0
        %5032 = vmatprep.subr.mxu0 0.0
        %5033 = vmatpush2.msra.mxu0 0.0
        %5034 = vmatprep.subr.mxu0 0.0
        %5035 = vmatpush2.msra.mxu0 0.0
        %5036 = vmatprep.subr.mxu0 0.0
        %5037 = vmatpush2.msra.mxu0 0.0
        %5038 = vmatprep.subr.mxu0 0.0
        %5039 = vmatpush2.msra.mxu0 0.0
        %5040 = vmatprep.subr.mxu0 0.0
        %5041 = vmatpush2.msra.mxu0 0.0
        %5042 = vmatprep.subr.mxu0 0.0
        %5043 = vmatpush2.msra.mxu0 0.0
        %5044 = vmatprep.subr.mxu0 0.0
        %5045 = vmatpush2.msra.mxu0 0.0
        %5046 = vmatprep.subr.mxu0 0.0
        %5047 = vmatpush2.msra.mxu0 0.0
        %5048 = vmatprep.subr.mxu0 0.0
        %5049 = vmatpush2.msra.mxu0 0.0
        %5050 = vmatprep.subr.mxu0 0.0
        %5051 = vmatpush2.msra.mxu0 0.0
        %5052 = vmatprep.subr.mxu0 0.0
        %5053 = vmatpush2.msra.mxu0 0.0
        %5054 = vmatprep.subr.mxu0 0.0
        %5055 = vmatpush2.msra.mxu0 0.0
        %5056 = vmatprep.subr.mxu0 0.0
        %5057 = vmatpush2.msra.mxu0 0.0
        %5058 = vmatprep.mubr.f32.mxu0 0.0
        %v5059 = vand.u32 %v4565, 4294901760
        %5060 = vmatmul.mubr.f32.gmra.mxu0 %v5059
        %v5061 = vpop.f32.mrf.mxu0
        %v5062 = vadd.f32 %v4986, %v5061
        %v5063 = vpop.f32.mrf.mxu0
        %5064 = vdwg.mxu0
        %5066 = vset.pattern.permute.xlu0 0
        %5067 = vperm.xlu0 %5066, %v254
        %v5068 = vpop.permute.xlu0 %5067
        %v5070 = vlaneseq
        %v5071 = vshrl.u32 %v5070, 7
        %v5072 = vsub.s32 0, %v5071
        %v5073 = vrot.slane %v5068, %v5072
        %v5074 = vadd.f32 %v5062, %v5073
        %5075 = vst [vmem:[%s243] sm:$0x1] %v5074
        %s5076 = sand.u32 %s161, 1
        %s5077 = scalar_lea.sflag [#allocation4], %s5076
        %s5078 = sand.u32 %s161, 1
        %s5079 = scalar_lea.vmem [#allocation3], %s5078
        // Predicated region
        $region45: #{mlp_forward.1} parent=43 // pred_check
          %p5080 = pneg %p171
        $region46: #{mlp_forward.1} parent=43 // pred_check_branch
          %5082 = sbr.rel (%p5080) target = $region48
        $region47: #{mlp_forward.1} parent=43 // pred_region
          %s5084 = ssub.s32 16, 16
          %5085 = vsyncadd %s5077, %s5084
          %s5086 = smul.addr %s22, 16
          %s5087 = scalar_lea.hbm %s6, %s5086
          %s5089 = sshll.u32 %s5079, 4
          %s5090 = int_to_ptr.vmem [resolvable:$true] %s5089
          %5092 = dma.vmem_to_hbm [thread:$0]  %s5090, 16, %s5087, %s5077
        $region48: #{mlp_forward.1} parent=43 // pred_fallthru
          _
      $region44: #{mlp_forward.1} parent=5 // pred_fallthru
        _
      %p5093 = scmp.le.s32.totalorder 2, %s17
      // Predicated region
      $region49: #{mlp_forward.1} parent=5 // pred_check
        %p5094 = pneg %p5093
      $region50: #{mlp_forward.1} parent=5 // pred_check_branch
        %5096 = sbr.rel (%p5094) target = $region52
      $region51: #{mlp_forward.1} parent=5 // pred_region
        %s5097 = ssub.s32 %s17, 2
        // Predicated region
        $region53: #{mlp_forward.1} parent=51 // pred_check
          %p5098 = pneg %p177
        $region54: #{mlp_forward.1} parent=51 // pred_check_branch
          %5100 = sbr.rel (%p5098) target = $region56
        $region55: #{mlp_forward.1} parent=51 // pred_region
          %s5101 = sand.u32 %s162, 1
          %s5102 = scalar_lea.sflag [#allocation4], %s5101
          %s5103 = sand.u32 %s162, 1
          %s5104 = scalar_lea.vmem [#allocation3], %s5103
          %5105 = dma.done %s5102, 16
        $region56: #{mlp_forward.1} parent=51 // pred_fallthru
          _
      $region52: #{mlp_forward.1} parent=5 // pred_fallthru
        _
    $region6: #{mlp_forward.1} parent=1 // loop_footer
      %s21 = sadd.s32 1, %s17
    $region7: #{mlp_forward.1} parent=1 // loop_footer_branch
      %16 = sbr.rel target = $region3
    $region8: #{mlp_forward.1} parent=1 // loop_exit
      _
    %5106 = vsyncpa [#allocation4], 1
    %s5107 = scalar_lea.sflag [#allocation4], 1
    %5108 = vsyncpa %s5107, 1

</llo_original>
